<compile_context>
chip_gen: v6e
topology: v6e:2x2x1
jax: 0.10.0
libtpu: 0.0.40
codegen_flags: <defaults>
</compile_context>

<pallas_src>
import jax
import jax.numpy as jnp
from jax.experimental import pallas as pl
from jax.experimental.pallas import tpu as pltpu


# --------------------------------------------------------------------------
# Pallas kernels
# --------------------------------------------------------------------------
def _conv_relu_pool_kernel(p_ref, w_ref, b_ref, o_ref):
    """Fused Conv2d (as im2col matmul) + bias + ReLU + MaxPool2d(2,2).

    p_ref: (4, Q, K)  -- patch groups, one per 2x2 pooling offset (dy, dx),
                         rows ordered (n, ph, pw), cols ordered (kh, kw, c)
    w_ref: (K, OC)    -- conv weight, rows ordered (kh, kw, c)
    b_ref: (1, OC)
    o_ref: (Q, OC)    -- pooled output, rows ordered (n, ph, pw)
    """
    w = w_ref[...]
    b = b_ref[...]

    def branch(k):
        acc = jnp.dot(p_ref[k], w, preferred_element_type=jnp.float32)
        return jnp.maximum(acc + b, 0.0)          # ReLU before pool (== pool(relu))

    o_ref[...] = jnp.maximum(
        jnp.maximum(branch(0), branch(1)),
        jnp.maximum(branch(2), branch(3)),
    ).astype(o_ref.dtype)


def _fc_fused_kernel(x_ref, w1_ref, b1_ref, w2_ref, b2_ref, w3_ref, b3_ref, o_ref):
    """fc1 + ReLU + fc2 + ReLU + fc3, all intermediates kept in vregs."""
    h = jnp.dot(x_ref[...], w1_ref[...], preferred_element_type=jnp.float32) + b1_ref[...]
    h = jnp.maximum(h, 0.0)
    h = jnp.dot(h, w2_ref[...], preferred_element_type=jnp.float32) + b2_ref[...]
    h = jnp.maximum(h, 0.0)
    h = jnp.dot(h, w3_ref[...], preferred_element_type=jnp.float32) + b3_ref[...]
    o_ref[...] = h.astype(o_ref.dtype)


def _full_spec(shape):
    nd = len(shape)
    return pl.BlockSpec(shape, lambda i, _nd=nd: (0,) * _nd)


_COMPILER_PARAMS = pltpu.CompilerParams(dimension_semantics=("arbitrary",))


# --------------------------------------------------------------------------
# Conv + ReLU + MaxPool(2,2), fused
# --------------------------------------------------------------------------
def _im2col_pooled(x_nhwc, kh, kw):
    """Build (4, Q, K) patch groups: group g = (dy, dx) pooling offset,
    rows ordered (n, ph, pw), columns ordered (kh, kw, c)."""
    n, h, w, c = x_nhwc.shape
    oh, ow = h - kh + 1, w - kw + 1
    ph, pw = oh // 2, ow // 2
    groups = []
    for dy in range(2):
        for dx in range(2):
            cols = []
            for i in range(kh):
                for j in range(kw):
                    cols.append(
                        x_nhwc[:, dy + i: dy + i + 2 * ph: 2,
                                  dx + j: dx + j + 2 * pw: 2, :]   # (N, PH, PW, C)
                    )
            p = jnp.stack(cols, axis=3)                            # (N, PH, PW, KH*KW, C)
            groups.append(p.reshape(n * ph * pw, kh * kw * c))
    return jnp.stack(groups, axis=0), (n, ph, pw)                  # (4, Q, K)


def conv_relu_pool(x_nhwc, weight, bias):
    """MaxPool2d(2,2)(ReLU(Conv2d(valid, stride 1))) in one pallas_call.

    x_nhwc: (N, H, W, C); weight: PyTorch (OC, C, KH, KW); bias: (OC,).
    Returns NHWC pooled activation (N, PH, PW, OC).
    """
    oc, ic, kh, kw = weight.shape
    patches, (n, ph, pw) = _im2col_pooled(x_nhwc, kh, kw)          # (4, Q, K)
    q = n * ph * pw
    k_dim = ic * kh * kw
    w2d = jnp.transpose(weight, (2, 3, 1, 0)).reshape(k_dim, oc)   # rows (kh, kw, c)
    b2d = bias.reshape(1, oc)
    out = pl.pallas_call(
        _conv_relu_pool_kernel,
        out_shape=jax.ShapeDtypeStruct((q, oc), jnp.float32),
        grid=(1,),
        in_specs=[
            _full_spec((4, q, k_dim)),
            _full_spec((k_dim, oc)),
            _full_spec((1, oc)),
        ],
        out_specs=_full_spec((q, oc)),
        compiler_params=_COMPILER_PARAMS,
    )(patches, w2d, b2d)
    return out.reshape(n, ph, pw, oc)                              # NHWC


# --------------------------------------------------------------------------
# Fused FC head
# --------------------------------------------------------------------------
def fc_fused(x, w1, b1, w2, b2, w3, b3):
    """x: (M, 400); w*: (in, out) column-major-for-matmul; b*: (out,)."""
    m = x.shape[0]
    d0, h1 = w1.shape
    _, h2 = w2.shape
    _, h3 = w3.shape
    return pl.pallas_call(
        _fc_fused_kernel,
        out_shape=jax.ShapeDtypeStruct((m, h3), jnp.float32),
        grid=(1,),
        in_specs=[
            _full_spec((m, d0)),
            _full_spec((d0, h1)), _full_spec((1, h1)),
            _full_spec((h1, h2)), _full_spec((1, h2)),
            _full_spec((h2, h3)), _full_spec((1, h3)),
        ],
        out_specs=_full_spec((m, h3)),
        compiler_params=_COMPILER_PARAMS,
    )(x, w1, b1.reshape(1, h1), w2, b2.reshape(1, h2), w3, b3.reshape(1, h3))


# --------------------------------------------------------------------------
# Parameters (deterministic, PyTorch-style uniform init bounds)
# --------------------------------------------------------------------------
def init_params(key):
    def uniform(k, shape, fan_in):
        bound = 1.0 / float(fan_in) ** 0.5
        return jax.random.uniform(k, shape, jnp.float32, -bound, bound)

    ks = jax.random.split(key, 10)
    return {
        "conv1_w": uniform(ks[0], (6, 3, 5, 5), 3 * 5 * 5),
        "conv1_b": uniform(ks[1], (6,), 3 * 5 * 5),
        "conv2_w": uniform(ks[2], (16, 6, 5, 5), 6 * 5 * 5),
        "conv2_b": uniform(ks[3], (16,), 6 * 5 * 5),
        "fc1_w": uniform(ks[4], (120, 400), 400),
        "fc1_b": uniform(ks[5], (120,), 400),
        "fc2_w": uniform(ks[6], (84, 120), 120),
        "fc2_b": uniform(ks[7], (84,), 120),
        "fc3_w": uniform(ks[8], (10, 84), 84),
        "fc3_b": uniform(ks[9], (10,), 84),
    }


# --------------------------------------------------------------------------
# Forward pass (mirrors Net.forward)
# --------------------------------------------------------------------------
def net_forward(params, x):
    # NCHW -> NHWC once (tiny input); all activations stay channels-last after this.
    x = jnp.transpose(x, (0, 2, 3, 1))                              # (N, 32, 32, 3)
    x = conv_relu_pool(x, params["conv1_w"], params["conv1_b"])     # (N, 14, 14, 6)
    x = conv_relu_pool(x, params["conv2_w"], params["conv2_b"])     # (N, 5, 5, 16)

    n = x.shape[0]
    x = x.reshape(n, 5 * 5 * 16)                                    # flatten in (h, w, c) order

    # Fold PyTorch's NCHW .view(-1, 400) flatten order into fc1's weight
    # (columns (c, h, w) -> (h, w, c)) so no activation transpose is needed.
    w1 = (params["fc1_w"].reshape(120, 16, 5, 5)
          .transpose(0, 2, 3, 1).reshape(120, 400).T)               # (400, 120)
    w2 = params["fc2_w"].T                                          # (120, 84)
    w3 = params["fc3_w"].T                                          # (84, 10)

    return fc_fused(x, w1, params["fc1_b"], w2, params["fc2_b"], w3, params["fc3_b"])


if __name__ == "__main__":
    key = jax.random.PRNGKey(0)
    pkey, xkey = jax.random.split(key)
    params = init_params(pkey)
    # Net implies 32x32 RGB inputs (CIFAR-style): 16*5*5 after two conv+pool.
    x = jax.random.normal(xkey, (2, 3, 32, 32), dtype=jnp.float32)

    out = jax.jit(net_forward)(params, x)
    out = jax.block_until_ready(out)
    assert out.shape == (2, 10) and out.dtype == jnp.float32
    print("KERNEL_OK")
</pallas_src>

<mosaic_0001>
module attributes {stable_mosaic.version = 11 : i64} {
  func.func @_conv_relu_pool_kernel(%arg0: i32, %arg1: memref<4x392x75xf32, #tpu.memory_space<vmem>>, %arg2: memref<75x6xf32, #tpu.memory_space<vmem>>, %arg3: memref<1x6xf32, #tpu.memory_space<vmem>>, %arg4: memref<392x6xf32, #tpu.memory_space<vmem>>) attributes {dimension_semantics = [#tpu.dimension_semantics<arbitrary>], iteration_bounds = array<i64: 1>, scalar_prefetch = 0 : i64, scratch_operands = 0 : i64, tpu.core_type = #tpu.core_type<tc>, window_params = [{pipeline_mode = #tpu.pipeline_mode<synchronous>, transform_indices = @transform_0, window_bounds = array<i64: 4, 392, 75>}, {pipeline_mode = #tpu.pipeline_mode<synchronous>, transform_indices = @transform_1, window_bounds = array<i64: 75, 6>}, {pipeline_mode = #tpu.pipeline_mode<synchronous>, transform_indices = @transform_2, window_bounds = array<i64: 1, 6>}, {pipeline_mode = #tpu.pipeline_mode<synchronous>, transform_indices = @transform_3, window_bounds = array<i64: 392, 6>}]} {
    %c0 = arith.constant 0 : index
    %c0_0 = arith.constant 0 : index
    %0 = vector.load %arg2[%c0, %c0_0] : memref<75x6xf32, #tpu.memory_space<vmem>>, vector<75x6xf32>
    %c0_1 = arith.constant 0 : index
    %c0_2 = arith.constant 0 : index
    %1 = vector.load %arg3[%c0_1, %c0_2] : memref<1x6xf32, #tpu.memory_space<vmem>>, vector<1x6xf32>
    %c0_3 = arith.constant 0 : index
    %c0_4 = arith.constant 0 : index
    %c0_5 = arith.constant 0 : index
    %2 = vector.load %arg1[%c0_3, %c0_4, %c0_5] : memref<4x392x75xf32, #tpu.memory_space<vmem>>, vector<1x392x75xf32>
    %3 = vector.shape_cast %2 : vector<1x392x75xf32> to vector<392x75xf32>
    %cst = arith.constant dense<0.000000e+00> : vector<392x6xf32>
    %4 = tpu.matmul %3, %0, %cst {dimension_numbers = #tpu.dot_dimension_numbers<[1], [0], [0], [1], [0, 0, 1, 1], [], []>} : vector<392x75xf32>, vector<75x6xf32>, vector<392x6xf32> -> vector<392x6xf32>
    %5 = vector.broadcast %1 : vector<1x6xf32> to vector<392x6xf32>
    %6 = arith.addf %4, %5 : vector<392x6xf32>
    %cst_6 = arith.constant 0.000000e+00 : f32
    %7 = vector.broadcast %cst_6 : f32 to vector<392x6xf32>
    %8 = arith.maximumf %6, %7 : vector<392x6xf32>
    %c1 = arith.constant 1 : index
    %c0_7 = arith.constant 0 : index
    %c0_8 = arith.constant 0 : index
    %9 = vector.load %arg1[%c1, %c0_7, %c0_8] : memref<4x392x75xf32, #tpu.memory_space<vmem>>, vector<1x392x75xf32>
    %10 = vector.shape_cast %9 : vector<1x392x75xf32> to vector<392x75xf32>
    %cst_9 = arith.constant dense<0.000000e+00> : vector<392x6xf32>
    %11 = tpu.matmul %10, %0, %cst_9 {dimension_numbers = #tpu.dot_dimension_numbers<[1], [0], [0], [1], [0, 0, 1, 1], [], []>} : vector<392x75xf32>, vector<75x6xf32>, vector<392x6xf32> -> vector<392x6xf32>
    %12 = vector.broadcast %1 : vector<1x6xf32> to vector<392x6xf32>
    %13 = arith.addf %11, %12 : vector<392x6xf32>
    %cst_10 = arith.constant 0.000000e+00 : f32
    %14 = vector.broadcast %cst_10 : f32 to vector<392x6xf32>
    %15 = arith.maximumf %13, %14 : vector<392x6xf32>
    %16 = arith.maximumf %8, %15 : vector<392x6xf32>
    %c2 = arith.constant 2 : index
    %c0_11 = arith.constant 0 : index
    %c0_12 = arith.constant 0 : index
    %17 = vector.load %arg1[%c2, %c0_11, %c0_12] : memref<4x392x75xf32, #tpu.memory_space<vmem>>, vector<1x392x75xf32>
    %18 = vector.shape_cast %17 : vector<1x392x75xf32> to vector<392x75xf32>
    %cst_13 = arith.constant dense<0.000000e+00> : vector<392x6xf32>
    %19 = tpu.matmul %18, %0, %cst_13 {dimension_numbers = #tpu.dot_dimension_numbers<[1], [0], [0], [1], [0, 0, 1, 1], [], []>} : vector<392x75xf32>, vector<75x6xf32>, vector<392x6xf32> -> vector<392x6xf32>
    %20 = vector.broadcast %1 : vector<1x6xf32> to vector<392x6xf32>
    %21 = arith.addf %19, %20 : vector<392x6xf32>
    %cst_14 = arith.constant 0.000000e+00 : f32
    %22 = vector.broadcast %cst_14 : f32 to vector<392x6xf32>
    %23 = arith.maximumf %21, %22 : vector<392x6xf32>
    %c3 = arith.constant 3 : index
    %c0_15 = arith.constant 0 : index
    %c0_16 = arith.constant 0 : index
    %24 = vector.load %arg1[%c3, %c0_15, %c0_16] : memref<4x392x75xf32, #tpu.memory_space<vmem>>, vector<1x392x75xf32>
    %25 = vector.shape_cast %24 : vector<1x392x75xf32> to vector<392x75xf32>
    %cst_17 = arith.constant dense<0.000000e+00> : vector<392x6xf32>
    %26 = tpu.matmul %25, %0, %cst_17 {dimension_numbers = #tpu.dot_dimension_numbers<[1], [0], [0], [1], [0, 0, 1, 1], [], []>} : vector<392x75xf32>, vector<75x6xf32>, vector<392x6xf32> -> vector<392x6xf32>
    %27 = vector.broadcast %1 : vector<1x6xf32> to vector<392x6xf32>
    %28 = arith.addf %26, %27 : vector<392x6xf32>
    %cst_18 = arith.constant 0.000000e+00 : f32
    %29 = vector.broadcast %cst_18 : f32 to vector<392x6xf32>
    %30 = arith.maximumf %28, %29 : vector<392x6xf32>
    %31 = arith.maximumf %23, %30 : vector<392x6xf32>
    %32 = arith.maximumf %16, %31 : vector<392x6xf32>
    %c0_19 = arith.constant 0 : index
    %c0_20 = arith.constant 0 : index
    %33 = vector.load %arg4[%c0_19, %c0_20] : memref<392x6xf32, #tpu.memory_space<vmem>>, vector<392x6xf32>
    tpu.vector_store %arg4[%c0_19, %c0_20], %32 {strides = array<i32>} : memref<392x6xf32, #tpu.memory_space<vmem>>, vector<392x6xf32>,
    return
  }
  func.func @transform_0(%arg0: i32) -> (i32, i32, i32) {
    %c0_i32 = arith.constant 0 : i32
    %c0_i32_0 = arith.constant 0 : i32
    %c0_i32_1 = arith.constant 0 : i32
    %c0_i32_2 = arith.constant 0 : i32
    return %c0_i32, %c0_i32_0, %c0_i32_1 : i32, i32, i32
  }
  func.func @transform_1(%arg0: i32) -> (i32, i32) {
    %c0_i32 = arith.constant 0 : i32
    %c0_i32_0 = arith.constant 0 : i32
    %c0_i32_1 = arith.constant 0 : i32
    return %c0_i32, %c0_i32_0 : i32, i32
  }
  func.func @transform_2(%arg0: i32) -> (i32, i32) {
    %c0_i32 = arith.constant 0 : i32
    %c0_i32_0 = arith.constant 0 : i32
    %c0_i32_1 = arith.constant 0 : i32
    return %c0_i32, %c0_i32_0 : i32, i32
  }
  func.func @transform_3(%arg0: i32) -> (i32, i32) {
    %c0_i32 = arith.constant 0 : i32
    %c0_i32_0 = arith.constant 0 : i32
    %c0_i32_1 = arith.constant 0 : i32
    return %c0_i32, %c0_i32_0 : i32, i32
  }
}

module attributes {stable_mosaic.version = 11 : i64} {
  func.func @_conv_relu_pool_kernel(%arg0: i32, %arg1: memref<4x50x150xf32, #tpu.memory_space<vmem>>, %arg2: memref<150x16xf32, #tpu.memory_space<vmem>>, %arg3: memref<1x16xf32, #tpu.memory_space<vmem>>, %arg4: memref<50x16xf32, #tpu.memory_space<vmem>>) attributes {dimension_semantics = [#tpu.dimension_semantics<arbitrary>], iteration_bounds = array<i64: 1>, scalar_prefetch = 0 : i64, scratch_operands = 0 : i64, tpu.core_type = #tpu.core_type<tc>, window_params = [{pipeline_mode = #tpu.pipeline_mode<synchronous>, transform_indices = @transform_0, window_bounds = array<i64: 4, 50, 150>}, {pipeline_mode = #tpu.pipeline_mode<synchronous>, transform_indices = @transform_1, window_bounds = array<i64: 150, 16>}, {pipeline_mode = #tpu.pipeline_mode<synchronous>, transform_indices = @transform_2, window_bounds = array<i64: 1, 16>}, {pipeline_mode = #tpu.pipeline_mode<synchronous>, transform_indices = @transform_3, window_bounds = array<i64: 50, 16>}]} {
    %c0 = arith.constant 0 : index
    %c0_0 = arith.constant 0 : index
    %0 = vector.load %arg2[%c0, %c0_0] : memref<150x16xf32, #tpu.memory_space<vmem>>, vector<150x16xf32>
    %c0_1 = arith.constant 0 : index
    %c0_2 = arith.constant 0 : index
    %1 = vector.load %arg3[%c0_1, %c0_2] : memref<1x16xf32, #tpu.memory_space<vmem>>, vector<1x16xf32>
    %c0_3 = arith.constant 0 : index
    %c0_4 = arith.constant 0 : index
    %c0_5 = arith.constant 0 : index
    %2 = vector.load %arg1[%c0_3, %c0_4, %c0_5] : memref<4x50x150xf32, #tpu.memory_space<vmem>>, vector<1x50x150xf32>
    %3 = vector.shape_cast %2 : vector<1x50x150xf32> to vector<50x150xf32>
    %cst = arith.constant dense<0.000000e+00> : vector<50x16xf32>
    %4 = tpu.matmul %3, %0, %cst {dimension_numbers = #tpu.dot_dimension_numbers<[1], [0], [0], [1], [0, 0, 1, 1], [], []>} : vector<50x150xf32>, vector<150x16xf32>, vector<50x16xf32> -> vector<50x16xf32>
    %5 = vector.broadcast %1 : vector<1x16xf32> to vector<50x16xf32>
    %6 = arith.addf %4, %5 : vector<50x16xf32>
    %cst_6 = arith.constant 0.000000e+00 : f32
    %7 = vector.broadcast %cst_6 : f32 to vector<50x16xf32>
    %8 = arith.maximumf %6, %7 : vector<50x16xf32>
    %c1 = arith.constant 1 : index
    %c0_7 = arith.constant 0 : index
    %c0_8 = arith.constant 0 : index
    %9 = vector.load %arg1[%c1, %c0_7, %c0_8] : memref<4x50x150xf32, #tpu.memory_space<vmem>>, vector<1x50x150xf32>
    %10 = vector.shape_cast %9 : vector<1x50x150xf32> to vector<50x150xf32>
    %cst_9 = arith.constant dense<0.000000e+00> : vector<50x16xf32>
    %11 = tpu.matmul %10, %0, %cst_9 {dimension_numbers = #tpu.dot_dimension_numbers<[1], [0], [0], [1], [0, 0, 1, 1], [], []>} : vector<50x150xf32>, vector<150x16xf32>, vector<50x16xf32> -> vector<50x16xf32>
    %12 = vector.broadcast %1 : vector<1x16xf32> to vector<50x16xf32>
    %13 = arith.addf %11, %12 : vector<50x16xf32>
    %cst_10 = arith.constant 0.000000e+00 : f32
    %14 = vector.broadcast %cst_10 : f32 to vector<50x16xf32>
    %15 = arith.maximumf %13, %14 : vector<50x16xf32>
    %16 = arith.maximumf %8, %15 : vector<50x16xf32>
    %c2 = arith.constant 2 : index
    %c0_11 = arith.constant 0 : index
    %c0_12 = arith.constant 0 : index
    %17 = vector.load %arg1[%c2, %c0_11, %c0_12] : memref<4x50x150xf32, #tpu.memory_space<vmem>>, vector<1x50x150xf32>
    %18 = vector.shape_cast %17 : vector<1x50x150xf32> to vector<50x150xf32>
    %cst_13 = arith.constant dense<0.000000e+00> : vector<50x16xf32>
    %19 = tpu.matmul %18, %0, %cst_13 {dimension_numbers = #tpu.dot_dimension_numbers<[1], [0], [0], [1], [0, 0, 1, 1], [], []>} : vector<50x150xf32>, vector<150x16xf32>, vector<50x16xf32> -> vector<50x16xf32>
    %20 = vector.broadcast %1 : vector<1x16xf32> to vector<50x16xf32>
    %21 = arith.addf %19, %20 : vector<50x16xf32>
    %cst_14 = arith.constant 0.000000e+00 : f32
    %22 = vector.broadcast %cst_14 : f32 to vector<50x16xf32>
    %23 = arith.maximumf %21, %22 : vector<50x16xf32>
    %c3 = arith.constant 3 : index
    %c0_15 = arith.constant 0 : index
    %c0_16 = arith.constant 0 : index
    %24 = vector.load %arg1[%c3, %c0_15, %c0_16] : memref<4x50x150xf32, #tpu.memory_space<vmem>>, vector<1x50x150xf32>
    %25 = vector.shape_cast %24 : vector<1x50x150xf32> to vector<50x150xf32>
    %cst_17 = arith.constant dense<0.000000e+00> : vector<50x16xf32>
    %26 = tpu.matmul %25, %0, %cst_17 {dimension_numbers = #tpu.dot_dimension_numbers<[1], [0], [0], [1], [0, 0, 1, 1], [], []>} : vector<50x150xf32>, vector<150x16xf32>, vector<50x16xf32> -> vector<50x16xf32>
    %27 = vector.broadcast %1 : vector<1x16xf32> to vector<50x16xf32>
    %28 = arith.addf %26, %27 : vector<50x16xf32>
    %cst_18 = arith.constant 0.000000e+00 : f32
    %29 = vector.broadcast %cst_18 : f32 to vector<50x16xf32>
    %30 = arith.maximumf %28, %29 : vector<50x16xf32>
    %31 = arith.maximumf %23, %30 : vector<50x16xf32>
    %32 = arith.maximumf %16, %31 : vector<50x16xf32>
    %c0_19 = arith.constant 0 : index
    %c0_20 = arith.constant 0 : index
    %33 = vector.load %arg4[%c0_19, %c0_20] : memref<50x16xf32, #tpu.memory_space<vmem>>, vector<50x16xf32>
    tpu.vector_store %arg4[%c0_19, %c0_20], %32 {strides = array<i32>} : memref<50x16xf32, #tpu.memory_space<vmem>>, vector<50x16xf32>,
    return
  }
  func.func @transform_0(%arg0: i32) -> (i32, i32, i32) {
    %c0_i32 = arith.constant 0 : i32
    %c0_i32_0 = arith.constant 0 : i32
    %c0_i32_1 = arith.constant 0 : i32
    %c0_i32_2 = arith.constant 0 : i32
    return %c0_i32, %c0_i32_0, %c0_i32_1 : i32, i32, i32
  }
  func.func @transform_1(%arg0: i32) -> (i32, i32) {
    %c0_i32 = arith.constant 0 : i32
    %c0_i32_0 = arith.constant 0 : i32
    %c0_i32_1 = arith.constant 0 : i32
    return %c0_i32, %c0_i32_0 : i32, i32
  }
  func.func @transform_2(%arg0: i32) -> (i32, i32) {
    %c0_i32 = arith.constant 0 : i32
    %c0_i32_0 = arith.constant 0 : i32
    %c0_i32_1 = arith.constant 0 : i32
    return %c0_i32, %c0_i32_0 : i32, i32
  }
  func.func @transform_3(%arg0: i32) -> (i32, i32) {
    %c0_i32 = arith.constant 0 : i32
    %c0_i32_0 = arith.constant 0 : i32
    %c0_i32_1 = arith.constant 0 : i32
    return %c0_i32, %c0_i32_0 : i32, i32
  }
}

module attributes {stable_mosaic.version = 11 : i64} {
  func.func @_fc_fused_kernel(%arg0: i32, %arg1: memref<2x400xf32, #tpu.memory_space<vmem>>, %arg2: memref<400x120xf32, #tpu.memory_space<vmem>>, %arg3: memref<1x120xf32, #tpu.memory_space<vmem>>, %arg4: memref<120x84xf32, #tpu.memory_space<vmem>>, %arg5: memref<1x84xf32, #tpu.memory_space<vmem>>, %arg6: memref<84x10xf32, #tpu.memory_space<vmem>>, %arg7: memref<1x10xf32, #tpu.memory_space<vmem>>, %arg8: memref<2x10xf32, #tpu.memory_space<vmem>>) attributes {dimension_semantics = [#tpu.dimension_semantics<arbitrary>], iteration_bounds = array<i64: 1>, scalar_prefetch = 0 : i64, scratch_operands = 0 : i64, tpu.core_type = #tpu.core_type<tc>, window_params = [{pipeline_mode = #tpu.pipeline_mode<synchronous>, transform_indices = @transform_0, window_bounds = array<i64: 2, 400>}, {pipeline_mode = #tpu.pipeline_mode<synchronous>, transform_indices = @transform_1, window_bounds = array<i64: 400, 120>}, {pipeline_mode = #tpu.pipeline_mode<synchronous>, transform_indices = @transform_2, window_bounds = array<i64: 1, 120>}, {pipeline_mode = #tpu.pipeline_mode<synchronous>, transform_indices = @transform_3, window_bounds = array<i64: 120, 84>}, {pipeline_mode = #tpu.pipeline_mode<synchronous>, transform_indices = @transform_4, window_bounds = array<i64: 1, 84>}, {pipeline_mode = #tpu.pipeline_mode<synchronous>, transform_indices = @transform_5, window_bounds = array<i64: 84, 10>}, {pipeline_mode = #tpu.pipeline_mode<synchronous>, transform_indices = @transform_6, window_bounds = array<i64: 1, 10>}, {pipeline_mode = #tpu.pipeline_mode<synchronous>, transform_indices = @transform_7, window_bounds = array<i64: 2, 10>}]} {
    %c0 = arith.constant 0 : index
    %c0_0 = arith.constant 0 : index
    %0 = vector.load %arg1[%c0, %c0_0] : memref<2x400xf32, #tpu.memory_space<vmem>>, vector<2x400xf32>
    %c0_1 = arith.constant 0 : index
    %c0_2 = arith.constant 0 : index
    %1 = vector.load %arg2[%c0_1, %c0_2] : memref<400x120xf32, #tpu.memory_space<vmem>>, vector<400x120xf32>
    %cst = arith.constant dense<0.000000e+00> : vector<2x120xf32>
    %2 = tpu.matmul %0, %1, %cst {dimension_numbers = #tpu.dot_dimension_numbers<[1], [0], [0], [1], [0, 0, 1, 1], [], []>} : vector<2x400xf32>, vector<400x120xf32>, vector<2x120xf32> -> vector<2x120xf32>
    %c0_3 = arith.constant 0 : index
    %c0_4 = arith.constant 0 : index
    %3 = vector.load %arg3[%c0_3, %c0_4] : memref<1x120xf32, #tpu.memory_space<vmem>>, vector<1x120xf32>
    %4 = vector.broadcast %3 : vector<1x120xf32> to vector<2x120xf32>
    %5 = arith.addf %2, %4 : vector<2x120xf32>
    %cst_5 = arith.constant 0.000000e+00 : f32
    %6 = vector.broadcast %cst_5 : f32 to vector<2x120xf32>
    %7 = arith.maximumf %5, %6 : vector<2x120xf32>
    %c0_6 = arith.constant 0 : index
    %c0_7 = arith.constant 0 : index
    %8 = vector.load %arg4[%c0_6, %c0_7] : memref<120x84xf32, #tpu.memory_space<vmem>>, vector<120x84xf32>
    %cst_8 = arith.constant dense<0.000000e+00> : vector<2x84xf32>
    %9 = tpu.matmul %7, %8, %cst_8 {dimension_numbers = #tpu.dot_dimension_numbers<[1], [0], [0], [1], [0, 0, 1, 1], [], []>} : vector<2x120xf32>, vector<120x84xf32>, vector<2x84xf32> -> vector<2x84xf32>
    %c0_9 = arith.constant 0 : index
    %c0_10 = arith.constant 0 : index
    %10 = vector.load %arg5[%c0_9, %c0_10] : memref<1x84xf32, #tpu.memory_space<vmem>>, vector<1x84xf32>
    %11 = vector.broadcast %10 : vector<1x84xf32> to vector<2x84xf32>
    %12 = arith.addf %9, %11 : vector<2x84xf32>
    %cst_11 = arith.constant 0.000000e+00 : f32
    %13 = vector.broadcast %cst_11 : f32 to vector<2x84xf32>
    %14 = arith.maximumf %12, %13 : vector<2x84xf32>
    %c0_12 = arith.constant 0 : index
    %c0_13 = arith.constant 0 : index
    %15 = vector.load %arg6[%c0_12, %c0_13] : memref<84x10xf32, #tpu.memory_space<vmem>>, vector<84x10xf32>
    %cst_14 = arith.constant dense<0.000000e+00> : vector<2x10xf32>
    %16 = tpu.matmul %14, %15, %cst_14 {dimension_numbers = #tpu.dot_dimension_numbers<[1], [0], [0], [1], [0, 0, 1, 1], [], []>} : vector<2x84xf32>, vector<84x10xf32>, vector<2x10xf32> -> vector<2x10xf32>
    %c0_15 = arith.constant 0 : index
    %c0_16 = arith.constant 0 : index
    %17 = vector.load %arg7[%c0_15, %c0_16] : memref<1x10xf32, #tpu.memory_space<vmem>>, vector<1x10xf32>
    %18 = vector.broadcast %17 : vector<1x10xf32> to vector<2x10xf32>
    %19 = arith.addf %16, %18 : vector<2x10xf32>
    %c0_17 = arith.constant 0 : index
    %c0_18 = arith.constant 0 : index
    %20 = vector.load %arg8[%c0_17, %c0_18] : memref<2x10xf32, #tpu.memory_space<vmem>>, vector<2x10xf32>
    tpu.vector_store %arg8[%c0_17, %c0_18], %19 {strides = array<i32>} : memref<2x10xf32, #tpu.memory_space<vmem>>, vector<2x10xf32>,
    return
  }
  func.func @transform_0(%arg0: i32) -> (i32, i32) {
    %c0_i32 = arith.constant 0 : i32
    %c0_i32_0 = arith.constant 0 : i32
    %c0_i32_1 = arith.constant 0 : i32
    return %c0_i32, %c0_i32_0 : i32, i32
  }
  func.func @transform_1(%arg0: i32) -> (i32, i32) {
    %c0_i32 = arith.constant 0 : i32
    %c0_i32_0 = arith.constant 0 : i32
    %c0_i32_1 = arith.constant 0 : i32
    return %c0_i32, %c0_i32_0 : i32, i32
  }
  func.func @transform_2(%arg0: i32) -> (i32, i32) {
    %c0_i32 = arith.constant 0 : i32
    %c0_i32_0 = arith.constant 0 : i32
    %c0_i32_1 = arith.constant 0 : i32
    return %c0_i32, %c0_i32_0 : i32, i32
  }
  func.func @transform_3(%arg0: i32) -> (i32, i32) {
    %c0_i32 = arith.constant 0 : i32
    %c0_i32_0 = arith.constant 0 : i32
    %c0_i32_1 = arith.constant 0 : i32
    return %c0_i32, %c0_i32_0 : i32, i32
  }
  func.func @transform_4(%arg0: i32) -> (i32, i32) {
    %c0_i32 = arith.constant 0 : i32
    %c0_i32_0 = arith.constant 0 : i32
    %c0_i32_1 = arith.constant 0 : i32
    return %c0_i32, %c0_i32_0 : i32, i32
  }
  func.func @transform_5(%arg0: i32) -> (i32, i32) {
    %c0_i32 = arith.constant 0 : i32
    %c0_i32_0 = arith.constant 0 : i32
    %c0_i32_1 = arith.constant 0 : i32
    return %c0_i32, %c0_i32_0 : i32, i32
  }
  func.func @transform_6(%arg0: i32) -> (i32, i32) {
    %c0_i32 = arith.constant 0 : i32
    %c0_i32_0 = arith.constant 0 : i32
    %c0_i32_1 = arith.constant 0 : i32
    return %c0_i32, %c0_i32_0 : i32, i32
  }
  func.func @transform_7(%arg0: i32) -> (i32, i32) {
    %c0_i32 = arith.constant 0 : i32
    %c0_i32_0 = arith.constant 0 : i32
    %c0_i32_1 = arith.constant 0 : i32
    return %c0_i32, %c0_i32_0 : i32, i32
  }
}

</mosaic_0001>

<llo_original>
// kernel: net_forward.3
$region0: #{net_forward.3}
  #allocation0 [shape = 'u32[]', space=smem, size = 0x4, offset = 0x4, fixed_abs, tag = 'smem constant byte address 0x4 - core index']
  #allocation1 [shape = 'u32[144,128]{1,0:T(1,128)}', space=vmem, size = 0x12000, scoped, tag = 'internal scratch']
  %s0 = inlined_call_operand.vmem [shape: f32[4,392,75], index: 0, kind: input, shape index: {}]
  %s1 = inlined_call_operand.vmem [shape: f32[75,6], index: 1, kind: input, shape index: {}]
  %s2 = inlined_call_operand.vmem [shape: f32[1,6], index: 2, kind: input, shape index: {}]
  %s3 = inlined_call_operand.vmem [shape: f32[392,6], index: 3, kind: output, shape index: {}]
  %s4 = sld [smem:[#allocation0]]
  $region22: #{net_forward.3} parent=0
    _
  %s6 = ssub.s32 1, %s4
  %s7 = scalar_select 0, %s6, %s4
  // Predicated region
  $region2: #{net_forward.3} parent=0 // pred_check
    _
  $region3: #{net_forward.3} parent=0 // pred_check_branch
    %9 = sbr.rel (0) target = $region5
  $region4: #{net_forward.3} parent=0 // pred_region
    _
  $region5: #{net_forward.3} parent=0 // pred_fallthru
    _
  // Predicated region
  $region6: #{net_forward.3} parent=0 // pred_check
    _
  $region7: #{net_forward.3} parent=0 // pred_check_branch
    %11 = sbr.rel (0) target = $region9
  $region8: #{net_forward.3} parent=0 // pred_region
    _
  $region9: #{net_forward.3} parent=0 // pred_fallthru
    _
  // Predicated region
  $region10: #{net_forward.3} parent=0 // pred_check
    _
  $region11: #{net_forward.3} parent=0 // pred_check_branch
    %13 = sbr.rel (0) target = $region13
  $region12: #{net_forward.3} parent=0 // pred_region
    _
  $region13: #{net_forward.3} parent=0 // pred_fallthru
    _
  %v14 = vld [vmem:[%s1] sm:$0xff]
  %v15 = vld [vmem:[%s1 + $0x8] sm:$0xff]
  %v16 = vld [vmem:[%s1 + $0x10] sm:$0xff]
  %v17 = vld [vmem:[%s1 + $0x18] sm:$0xff]
  %v18 = vld [vmem:[%s1 + $0x20] sm:$0xff]
  %v19 = vld [vmem:[%s1 + $0x28] sm:$0xff]
  %v20 = vld [vmem:[%s1 + $0x30] sm:$0xff]
  %v21 = vld [vmem:[%s1 + $0x38] sm:$0xff]
  %v22 = vld [vmem:[%s1 + $0x40] sm:$0xff]
  %v23 = vld [vmem:[%s1 + $0x48] sm:$0x7]
  %v24 = vld [vmem:[%s2] sm:$0x1]
  %v25 = vld [vmem:[%s0] sm:$0xff]
  %v26 = vld [vmem:[%s0 + $0x8] sm:$0xff]
  %v27 = vld [vmem:[%s0 + $0x10] sm:$0xff]
  %v28 = vld [vmem:[%s0 + $0x18] sm:$0xff]
  %v29 = vld [vmem:[%s0 + $0x20] sm:$0xff]
  %v30 = vld [vmem:[%s0 + $0x28] sm:$0xff]
  %v31 = vld [vmem:[%s0 + $0x30] sm:$0xff]
  %v32 = vld [vmem:[%s0 + $0x38] sm:$0xff]
  %v33 = vld [vmem:[%s0 + $0x40] sm:$0xff]
  %v34 = vld [vmem:[%s0 + $0x48] sm:$0xff]
  %v35 = vld [vmem:[%s0 + $0x50] sm:$0xff]
  %v36 = vld [vmem:[%s0 + $0x58] sm:$0xff]
  %v37 = vld [vmem:[%s0 + $0x60] sm:$0xff]
  %v38 = vld [vmem:[%s0 + $0x68] sm:$0xff]
  %v39 = vld [vmem:[%s0 + $0x70] sm:$0xff]
  %v40 = vld [vmem:[%s0 + $0x78] sm:$0xff]
  %v41 = vld [vmem:[%s0 + $0x80] sm:$0xff]
  %v42 = vld [vmem:[%s0 + $0x88] sm:$0xff]
  %v43 = vld [vmem:[%s0 + $0x90] sm:$0xff]
  %v44 = vld [vmem:[%s0 + $0x98] sm:$0xff]
  %v45 = vld [vmem:[%s0 + $0xa0] sm:$0xff]
  %v46 = vld [vmem:[%s0 + $0xa8] sm:$0xff]
  %v47 = vld [vmem:[%s0 + $0xb0] sm:$0xff]
  %v48 = vld [vmem:[%s0 + $0xb8] sm:$0xff]
  %v49 = vld [vmem:[%s0 + $0xc0] sm:$0xff]
  %v50 = vld [vmem:[%s0 + $0xc8] sm:$0xff]
  %v51 = vld [vmem:[%s0 + $0xd0] sm:$0xff]
  %v52 = vld [vmem:[%s0 + $0xd8] sm:$0xff]
  %v53 = vld [vmem:[%s0 + $0xe0] sm:$0xff]
  %v54 = vld [vmem:[%s0 + $0xe8] sm:$0xff]
  %v55 = vld [vmem:[%s0 + $0xf0] sm:$0xff]
  %v56 = vld [vmem:[%s0 + $0xf8] sm:$0xff]
  %v57 = vld [vmem:[%s0 + $0x100] sm:$0xff]
  %v58 = vld [vmem:[%s0 + $0x108] sm:$0xff]
  %v59 = vld [vmem:[%s0 + $0x110] sm:$0xff]
  %v60 = vld [vmem:[%s0 + $0x118] sm:$0xff]
  %v61 = vld [vmem:[%s0 + $0x120] sm:$0xff]
  %v62 = vld [vmem:[%s0 + $0x128] sm:$0xff]
  %v63 = vld [vmem:[%s0 + $0x130] sm:$0xff]
  %v64 = vld [vmem:[%s0 + $0x138] sm:$0xff]
  %v65 = vld [vmem:[%s0 + $0x140] sm:$0xff]
  %v66 = vld [vmem:[%s0 + $0x148] sm:$0xff]
  %v67 = vld [vmem:[%s0 + $0x150] sm:$0xff]
  %v68 = vld [vmem:[%s0 + $0x158] sm:$0xff]
  %v69 = vld [vmem:[%s0 + $0x160] sm:$0xff]
  %v70 = vld [vmem:[%s0 + $0x168] sm:$0xff]
  %v71 = vld [vmem:[%s0 + $0x170] sm:$0xff]
  %v72 = vld [vmem:[%s0 + $0x178] sm:$0xff]
  %v73 = vld [vmem:[%s0 + $0x180] sm:$0xff]
  %v75 = vlaneseq
  %v76 = vshrl.u32 %v75, 7
  %v77 = vsub.s32 0, %v76
  %v78 = vrot.slane %v24, %v77
  %vm80 = vcmask 613376
  %v82 = vsel %vm80, %v25, 0
  %v85 = vsel %vm80, %v26, 0
  %v88 = vsel %vm80, %v27, 0
  %v91 = vsel %vm80, %v28, 0
  %v94 = vsel %vm80, %v29, 0
  %v97 = vsel %vm80, %v30, 0
  %v100 = vsel %vm80, %v31, 0
  %v103 = vsel %vm80, %v32, 0
  %v106 = vsel %vm80, %v33, 0
  %v109 = vsel %vm80, %v34, 0
  %v112 = vsel %vm80, %v35, 0
  %v115 = vsel %vm80, %v36, 0
  %v118 = vsel %vm80, %v37, 0
  %v121 = vsel %vm80, %v38, 0
  %v124 = vsel %vm80, %v39, 0
  %v127 = vsel %vm80, %v40, 0
  %v130 = vsel %vm80, %v41, 0
  %v133 = vsel %vm80, %v42, 0
  %v136 = vsel %vm80, %v43, 0
  %v139 = vsel %vm80, %v44, 0
  %v142 = vsel %vm80, %v45, 0
  %v145 = vsel %vm80, %v46, 0
  %v148 = vsel %vm80, %v47, 0
  %v151 = vsel %vm80, %v48, 0
  %v154 = vsel %vm80, %v49, 0
  %v157 = vsel %vm80, %v50, 0
  %v160 = vsel %vm80, %v51, 0
  %v163 = vsel %vm80, %v52, 0
  %v166 = vsel %vm80, %v53, 0
  %v169 = vsel %vm80, %v54, 0
  %v172 = vsel %vm80, %v55, 0
  %v175 = vsel %vm80, %v56, 0
  %v178 = vsel %vm80, %v57, 0
  %v181 = vsel %vm80, %v58, 0
  %v184 = vsel %vm80, %v59, 0
  %v187 = vsel %vm80, %v60, 0
  %v190 = vsel %vm80, %v61, 0
  %v193 = vsel %vm80, %v62, 0
  %v196 = vsel %vm80, %v63, 0
  %v199 = vsel %vm80, %v64, 0
  %v202 = vsel %vm80, %v65, 0
  %v205 = vsel %vm80, %v66, 0
  %v208 = vsel %vm80, %v67, 0
  %v211 = vsel %vm80, %v68, 0
  %v214 = vsel %vm80, %v69, 0
  %v217 = vsel %vm80, %v70, 0
  %v220 = vsel %vm80, %v71, 0
  %v223 = vsel %vm80, %v72, 0
  %v226 = vsel %vm80, %v73, 0
  %vm228 = vcmask 1042432
  %v230 = vsel %vm228, %v23, 0
  %232 = vmatprep.subr.mxu0 0.0
  %233 = vmatpush1.msra.mxu0 0.0
  %234 = vmatprep.subr.mxu0 0.0
  %235 = vmatpush1.msra.mxu0 0.0
  %236 = vmatprep.subr.mxu0 0.0
  %237 = vmatpush1.msra.mxu0 0.0
  %238 = vmatprep.subr.mxu0 0.0
  %239 = vmatpush1.msra.mxu0 0.0
  %240 = vmatprep.subr.mxu0 0.0
  %241 = vmatpush1.msra.mxu0 0.0
  %242 = vmatprep.subr.mxu0 0.0
  %243 = vmatpush1.msra.mxu0 0.0
  %244 = vmatprep.subr.mxu0 0.0
  %245 = vmatpush1.msra.mxu0 %v230
  %246 = vmatprep.subr.mxu0 0.0
  %247 = vmatpush1.msra.mxu0 %v22
  %248 = vmatprep.subr.mxu0 0.0
  %249 = vmatpush1.msra.mxu0 %v21
  %250 = vmatprep.subr.mxu0 0.0
  %251 = vmatpush1.msra.mxu0 %v20
  %252 = vmatprep.subr.mxu0 0.0
  %253 = vmatpush1.msra.mxu0 %v19
  %254 = vmatprep.subr.mxu0 0.0
  %255 = vmatpush1.msra.mxu0 %v18
  %256 = vmatprep.subr.mxu0 0.0
  %257 = vmatpush1.msra.mxu0 %v17
  %258 = vmatprep.subr.mxu0 0.0
  %259 = vmatpush1.msra.mxu0 %v16
  %260 = vmatprep.subr.mxu0 0.0
  %261 = vmatpush1.msra.mxu0 %v15
  %262 = vmatprep.subr.mxu0 0.0
  %263 = vmatpush1.msra.mxu0 %v14
  %264 = vmatprep.subr.mxu0 0.0
  %265 = vmatpush2.msra.mxu0 0.0
  %266 = vmatprep.subr.mxu0 0.0
  %267 = vmatpush2.msra.mxu0 0.0
  %268 = vmatprep.subr.mxu0 0.0
  %269 = vmatpush2.msra.mxu0 0.0
  %270 = vmatprep.subr.mxu0 0.0
  %271 = vmatpush2.msra.mxu0 0.0
  %272 = vmatprep.subr.mxu0 0.0
  %273 = vmatpush2.msra.mxu0 0.0
  %274 = vmatprep.subr.mxu0 0.0
  %275 = vmatpush2.msra.mxu0 0.0
  %276 = vmatprep.subr.mxu0 0.0
  %277 = vmatpush2.msra.mxu0 0.0
  %278 = vmatprep.subr.mxu0 0.0
  %279 = vmatpush2.msra.mxu0 0.0
  %280 = vmatprep.subr.mxu0 0.0
  %281 = vmatpush2.msra.mxu0 0.0
  %282 = vmatprep.subr.mxu0 0.0
  %283 = vmatpush2.msra.mxu0 0.0
  %284 = vmatprep.subr.mxu0 0.0
  %285 = vmatpush2.msra.mxu0 0.0
  %286 = vmatprep.subr.mxu0 0.0
  %287 = vmatpush2.msra.mxu0 0.0
  %288 = vmatprep.subr.mxu0 0.0
  %289 = vmatpush2.msra.mxu0 0.0
  %290 = vmatprep.subr.mxu0 0.0
  %291 = vmatpush2.msra.mxu0 0.0
  %292 = vmatprep.subr.mxu0 0.0
  %293 = vmatpush2.msra.mxu0 0.0
  %294 = vmatprep.subr.mxu0 0.0
  %295 = vmatpush2.msra.mxu0 0.0
  %296 = vmatprep.mubr.f32.mxu0 0.0
  %297 = vmatmul.mubr.f32.gmra.mxu0 %v82
  %v298 = vpop.f32.mrf.mxu0
  %v299 = vadd.f32 %v78, %v298
  %v300 = vpop.f32.mrf.mxu0
  %301 = vmatprep.mubr.f32.mxu0 0.0
  %302 = vmatmul.mubr.f32.gmra.mxu0 %v85
  %v303 = vpop.f32.mrf.mxu0
  %v304 = vadd.f32 %v78, %v303
  %v305 = vpop.f32.mrf.mxu0
  %306 = vmatprep.mubr.f32.mxu0 0.0
  %307 = vmatmul.mubr.f32.gmra.mxu0 %v88
  %v308 = vpop.f32.mrf.mxu0
  %v309 = vadd.f32 %v78, %v308
  %v310 = vpop.f32.mrf.mxu0
  %311 = vmatprep.mubr.f32.mxu0 0.0
  %312 = vmatmul.mubr.f32.gmra.mxu0 %v91
  %v313 = vpop.f32.mrf.mxu0
  %v314 = vadd.f32 %v78, %v313
  %v315 = vpop.f32.mrf.mxu0
  %316 = vmatprep.mubr.f32.mxu0 0.0
  %317 = vmatmul.mubr.f32.gmra.mxu0 %v94
  %v318 = vpop.f32.mrf.mxu0
  %v319 = vadd.f32 %v78, %v318
  %v320 = vpop.f32.mrf.mxu0
  %321 = vmatprep.mubr.f32.mxu0 0.0
  %322 = vmatmul.mubr.f32.gmra.mxu0 %v97
  %v323 = vpop.f32.mrf.mxu0
  %v324 = vadd.f32 %v78, %v323
  %v325 = vpop.f32.mrf.mxu0
  %326 = vmatprep.mubr.f32.mxu0 0.0
  %327 = vmatmul.mubr.f32.gmra.mxu0 %v100
  %v328 = vpop.f32.mrf.mxu0
  %v329 = vadd.f32 %v78, %v328
  %v330 = vpop.f32.mrf.mxu0
  %331 = vmatprep.mubr.f32.mxu0 0.0
  %332 = vmatmul.mubr.f32.gmra.mxu0 %v103
  %v333 = vpop.f32.mrf.mxu0
  %v334 = vadd.f32 %v78, %v333
  %v335 = vpop.f32.mrf.mxu0
  %336 = vmatprep.mubr.f32.mxu0 0.0
  %337 = vmatmul.mubr.f32.gmra.mxu0 %v106
  %v338 = vpop.f32.mrf.mxu0
  %v339 = vadd.f32 %v78, %v338
  %v340 = vpop.f32.mrf.mxu0
  %341 = vmatprep.mubr.f32.mxu0 0.0
  %342 = vmatmul.mubr.f32.gmra.mxu0 %v109
  %v343 = vpop.f32.mrf.mxu0
  %v344 = vadd.f32 %v78, %v343
  %v345 = vpop.f32.mrf.mxu0
  %346 = vmatprep.mubr.f32.mxu0 0.0
  %347 = vmatmul.mubr.f32.gmra.mxu0 %v112
  %v348 = vpop.f32.mrf.mxu0
  %v349 = vadd.f32 %v78, %v348
  %v350 = vpop.f32.mrf.mxu0
  %351 = vmatprep.mubr.f32.mxu0 0.0
  %352 = vmatmul.mubr.f32.gmra.mxu0 %v115
  %v353 = vpop.f32.mrf.mxu0
  %v354 = vadd.f32 %v78, %v353
  %v355 = vpop.f32.mrf.mxu0
  %356 = vmatprep.mubr.f32.mxu0 0.0
  %357 = vmatmul.mubr.f32.gmra.mxu0 %v118
  %v358 = vpop.f32.mrf.mxu0
  %v359 = vadd.f32 %v78, %v358
  %v360 = vpop.f32.mrf.mxu0
  %361 = vmatprep.mubr.f32.mxu0 0.0
  %362 = vmatmul.mubr.f32.gmra.mxu0 %v121
  %v363 = vpop.f32.mrf.mxu0
  %v364 = vadd.f32 %v78, %v363
  %v365 = vpop.f32.mrf.mxu0
  %366 = vmatprep.mubr.f32.mxu0 0.0
  %367 = vmatmul.mubr.f32.gmra.mxu0 %v124
  %v368 = vpop.f32.mrf.mxu0
  %v369 = vadd.f32 %v78, %v368
  %v370 = vpop.f32.mrf.mxu0
  %371 = vmatprep.mubr.f32.mxu0 0.0
  %372 = vmatmul.mubr.f32.gmra.mxu0 %v127
  %v373 = vpop.f32.mrf.mxu0
  %v374 = vadd.f32 %v78, %v373
  %v375 = vpop.f32.mrf.mxu0
  %376 = vmatprep.mubr.f32.mxu0 0.0
  %377 = vmatmul.mubr.f32.gmra.mxu0 %v130
  %v378 = vpop.f32.mrf.mxu0
  %v379 = vadd.f32 %v78, %v378
  %v380 = vpop.f32.mrf.mxu0
  %381 = vmatprep.mubr.f32.mxu0 0.0
  %382 = vmatmul.mubr.f32.gmra.mxu0 %v133
  %v383 = vpop.f32.mrf.mxu0
  %v384 = vadd.f32 %v78, %v383
  %v385 = vpop.f32.mrf.mxu0
  %386 = vmatprep.mubr.f32.mxu0 0.0
  %387 = vmatmul.mubr.f32.gmra.mxu0 %v136
  %v388 = vpop.f32.mrf.mxu0
  %v389 = vadd.f32 %v78, %v388
  %v390 = vpop.f32.mrf.mxu0
  %391 = vmatprep.mubr.f32.mxu0 0.0
  %392 = vmatmul.mubr.f32.gmra.mxu0 %v139
  %v393 = vpop.f32.mrf.mxu0
  %v394 = vadd.f32 %v78, %v393
  %v395 = vpop.f32.mrf.mxu0
  %396 = vmatprep.mubr.f32.mxu0 0.0
  %397 = vmatmul.mubr.f32.gmra.mxu0 %v142
  %v398 = vpop.f32.mrf.mxu0
  %v399 = vadd.f32 %v78, %v398
  %v400 = vpop.f32.mrf.mxu0
  %401 = vmatprep.mubr.f32.mxu0 0.0
  %402 = vmatmul.mubr.f32.gmra.mxu0 %v145
  %v403 = vpop.f32.mrf.mxu0
  %v404 = vadd.f32 %v78, %v403
  %v405 = vpop.f32.mrf.mxu0
  %406 = vmatprep.mubr.f32.mxu0 0.0
  %407 = vmatmul.mubr.f32.gmra.mxu0 %v148
  %v408 = vpop.f32.mrf.mxu0
  %v409 = vadd.f32 %v78, %v408
  %v410 = vpop.f32.mrf.mxu0
  %411 = vmatprep.mubr.f32.mxu0 0.0
  %412 = vmatmul.mubr.f32.gmra.mxu0 %v151
  %v413 = vpop.f32.mrf.mxu0
  %v414 = vadd.f32 %v78, %v413
  %v415 = vpop.f32.mrf.mxu0
  %416 = vmatprep.mubr.f32.mxu0 0.0
  %417 = vmatmul.mubr.f32.gmra.mxu0 %v154
  %v418 = vpop.f32.mrf.mxu0
  %v419 = vadd.f32 %v78, %v418
  %v420 = vpop.f32.mrf.mxu0
  %421 = vmatprep.mubr.f32.mxu0 0.0
  %422 = vmatmul.mubr.f32.gmra.mxu0 %v157
  %v423 = vpop.f32.mrf.mxu0
  %v424 = vadd.f32 %v78, %v423
  %v425 = vpop.f32.mrf.mxu0
  %426 = vmatprep.mubr.f32.mxu0 0.0
  %427 = vmatmul.mubr.f32.gmra.mxu0 %v160
  %v428 = vpop.f32.mrf.mxu0
  %v429 = vadd.f32 %v78, %v428
  %v430 = vpop.f32.mrf.mxu0
  %431 = vmatprep.mubr.f32.mxu0 0.0
  %432 = vmatmul.mubr.f32.gmra.mxu0 %v163
  %v433 = vpop.f32.mrf.mxu0
  %v434 = vadd.f32 %v78, %v433
  %v435 = vpop.f32.mrf.mxu0
  %436 = vmatprep.mubr.f32.mxu0 0.0
  %437 = vmatmul.mubr.f32.gmra.mxu0 %v166
  %v438 = vpop.f32.mrf.mxu0
  %v439 = vadd.f32 %v78, %v438
  %v440 = vpop.f32.mrf.mxu0
  %441 = vmatprep.mubr.f32.mxu0 0.0
  %442 = vmatmul.mubr.f32.gmra.mxu0 %v169
  %v443 = vpop.f32.mrf.mxu0
  %v444 = vadd.f32 %v78, %v443
  %v445 = vpop.f32.mrf.mxu0
  %446 = vmatprep.mubr.f32.mxu0 0.0
  %447 = vmatmul.mubr.f32.gmra.mxu0 %v172
  %v448 = vpop.f32.mrf.mxu0
  %v449 = vadd.f32 %v78, %v448
  %v450 = vpop.f32.mrf.mxu0
  %451 = vmatprep.mubr.f32.mxu0 0.0
  %452 = vmatmul.mubr.f32.gmra.mxu0 %v175
  %v453 = vpop.f32.mrf.mxu0
  %v454 = vadd.f32 %v78, %v453
  %v455 = vpop.f32.mrf.mxu0
  %456 = vmatprep.mubr.f32.mxu0 0.0
  %457 = vmatmul.mubr.f32.gmra.mxu0 %v178
  %v458 = vpop.f32.mrf.mxu0
  %v459 = vadd.f32 %v78, %v458
  %v460 = vpop.f32.mrf.mxu0
  %461 = vmatprep.mubr.f32.mxu0 0.0
  %462 = vmatmul.mubr.f32.gmra.mxu0 %v181
  %v463 = vpop.f32.mrf.mxu0
  %v464 = vadd.f32 %v78, %v463
  %v465 = vpop.f32.mrf.mxu0
  %466 = vmatprep.mubr.f32.mxu0 0.0
  %467 = vmatmul.mubr.f32.gmra.mxu0 %v184
  %v468 = vpop.f32.mrf.mxu0
  %v469 = vadd.f32 %v78, %v468
  %v470 = vpop.f32.mrf.mxu0
  %471 = vmatprep.mubr.f32.mxu0 0.0
  %472 = vmatmul.mubr.f32.gmra.mxu0 %v187
  %v473 = vpop.f32.mrf.mxu0
  %v474 = vadd.f32 %v78, %v473
  %v475 = vpop.f32.mrf.mxu0
  %476 = vmatprep.mubr.f32.mxu0 0.0
  %477 = vmatmul.mubr.f32.gmra.mxu0 %v190
  %v478 = vpop.f32.mrf.mxu0
  %v479 = vadd.f32 %v78, %v478
  %v480 = vpop.f32.mrf.mxu0
  %481 = vmatprep.mubr.f32.mxu0 0.0
  %482 = vmatmul.mubr.f32.gmra.mxu0 %v193
  %v483 = vpop.f32.mrf.mxu0
  %v484 = vadd.f32 %v78, %v483
  %v485 = vpop.f32.mrf.mxu0
  %486 = vmatprep.mubr.f32.mxu0 0.0
  %487 = vmatmul.mubr.f32.gmra.mxu0 %v196
  %v488 = vpop.f32.mrf.mxu0
  %v489 = vadd.f32 %v78, %v488
  %v490 = vpop.f32.mrf.mxu0
  %491 = vmatprep.mubr.f32.mxu0 0.0
  %492 = vmatmul.mubr.f32.gmra.mxu0 %v199
  %v493 = vpop.f32.mrf.mxu0
  %v494 = vadd.f32 %v78, %v493
  %v495 = vpop.f32.mrf.mxu0
  %496 = vmatprep.mubr.f32.mxu0 0.0
  %497 = vmatmul.mubr.f32.gmra.mxu0 %v202
  %v498 = vpop.f32.mrf.mxu0
  %v499 = vadd.f32 %v78, %v498
  %v500 = vpop.f32.mrf.mxu0
  %501 = vmatprep.mubr.f32.mxu0 0.0
  %502 = vmatmul.mubr.f32.gmra.mxu0 %v205
  %v503 = vpop.f32.mrf.mxu0
  %v504 = vadd.f32 %v78, %v503
  %v505 = vpop.f32.mrf.mxu0
  %506 = vmatprep.mubr.f32.mxu0 0.0
  %507 = vmatmul.mubr.f32.gmra.mxu0 %v208
  %v508 = vpop.f32.mrf.mxu0
  %v509 = vadd.f32 %v78, %v508
  %v510 = vpop.f32.mrf.mxu0
  %511 = vmatprep.mubr.f32.mxu0 0.0
  %512 = vmatmul.mubr.f32.gmra.mxu0 %v211
  %v513 = vpop.f32.mrf.mxu0
  %v514 = vadd.f32 %v78, %v513
  %v515 = vpop.f32.mrf.mxu0
  %516 = vmatprep.mubr.f32.mxu0 0.0
  %517 = vmatmul.mubr.f32.gmra.mxu0 %v214
  %v518 = vpop.f32.mrf.mxu0
  %v519 = vadd.f32 %v78, %v518
  %v520 = vpop.f32.mrf.mxu0
  %521 = vmatprep.mubr.f32.mxu0 0.0
  %522 = vmatmul.mubr.f32.gmra.mxu0 %v217
  %v523 = vpop.f32.mrf.mxu0
  %v524 = vadd.f32 %v78, %v523
  %v525 = vpop.f32.mrf.mxu0
  %526 = vmatprep.mubr.f32.mxu0 0.0
  %527 = vmatmul.mubr.f32.gmra.mxu0 %v220
  %v528 = vpop.f32.mrf.mxu0
  %v529 = vadd.f32 %v78, %v528
  %v530 = vpop.f32.mrf.mxu0
  %531 = vmatprep.mubr.f32.mxu0 0.0
  %532 = vmatmul.mubr.f32.gmra.mxu0 %v223
  %v533 = vpop.f32.mrf.mxu0
  %v534 = vadd.f32 %v78, %v533
  %v535 = vpop.f32.mrf.mxu0
  %536 = vmatprep.mubr.f32.mxu0 0.0
  %537 = vmatmul.mubr.f32.gmra.mxu0 %v226
  %v538 = vpop.f32.mrf.mxu0
  %v539 = vadd.f32 %v78, %v538
  %v540 = vpop.f32.mrf.mxu0
  %541 = vdwg.mxu0
  %v542 = vmax.f32 %v299, 0.0
  %v543 = vmax.f32 %v304, 0.0
  %v544 = vmax.f32 %v309, 0.0
  %v545 = vmax.f32 %v314, 0.0
  %v546 = vmax.f32 %v319, 0.0
  %v547 = vmax.f32 %v324, 0.0
  %v548 = vmax.f32 %v329, 0.0
  %v549 = vmax.f32 %v334, 0.0
  %v550 = vmax.f32 %v339, 0.0
  %v551 = vmax.f32 %v344, 0.0
  %v552 = vmax.f32 %v349, 0.0
  %v553 = vmax.f32 %v354, 0.0
  %v554 = vmax.f32 %v359, 0.0
  %v555 = vmax.f32 %v364, 0.0
  %v556 = vmax.f32 %v369, 0.0
  %v557 = vmax.f32 %v374, 0.0
  %v558 = vmax.f32 %v379, 0.0
  %v559 = vmax.f32 %v384, 0.0
  %v560 = vmax.f32 %v389, 0.0
  %v561 = vmax.f32 %v394, 0.0
  %v562 = vmax.f32 %v399, 0.0
  %v563 = vmax.f32 %v404, 0.0
  %v564 = vmax.f32 %v409, 0.0
  %v565 = vmax.f32 %v414, 0.0
  %v566 = vmax.f32 %v419, 0.0
  %v567 = vmax.f32 %v424, 0.0
  %v568 = vmax.f32 %v429, 0.0
  %v569 = vmax.f32 %v434, 0.0
  %v570 = vmax.f32 %v439, 0.0
  %v571 = vmax.f32 %v444, 0.0
  %v572 = vmax.f32 %v449, 0.0
  %v573 = vmax.f32 %v454, 0.0
  %v574 = vmax.f32 %v459, 0.0
  %v575 = vmax.f32 %v464, 0.0
  %v576 = vmax.f32 %v469, 0.0
  %v577 = vmax.f32 %v474, 0.0
  %v578 = vmax.f32 %v479, 0.0
  %v579 = vmax.f32 %v484, 0.0
  %v580 = vmax.f32 %v489, 0.0
  %v581 = vmax.f32 %v494, 0.0
  %v582 = vmax.f32 %v499, 0.0
  %v583 = vmax.f32 %v504, 0.0
  %v584 = vmax.f32 %v509, 0.0
  %v585 = vmax.f32 %v514, 0.0
  %v586 = vmax.f32 %v519, 0.0
  %v587 = vmax.f32 %v524, 0.0
  %v588 = vmax.f32 %v529, 0.0
  %v589 = vmax.f32 %v534, 0.0
  %v590 = vmax.f32 %v539, 0.0
  %s591 = scalar_lea.vmem %s0, 392
  %v592 = vld [vmem:[%s591] sm:$0xff]
  %v593 = vld [vmem:[%s591 + $0x8] sm:$0xff]
  %v594 = vld [vmem:[%s591 + $0x10] sm:$0xff]
  %v595 = vld [vmem:[%s591 + $0x18] sm:$0xff]
  %v596 = vld [vmem:[%s591 + $0x20] sm:$0xff]
  %v597 = vld [vmem:[%s591 + $0x28] sm:$0xff]
  %v598 = vld [vmem:[%s591 + $0x30] sm:$0xff]
  %v599 = vld [vmem:[%s591 + $0x38] sm:$0xff]
  %v600 = vld [vmem:[%s591 + $0x40] sm:$0xff]
  %v601 = vld [vmem:[%s591 + $0x48] sm:$0xff]
  %v602 = vld [vmem:[%s591 + $0x50] sm:$0xff]
  %v603 = vld [vmem:[%s591 + $0x58] sm:$0xff]
  %v604 = vld [vmem:[%s591 + $0x60] sm:$0xff]
  %v605 = vld [vmem:[%s591 + $0x68] sm:$0xff]
  %v606 = vld [vmem:[%s591 + $0x70] sm:$0xff]
  %v607 = vld [vmem:[%s591 + $0x78] sm:$0xff]
  %v608 = vld [vmem:[%s591 + $0x80] sm:$0xff]
  %v609 = vld [vmem:[%s591 + $0x88] sm:$0xff]
  %v610 = vld [vmem:[%s591 + $0x90] sm:$0xff]
  %v611 = vld [vmem:[%s591 + $0x98] sm:$0xff]
  %v612 = vld [vmem:[%s591 + $0xa0] sm:$0xff]
  %v613 = vld [vmem:[%s591 + $0xa8] sm:$0xff]
  %v614 = vld [vmem:[%s591 + $0xb0] sm:$0xff]
  %v615 = vld [vmem:[%s591 + $0xb8] sm:$0xff]
  %v616 = vld [vmem:[%s591 + $0xc0] sm:$0xff]
  %v617 = vld [vmem:[%s591 + $0xc8] sm:$0xff]
  %v618 = vld [vmem:[%s591 + $0xd0] sm:$0xff]
  %v619 = vld [vmem:[%s591 + $0xd8] sm:$0xff]
  %v620 = vld [vmem:[%s591 + $0xe0] sm:$0xff]
  %v621 = vld [vmem:[%s591 + $0xe8] sm:$0xff]
  %v622 = vld [vmem:[%s591 + $0xf0] sm:$0xff]
  %v623 = vld [vmem:[%s591 + $0xf8] sm:$0xff]
  %v624 = vld [vmem:[%s591 + $0x100] sm:$0xff]
  %v625 = vld [vmem:[%s591 + $0x108] sm:$0xff]
  %v626 = vld [vmem:[%s591 + $0x110] sm:$0xff]
  %v627 = vld [vmem:[%s591 + $0x118] sm:$0xff]
  %v628 = vld [vmem:[%s591 + $0x120] sm:$0xff]
  %v629 = vld [vmem:[%s591 + $0x128] sm:$0xff]
  %v630 = vld [vmem:[%s591 + $0x130] sm:$0xff]
  %v631 = vld [vmem:[%s591 + $0x138] sm:$0xff]
  %v632 = vld [vmem:[%s591 + $0x140] sm:$0xff]
  %v633 = vld [vmem:[%s591 + $0x148] sm:$0xff]
  %v634 = vld [vmem:[%s591 + $0x150] sm:$0xff]
  %v635 = vld [vmem:[%s591 + $0x158] sm:$0xff]
  %v636 = vld [vmem:[%s591 + $0x160] sm:$0xff]
  %v637 = vld [vmem:[%s591 + $0x168] sm:$0xff]
  %v638 = vld [vmem:[%s591 + $0x170] sm:$0xff]
  %v639 = vld [vmem:[%s591 + $0x178] sm:$0xff]
  %v640 = vld [vmem:[%s591 + $0x180] sm:$0xff]
  %v642 = vsel %vm80, %v592, 0
  %v645 = vsel %vm80, %v593, 0
  %v648 = vsel %vm80, %v594, 0
  %v651 = vsel %vm80, %v595, 0
  %v654 = vsel %vm80, %v596, 0
  %v657 = vsel %vm80, %v597, 0
  %v660 = vsel %vm80, %v598, 0
  %v663 = vsel %vm80, %v599, 0
  %v666 = vsel %vm80, %v600, 0
  %v669 = vsel %vm80, %v601, 0
  %v672 = vsel %vm80, %v602, 0
  %v675 = vsel %vm80, %v603, 0
  %v678 = vsel %vm80, %v604, 0
  %v681 = vsel %vm80, %v605, 0
  %v684 = vsel %vm80, %v606, 0
  %v687 = vsel %vm80, %v607, 0
  %v690 = vsel %vm80, %v608, 0
  %v693 = vsel %vm80, %v609, 0
  %v696 = vsel %vm80, %v610, 0
  %v699 = vsel %vm80, %v611, 0
  %v702 = vsel %vm80, %v612, 0
  %v705 = vsel %vm80, %v613, 0
  %v708 = vsel %vm80, %v614, 0
  %v711 = vsel %vm80, %v615, 0
  %v714 = vsel %vm80, %v616, 0
  %v717 = vsel %vm80, %v617, 0
  %v720 = vsel %vm80, %v618, 0
  %v723 = vsel %vm80, %v619, 0
  %v726 = vsel %vm80, %v620, 0
  %v729 = vsel %vm80, %v621, 0
  %v732 = vsel %vm80, %v622, 0
  %v735 = vsel %vm80, %v623, 0
  %v738 = vsel %vm80, %v624, 0
  %v741 = vsel %vm80, %v625, 0
  %v744 = vsel %vm80, %v626, 0
  %v747 = vsel %vm80, %v627, 0
  %v750 = vsel %vm80, %v628, 0
  %v753 = vsel %vm80, %v629, 0
  %v756 = vsel %vm80, %v630, 0
  %v759 = vsel %vm80, %v631, 0
  %v762 = vsel %vm80, %v632, 0
  %v765 = vsel %vm80, %v633, 0
  %v768 = vsel %vm80, %v634, 0
  %v771 = vsel %vm80, %v635, 0
  %v774 = vsel %vm80, %v636, 0
  %v777 = vsel %vm80, %v637, 0
  %v780 = vsel %vm80, %v638, 0
  %v783 = vsel %vm80, %v639, 0
  %v786 = vsel %vm80, %v640, 0
  %788 = vmatprep.subr.mxu0 0.0
  %789 = vmatpush1.msra.mxu0 0.0
  %790 = vmatprep.subr.mxu0 0.0
  %791 = vmatpush1.msra.mxu0 0.0
  %792 = vmatprep.subr.mxu0 0.0
  %793 = vmatpush1.msra.mxu0 0.0
  %794 = vmatprep.subr.mxu0 0.0
  %795 = vmatpush1.msra.mxu0 0.0
  %796 = vmatprep.subr.mxu0 0.0
  %797 = vmatpush1.msra.mxu0 0.0
  %798 = vmatprep.subr.mxu0 0.0
  %799 = vmatpush1.msra.mxu0 0.0
  %800 = vmatprep.subr.mxu0 0.0
  %801 = vmatpush1.msra.mxu0 %v230
  %802 = vmatprep.subr.mxu0 0.0
  %803 = vmatpush1.msra.mxu0 %v22
  %804 = vmatprep.subr.mxu0 0.0
  %805 = vmatpush1.msra.mxu0 %v21
  %806 = vmatprep.subr.mxu0 0.0
  %807 = vmatpush1.msra.mxu0 %v20
  %808 = vmatprep.subr.mxu0 0.0
  %809 = vmatpush1.msra.mxu0 %v19
  %810 = vmatprep.subr.mxu0 0.0
  %811 = vmatpush1.msra.mxu0 %v18
  %812 = vmatprep.subr.mxu0 0.0
  %813 = vmatpush1.msra.mxu0 %v17
  %814 = vmatprep.subr.mxu0 0.0
  %815 = vmatpush1.msra.mxu0 %v16
  %816 = vmatprep.subr.mxu0 0.0
  %817 = vmatpush1.msra.mxu0 %v15
  %818 = vmatprep.subr.mxu0 0.0
  %819 = vmatpush1.msra.mxu0 %v14
  %820 = vmatprep.subr.mxu0 0.0
  %821 = vmatpush2.msra.mxu0 0.0
  %822 = vmatprep.subr.mxu0 0.0
  %823 = vmatpush2.msra.mxu0 0.0
  %824 = vmatprep.subr.mxu0 0.0
  %825 = vmatpush2.msra.mxu0 0.0
  %826 = vmatprep.subr.mxu0 0.0
  %827 = vmatpush2.msra.mxu0 0.0
  %828 = vmatprep.subr.mxu0 0.0
  %829 = vmatpush2.msra.mxu0 0.0
  %830 = vmatprep.subr.mxu0 0.0
  %831 = vmatpush2.msra.mxu0 0.0
  %832 = vmatprep.subr.mxu0 0.0
  %833 = vmatpush2.msra.mxu0 0.0
  %834 = vmatprep.subr.mxu0 0.0
  %835 = vmatpush2.msra.mxu0 0.0
  %836 = vmatprep.subr.mxu0 0.0
  %837 = vmatpush2.msra.mxu0 0.0
  %838 = vmatprep.subr.mxu0 0.0
  %839 = vmatpush2.msra.mxu0 0.0
  %840 = vmatprep.subr.mxu0 0.0
  %841 = vmatpush2.msra.mxu0 0.0
  %842 = vmatprep.subr.mxu0 0.0
  %843 = vmatpush2.msra.mxu0 0.0
  %844 = vmatprep.subr.mxu0 0.0
  %845 = vmatpush2.msra.mxu0 0.0
  %846 = vmatprep.subr.mxu0 0.0
  %847 = vmatpush2.msra.mxu0 0.0
  %848 = vmatprep.subr.mxu0 0.0
  %849 = vmatpush2.msra.mxu0 0.0
  %850 = vmatprep.subr.mxu0 0.0
  %851 = vmatpush2.msra.mxu0 0.0
  %852 = vmatprep.mubr.f32.mxu0 0.0
  %853 = vmatmul.mubr.f32.gmra.mxu0 %v642
  %v854 = vpop.f32.mrf.mxu0
  %v855 = vadd.f32 %v78, %v854
  %v856 = vpop.f32.mrf.mxu0
  %857 = vmatprep.mubr.f32.mxu0 0.0
  %858 = vmatmul.mubr.f32.gmra.mxu0 %v645
  %v859 = vpop.f32.mrf.mxu0
  %v860 = vadd.f32 %v78, %v859
  %v861 = vpop.f32.mrf.mxu0
  %862 = vmatprep.mubr.f32.mxu0 0.0
  %863 = vmatmul.mubr.f32.gmra.mxu0 %v648
  %v864 = vpop.f32.mrf.mxu0
  %v865 = vadd.f32 %v78, %v864
  %v866 = vpop.f32.mrf.mxu0
  %867 = vmatprep.mubr.f32.mxu0 0.0
  %868 = vmatmul.mubr.f32.gmra.mxu0 %v651
  %v869 = vpop.f32.mrf.mxu0
  %v870 = vadd.f32 %v78, %v869
  %v871 = vpop.f32.mrf.mxu0
  %872 = vmatprep.mubr.f32.mxu0 0.0
  %873 = vmatmul.mubr.f32.gmra.mxu0 %v654
  %v874 = vpop.f32.mrf.mxu0
  %v875 = vadd.f32 %v78, %v874
  %v876 = vpop.f32.mrf.mxu0
  %877 = vmatprep.mubr.f32.mxu0 0.0
  %878 = vmatmul.mubr.f32.gmra.mxu0 %v657
  %v879 = vpop.f32.mrf.mxu0
  %v880 = vadd.f32 %v78, %v879
  %v881 = vpop.f32.mrf.mxu0
  %882 = vmatprep.mubr.f32.mxu0 0.0
  %883 = vmatmul.mubr.f32.gmra.mxu0 %v660
  %v884 = vpop.f32.mrf.mxu0
  %v885 = vadd.f32 %v78, %v884
  %v886 = vpop.f32.mrf.mxu0
  %887 = vmatprep.mubr.f32.mxu0 0.0
  %888 = vmatmul.mubr.f32.gmra.mxu0 %v663
  %v889 = vpop.f32.mrf.mxu0
  %v890 = vadd.f32 %v78, %v889
  %v891 = vpop.f32.mrf.mxu0
  %892 = vmatprep.mubr.f32.mxu0 0.0
  %893 = vmatmul.mubr.f32.gmra.mxu0 %v666
  %v894 = vpop.f32.mrf.mxu0
  %v895 = vadd.f32 %v78, %v894
  %v896 = vpop.f32.mrf.mxu0
  %897 = vmatprep.mubr.f32.mxu0 0.0
  %898 = vmatmul.mubr.f32.gmra.mxu0 %v669
  %v899 = vpop.f32.mrf.mxu0
  %v900 = vadd.f32 %v78, %v899
  %v901 = vpop.f32.mrf.mxu0
  %902 = vmatprep.mubr.f32.mxu0 0.0
  %903 = vmatmul.mubr.f32.gmra.mxu0 %v672
  %v904 = vpop.f32.mrf.mxu0
  %v905 = vadd.f32 %v78, %v904
  %v906 = vpop.f32.mrf.mxu0
  %907 = vmatprep.mubr.f32.mxu0 0.0
  %908 = vmatmul.mubr.f32.gmra.mxu0 %v675
  %v909 = vpop.f32.mrf.mxu0
  %v910 = vadd.f32 %v78, %v909
  %v911 = vpop.f32.mrf.mxu0
  %912 = vmatprep.mubr.f32.mxu0 0.0
  %913 = vmatmul.mubr.f32.gmra.mxu0 %v678
  %v914 = vpop.f32.mrf.mxu0
  %v915 = vadd.f32 %v78, %v914
  %v916 = vpop.f32.mrf.mxu0
  %917 = vmatprep.mubr.f32.mxu0 0.0
  %918 = vmatmul.mubr.f32.gmra.mxu0 %v681
  %v919 = vpop.f32.mrf.mxu0
  %v920 = vadd.f32 %v78, %v919
  %v921 = vpop.f32.mrf.mxu0
  %922 = vmatprep.mubr.f32.mxu0 0.0
  %923 = vmatmul.mubr.f32.gmra.mxu0 %v684
  %v924 = vpop.f32.mrf.mxu0
  %v925 = vadd.f32 %v78, %v924
  %v926 = vpop.f32.mrf.mxu0
  %927 = vmatprep.mubr.f32.mxu0 0.0
  %928 = vmatmul.mubr.f32.gmra.mxu0 %v687
  %v929 = vpop.f32.mrf.mxu0
  %v930 = vadd.f32 %v78, %v929
  %v931 = vpop.f32.mrf.mxu0
  %932 = vmatprep.mubr.f32.mxu0 0.0
  %933 = vmatmul.mubr.f32.gmra.mxu0 %v690
  %v934 = vpop.f32.mrf.mxu0
  %v935 = vadd.f32 %v78, %v934
  %v936 = vpop.f32.mrf.mxu0
  %937 = vmatprep.mubr.f32.mxu0 0.0
  %938 = vmatmul.mubr.f32.gmra.mxu0 %v693
  %v939 = vpop.f32.mrf.mxu0
  %v940 = vadd.f32 %v78, %v939
  %v941 = vpop.f32.mrf.mxu0
  %942 = vmatprep.mubr.f32.mxu0 0.0
  %943 = vmatmul.mubr.f32.gmra.mxu0 %v696
  %v944 = vpop.f32.mrf.mxu0
  %v945 = vadd.f32 %v78, %v944
  %v946 = vpop.f32.mrf.mxu0
  %947 = vmatprep.mubr.f32.mxu0 0.0
  %948 = vmatmul.mubr.f32.gmra.mxu0 %v699
  %v949 = vpop.f32.mrf.mxu0
  %v950 = vadd.f32 %v78, %v949
  %v951 = vpop.f32.mrf.mxu0
  %952 = vmatprep.mubr.f32.mxu0 0.0
  %953 = vmatmul.mubr.f32.gmra.mxu0 %v702
  %v954 = vpop.f32.mrf.mxu0
  %v955 = vadd.f32 %v78, %v954
  %v956 = vpop.f32.mrf.mxu0
  %957 = vmatprep.mubr.f32.mxu0 0.0
  %958 = vmatmul.mubr.f32.gmra.mxu0 %v705
  %v959 = vpop.f32.mrf.mxu0
  %v960 = vadd.f32 %v78, %v959
  %v961 = vpop.f32.mrf.mxu0
  %962 = vmatprep.mubr.f32.mxu0 0.0
  %963 = vmatmul.mubr.f32.gmra.mxu0 %v708
  %v964 = vpop.f32.mrf.mxu0
  %v965 = vadd.f32 %v78, %v964
  %v966 = vpop.f32.mrf.mxu0
  %967 = vmatprep.mubr.f32.mxu0 0.0
  %968 = vmatmul.mubr.f32.gmra.mxu0 %v711
  %v969 = vpop.f32.mrf.mxu0
  %v970 = vadd.f32 %v78, %v969
  %v971 = vpop.f32.mrf.mxu0
  %972 = vmatprep.mubr.f32.mxu0 0.0
  %973 = vmatmul.mubr.f32.gmra.mxu0 %v714
  %v974 = vpop.f32.mrf.mxu0
  %v975 = vadd.f32 %v78, %v974
  %v976 = vpop.f32.mrf.mxu0
  %977 = vmatprep.mubr.f32.mxu0 0.0
  %978 = vmatmul.mubr.f32.gmra.mxu0 %v717
  %v979 = vpop.f32.mrf.mxu0
  %v980 = vadd.f32 %v78, %v979
  %v981 = vpop.f32.mrf.mxu0
  %982 = vmatprep.mubr.f32.mxu0 0.0
  %983 = vmatmul.mubr.f32.gmra.mxu0 %v720
  %v984 = vpop.f32.mrf.mxu0
  %v985 = vadd.f32 %v78, %v984
  %v986 = vpop.f32.mrf.mxu0
  %987 = vmatprep.mubr.f32.mxu0 0.0
  %988 = vmatmul.mubr.f32.gmra.mxu0 %v723
  %v989 = vpop.f32.mrf.mxu0
  %v990 = vadd.f32 %v78, %v989
  %v991 = vpop.f32.mrf.mxu0
  %992 = vmatprep.mubr.f32.mxu0 0.0
  %993 = vmatmul.mubr.f32.gmra.mxu0 %v726
  %v994 = vpop.f32.mrf.mxu0
  %v995 = vadd.f32 %v78, %v994
  %v996 = vpop.f32.mrf.mxu0
  %997 = vmatprep.mubr.f32.mxu0 0.0
  %998 = vmatmul.mubr.f32.gmra.mxu0 %v729
  %v999 = vpop.f32.mrf.mxu0
  %v1000 = vadd.f32 %v78, %v999
  %v1001 = vpop.f32.mrf.mxu0
  %1002 = vmatprep.mubr.f32.mxu0 0.0
  %1003 = vmatmul.mubr.f32.gmra.mxu0 %v732
  %v1004 = vpop.f32.mrf.mxu0
  %v1005 = vadd.f32 %v78, %v1004
  %v1006 = vpop.f32.mrf.mxu0
  %1007 = vmatprep.mubr.f32.mxu0 0.0
  %1008 = vmatmul.mubr.f32.gmra.mxu0 %v735
  %v1009 = vpop.f32.mrf.mxu0
  %v1010 = vadd.f32 %v78, %v1009
  %v1011 = vpop.f32.mrf.mxu0
  %1012 = vmatprep.mubr.f32.mxu0 0.0
  %1013 = vmatmul.mubr.f32.gmra.mxu0 %v738
  %v1014 = vpop.f32.mrf.mxu0
  %v1015 = vadd.f32 %v78, %v1014
  %v1016 = vpop.f32.mrf.mxu0
  %1017 = vmatprep.mubr.f32.mxu0 0.0
  %1018 = vmatmul.mubr.f32.gmra.mxu0 %v741
  %v1019 = vpop.f32.mrf.mxu0
  %v1020 = vadd.f32 %v78, %v1019
  %v1021 = vpop.f32.mrf.mxu0
  %1022 = vmatprep.mubr.f32.mxu0 0.0
  %1023 = vmatmul.mubr.f32.gmra.mxu0 %v744
  %v1024 = vpop.f32.mrf.mxu0
  %v1025 = vadd.f32 %v78, %v1024
  %v1026 = vpop.f32.mrf.mxu0
  %1027 = vmatprep.mubr.f32.mxu0 0.0
  %1028 = vmatmul.mubr.f32.gmra.mxu0 %v747
  %v1029 = vpop.f32.mrf.mxu0
  %v1030 = vadd.f32 %v78, %v1029
  %v1031 = vpop.f32.mrf.mxu0
  %1032 = vmatprep.mubr.f32.mxu0 0.0
  %1033 = vmatmul.mubr.f32.gmra.mxu0 %v750
  %v1034 = vpop.f32.mrf.mxu0
  %v1035 = vadd.f32 %v78, %v1034
  %v1036 = vpop.f32.mrf.mxu0
  %1037 = vmatprep.mubr.f32.mxu0 0.0
  %1038 = vmatmul.mubr.f32.gmra.mxu0 %v753
  %v1039 = vpop.f32.mrf.mxu0
  %v1040 = vadd.f32 %v78, %v1039
  %v1041 = vpop.f32.mrf.mxu0
  %1042 = vmatprep.mubr.f32.mxu0 0.0
  %1043 = vmatmul.mubr.f32.gmra.mxu0 %v756
  %v1044 = vpop.f32.mrf.mxu0
  %v1045 = vadd.f32 %v78, %v1044
  %v1046 = vpop.f32.mrf.mxu0
  %1047 = vmatprep.mubr.f32.mxu0 0.0
  %1048 = vmatmul.mubr.f32.gmra.mxu0 %v759
  %v1049 = vpop.f32.mrf.mxu0
  %v1050 = vadd.f32 %v78, %v1049
  %v1051 = vpop.f32.mrf.mxu0
  %1052 = vmatprep.mubr.f32.mxu0 0.0
  %1053 = vmatmul.mubr.f32.gmra.mxu0 %v762
  %v1054 = vpop.f32.mrf.mxu0
  %v1055 = vadd.f32 %v78, %v1054
  %v1056 = vpop.f32.mrf.mxu0
  %1057 = vmatprep.mubr.f32.mxu0 0.0
  %1058 = vmatmul.mubr.f32.gmra.mxu0 %v765
  %v1059 = vpop.f32.mrf.mxu0
  %v1060 = vadd.f32 %v78, %v1059
  %v1061 = vpop.f32.mrf.mxu0
  %1062 = vmatprep.mubr.f32.mxu0 0.0
  %1063 = vmatmul.mubr.f32.gmra.mxu0 %v768
  %v1064 = vpop.f32.mrf.mxu0
  %v1065 = vadd.f32 %v78, %v1064
  %v1066 = vpop.f32.mrf.mxu0
  %1067 = vmatprep.mubr.f32.mxu0 0.0
  %1068 = vmatmul.mubr.f32.gmra.mxu0 %v771
  %v1069 = vpop.f32.mrf.mxu0
  %v1070 = vadd.f32 %v78, %v1069
  %v1071 = vpop.f32.mrf.mxu0
  %1072 = vmatprep.mubr.f32.mxu0 0.0
  %1073 = vmatmul.mubr.f32.gmra.mxu0 %v774
  %v1074 = vpop.f32.mrf.mxu0
  %v1075 = vadd.f32 %v78, %v1074
  %v1076 = vpop.f32.mrf.mxu0
  %1077 = vmatprep.mubr.f32.mxu0 0.0
  %1078 = vmatmul.mubr.f32.gmra.mxu0 %v777
  %v1079 = vpop.f32.mrf.mxu0
  %v1080 = vadd.f32 %v78, %v1079
  %v1081 = vpop.f32.mrf.mxu0
  %1082 = vmatprep.mubr.f32.mxu0 0.0
  %1083 = vmatmul.mubr.f32.gmra.mxu0 %v780
  %v1084 = vpop.f32.mrf.mxu0
  %v1085 = vadd.f32 %v78, %v1084
  %v1086 = vpop.f32.mrf.mxu0
  %1087 = vmatprep.mubr.f32.mxu0 0.0
  %1088 = vmatmul.mubr.f32.gmra.mxu0 %v783
  %v1089 = vpop.f32.mrf.mxu0
  %v1090 = vadd.f32 %v78, %v1089
  %v1091 = vpop.f32.mrf.mxu0
  %1092 = vmatprep.mubr.f32.mxu0 0.0
  %1093 = vmatmul.mubr.f32.gmra.mxu0 %v786
  %v1094 = vpop.f32.mrf.mxu0
  %v1095 = vadd.f32 %v78, %v1094
  %v1096 = vpop.f32.mrf.mxu0
  %1097 = vdwg.mxu0
  %v1098 = vmax.f32 %v855, 0.0
  %v1099 = vmax.f32 %v860, 0.0
  %v1100 = vmax.f32 %v865, 0.0
  %v1101 = vmax.f32 %v870, 0.0
  %v1102 = vmax.f32 %v875, 0.0
  %v1103 = vmax.f32 %v880, 0.0
  %v1104 = vmax.f32 %v885, 0.0
  %v1105 = vmax.f32 %v890, 0.0
  %v1106 = vmax.f32 %v895, 0.0
  %v1107 = vmax.f32 %v900, 0.0
  %v1108 = vmax.f32 %v905, 0.0
  %v1109 = vmax.f32 %v910, 0.0
  %v1110 = vmax.f32 %v915, 0.0
  %v1111 = vmax.f32 %v920, 0.0
  %v1112 = vmax.f32 %v925, 0.0
  %v1113 = vmax.f32 %v930, 0.0
  %v1114 = vmax.f32 %v935, 0.0
  %v1115 = vmax.f32 %v940, 0.0
  %v1116 = vmax.f32 %v945, 0.0
  %v1117 = vmax.f32 %v950, 0.0
  %v1118 = vmax.f32 %v955, 0.0
  %v1119 = vmax.f32 %v960, 0.0
  %v1120 = vmax.f32 %v965, 0.0
  %v1121 = vmax.f32 %v970, 0.0
  %v1122 = vmax.f32 %v975, 0.0
  %v1123 = vmax.f32 %v980, 0.0
  %v1124 = vmax.f32 %v985, 0.0
  %v1125 = vmax.f32 %v990, 0.0
  %v1126 = vmax.f32 %v995, 0.0
  %v1127 = vmax.f32 %v1000, 0.0
  %v1128 = vmax.f32 %v1005, 0.0
  %v1129 = vmax.f32 %v1010, 0.0
  %v1130 = vmax.f32 %v1015, 0.0
  %v1131 = vmax.f32 %v1020, 0.0
  %v1132 = vmax.f32 %v1025, 0.0
  %v1133 = vmax.f32 %v1030, 0.0
  %v1134 = vmax.f32 %v1035, 0.0
  %v1135 = vmax.f32 %v1040, 0.0
  %v1136 = vmax.f32 %v1045, 0.0
  %v1137 = vmax.f32 %v1050, 0.0
  %v1138 = vmax.f32 %v1055, 0.0
  %v1139 = vmax.f32 %v1060, 0.0
  %v1140 = vmax.f32 %v1065, 0.0
  %v1141 = vmax.f32 %v1070, 0.0
  %v1142 = vmax.f32 %v1075, 0.0
  %v1143 = vmax.f32 %v1080, 0.0
  %v1144 = vmax.f32 %v1085, 0.0
  %v1145 = vmax.f32 %v1090, 0.0
  %v1146 = vmax.f32 %v1095, 0.0
  %v1147 = vmax.f32 %v542, %v1098
  %v1148 = vmax.f32 %v543, %v1099
  %v1149 = vmax.f32 %v544, %v1100
  %v1150 = vmax.f32 %v545, %v1101
  %v1151 = vmax.f32 %v546, %v1102
  %v1152 = vmax.f32 %v547, %v1103
  %v1153 = vmax.f32 %v548, %v1104
  %v1154 = vmax.f32 %v549, %v1105
  %v1155 = vmax.f32 %v550, %v1106
  %v1156 = vmax.f32 %v551, %v1107
  %v1157 = vmax.f32 %v552, %v1108
  %v1158 = vmax.f32 %v553, %v1109
  %v1159 = vmax.f32 %v554, %v1110
  %v1160 = vmax.f32 %v555, %v1111
  %v1161 = vmax.f32 %v556, %v1112
  %v1162 = vmax.f32 %v557, %v1113
  %v1163 = vmax.f32 %v558, %v1114
  %v1164 = vmax.f32 %v559, %v1115
  %v1165 = vmax.f32 %v560, %v1116
  %v1166 = vmax.f32 %v561, %v1117
  %v1167 = vmax.f32 %v562, %v1118
  %v1168 = vmax.f32 %v563, %v1119
  %v1169 = vmax.f32 %v564, %v1120
  %v1170 = vmax.f32 %v565, %v1121
  %v1171 = vmax.f32 %v566, %v1122
  %v1172 = vmax.f32 %v567, %v1123
  %v1173 = vmax.f32 %v568, %v1124
  %v1174 = vmax.f32 %v569, %v1125
  %v1175 = vmax.f32 %v570, %v1126
  %v1176 = vmax.f32 %v571, %v1127
  %v1177 = vmax.f32 %v572, %v1128
  %v1178 = vmax.f32 %v573, %v1129
  %v1179 = vmax.f32 %v574, %v1130
  %v1180 = vmax.f32 %v575, %v1131
  %v1181 = vmax.f32 %v576, %v1132
  %v1182 = vmax.f32 %v577, %v1133
  %v1183 = vmax.f32 %v578, %v1134
  %v1184 = vmax.f32 %v579, %v1135
  %v1185 = vmax.f32 %v580, %v1136
  %v1186 = vmax.f32 %v581, %v1137
  %v1187 = vmax.f32 %v582, %v1138
  %v1188 = vmax.f32 %v583, %v1139
  %v1189 = vmax.f32 %v584, %v1140
  %v1190 = vmax.f32 %v585, %v1141
  %v1191 = vmax.f32 %v586, %v1142
  %v1192 = vmax.f32 %v587, %v1143
  %v1193 = vmax.f32 %v588, %v1144
  %v1194 = vmax.f32 %v589, %v1145
  %v1195 = vmax.f32 %v590, %v1146
  %s1196 = scalar_lea.vmem %s0, 784
  %v1197 = vld [vmem:[%s1196] sm:$0xff]
  %v1198 = vld [vmem:[%s1196 + $0x8] sm:$0xff]
  %v1199 = vld [vmem:[%s1196 + $0x10] sm:$0xff]
  %v1200 = vld [vmem:[%s1196 + $0x18] sm:$0xff]
  %v1201 = vld [vmem:[%s1196 + $0x20] sm:$0xff]
  %v1202 = vld [vmem:[%s1196 + $0x28] sm:$0xff]
  %v1203 = vld [vmem:[%s1196 + $0x30] sm:$0xff]
  %v1204 = vld [vmem:[%s1196 + $0x38] sm:$0xff]
  %v1205 = vld [vmem:[%s1196 + $0x40] sm:$0xff]
  %v1206 = vld [vmem:[%s1196 + $0x48] sm:$0xff]
  %v1207 = vld [vmem:[%s1196 + $0x50] sm:$0xff]
  %v1208 = vld [vmem:[%s1196 + $0x58] sm:$0xff]
  %v1209 = vld [vmem:[%s1196 + $0x60] sm:$0xff]
  %v1210 = vld [vmem:[%s1196 + $0x68] sm:$0xff]
  %v1211 = vld [vmem:[%s1196 + $0x70] sm:$0xff]
  %v1212 = vld [vmem:[%s1196 + $0x78] sm:$0xff]
  %v1213 = vld [vmem:[%s1196 + $0x80] sm:$0xff]
  %v1214 = vld [vmem:[%s1196 + $0x88] sm:$0xff]
  %v1215 = vld [vmem:[%s1196 + $0x90] sm:$0xff]
  %v1216 = vld [vmem:[%s1196 + $0x98] sm:$0xff]
  %v1217 = vld [vmem:[%s1196 + $0xa0] sm:$0xff]
  %v1218 = vld [vmem:[%s1196 + $0xa8] sm:$0xff]
  %v1219 = vld [vmem:[%s1196 + $0xb0] sm:$0xff]
  %v1220 = vld [vmem:[%s1196 + $0xb8] sm:$0xff]
  %v1221 = vld [vmem:[%s1196 + $0xc0] sm:$0xff]
  %v1222 = vld [vmem:[%s1196 + $0xc8] sm:$0xff]
  %v1223 = vld [vmem:[%s1196 + $0xd0] sm:$0xff]
  %v1224 = vld [vmem:[%s1196 + $0xd8] sm:$0xff]
  %v1225 = vld [vmem:[%s1196 + $0xe0] sm:$0xff]
  %v1226 = vld [vmem:[%s1196 + $0xe8] sm:$0xff]
  %v1227 = vld [vmem:[%s1196 + $0xf0] sm:$0xff]
  %v1228 = vld [vmem:[%s1196 + $0xf8] sm:$0xff]
  %v1229 = vld [vmem:[%s1196 + $0x100] sm:$0xff]
  %v1230 = vld [vmem:[%s1196 + $0x108] sm:$0xff]
  %v1231 = vld [vmem:[%s1196 + $0x110] sm:$0xff]
  %v1232 = vld [vmem:[%s1196 + $0x118] sm:$0xff]
  %v1233 = vld [vmem:[%s1196 + $0x120] sm:$0xff]
  %v1234 = vld [vmem:[%s1196 + $0x128] sm:$0xff]
  %v1235 = vld [vmem:[%s1196 + $0x130] sm:$0xff]
  %v1236 = vld [vmem:[%s1196 + $0x138] sm:$0xff]
  %v1237 = vld [vmem:[%s1196 + $0x140] sm:$0xff]
  %v1238 = vld [vmem:[%s1196 + $0x148] sm:$0xff]
  %v1239 = vld [vmem:[%s1196 + $0x150] sm:$0xff]
  %v1240 = vld [vmem:[%s1196 + $0x158] sm:$0xff]
  %v1241 = vld [vmem:[%s1196 + $0x160] sm:$0xff]
  %v1242 = vld [vmem:[%s1196 + $0x168] sm:$0xff]
  %v1243 = vld [vmem:[%s1196 + $0x170] sm:$0xff]
  %v1244 = vld [vmem:[%s1196 + $0x178] sm:$0xff]
  %v1245 = vld [vmem:[%s1196 + $0x180] sm:$0xff]
  %v1247 = vsel %vm80, %v1197, 0
  %v1250 = vsel %vm80, %v1198, 0
  %v1253 = vsel %vm80, %v1199, 0
  %v1256 = vsel %vm80, %v1200, 0
  %v1259 = vsel %vm80, %v1201, 0
  %v1262 = vsel %vm80, %v1202, 0
  %v1265 = vsel %vm80, %v1203, 0
  %v1268 = vsel %vm80, %v1204, 0
  %v1271 = vsel %vm80, %v1205, 0
  %v1274 = vsel %vm80, %v1206, 0
  %v1277 = vsel %vm80, %v1207, 0
  %v1280 = vsel %vm80, %v1208, 0
  %v1283 = vsel %vm80, %v1209, 0
  %v1286 = vsel %vm80, %v1210, 0
  %v1289 = vsel %vm80, %v1211, 0
  %v1292 = vsel %vm80, %v1212, 0
  %v1295 = vsel %vm80, %v1213, 0
  %v1298 = vsel %vm80, %v1214, 0
  %v1301 = vsel %vm80, %v1215, 0
  %v1304 = vsel %vm80, %v1216, 0
  %v1307 = vsel %vm80, %v1217, 0
  %v1310 = vsel %vm80, %v1218, 0
  %v1313 = vsel %vm80, %v1219, 0
  %v1316 = vsel %vm80, %v1220, 0
  %v1319 = vsel %vm80, %v1221, 0
  %v1322 = vsel %vm80, %v1222, 0
  %v1325 = vsel %vm80, %v1223, 0
  %v1328 = vsel %vm80, %v1224, 0
  %v1331 = vsel %vm80, %v1225, 0
  %v1334 = vsel %vm80, %v1226, 0
  %v1337 = vsel %vm80, %v1227, 0
  %v1340 = vsel %vm80, %v1228, 0
  %v1343 = vsel %vm80, %v1229, 0
  %v1346 = vsel %vm80, %v1230, 0
  %v1349 = vsel %vm80, %v1231, 0
  %v1352 = vsel %vm80, %v1232, 0
  %v1355 = vsel %vm80, %v1233, 0
  %v1358 = vsel %vm80, %v1234, 0
  %v1361 = vsel %vm80, %v1235, 0
  %v1364 = vsel %vm80, %v1236, 0
  %v1367 = vsel %vm80, %v1237, 0
  %v1370 = vsel %vm80, %v1238, 0
  %v1373 = vsel %vm80, %v1239, 0
  %v1376 = vsel %vm80, %v1240, 0
  %v1379 = vsel %vm80, %v1241, 0
  %v1382 = vsel %vm80, %v1242, 0
  %v1385 = vsel %vm80, %v1243, 0
  %v1388 = vsel %vm80, %v1244, 0
  %v1391 = vsel %vm80, %v1245, 0
  %1393 = vmatprep.subr.mxu0 0.0
  %1394 = vmatpush1.msra.mxu0 0.0
  %1395 = vmatprep.subr.mxu0 0.0
  %1396 = vmatpush1.msra.mxu0 0.0
  %1397 = vmatprep.subr.mxu0 0.0
  %1398 = vmatpush1.msra.mxu0 0.0
  %1399 = vmatprep.subr.mxu0 0.0
  %1400 = vmatpush1.msra.mxu0 0.0
  %1401 = vmatprep.subr.mxu0 0.0
  %1402 = vmatpush1.msra.mxu0 0.0
  %1403 = vmatprep.subr.mxu0 0.0
  %1404 = vmatpush1.msra.mxu0 0.0
  %1405 = vmatprep.subr.mxu0 0.0
  %1406 = vmatpush1.msra.mxu0 %v230
  %1407 = vmatprep.subr.mxu0 0.0
  %1408 = vmatpush1.msra.mxu0 %v22
  %1409 = vmatprep.subr.mxu0 0.0
  %1410 = vmatpush1.msra.mxu0 %v21
  %1411 = vmatprep.subr.mxu0 0.0
  %1412 = vmatpush1.msra.mxu0 %v20
  %1413 = vmatprep.subr.mxu0 0.0
  %1414 = vmatpush1.msra.mxu0 %v19
  %1415 = vmatprep.subr.mxu0 0.0
  %1416 = vmatpush1.msra.mxu0 %v18
  %1417 = vmatprep.subr.mxu0 0.0
  %1418 = vmatpush1.msra.mxu0 %v17
  %1419 = vmatprep.subr.mxu0 0.0
  %1420 = vmatpush1.msra.mxu0 %v16
  %1421 = vmatprep.subr.mxu0 0.0
  %1422 = vmatpush1.msra.mxu0 %v15
  %1423 = vmatprep.subr.mxu0 0.0
  %1424 = vmatpush1.msra.mxu0 %v14
  %1425 = vmatprep.subr.mxu0 0.0
  %1426 = vmatpush2.msra.mxu0 0.0
  %1427 = vmatprep.subr.mxu0 0.0
  %1428 = vmatpush2.msra.mxu0 0.0
  %1429 = vmatprep.subr.mxu0 0.0
  %1430 = vmatpush2.msra.mxu0 0.0
  %1431 = vmatprep.subr.mxu0 0.0
  %1432 = vmatpush2.msra.mxu0 0.0
  %1433 = vmatprep.subr.mxu0 0.0
  %1434 = vmatpush2.msra.mxu0 0.0
  %1435 = vmatprep.subr.mxu0 0.0
  %1436 = vmatpush2.msra.mxu0 0.0
  %1437 = vmatprep.subr.mxu0 0.0
  %1438 = vmatpush2.msra.mxu0 0.0
  %1439 = vmatprep.subr.mxu0 0.0
  %1440 = vmatpush2.msra.mxu0 0.0
  %1441 = vmatprep.subr.mxu0 0.0
  %1442 = vmatpush2.msra.mxu0 0.0
  %1443 = vmatprep.subr.mxu0 0.0
  %1444 = vmatpush2.msra.mxu0 0.0
  %1445 = vmatprep.subr.mxu0 0.0
  %1446 = vmatpush2.msra.mxu0 0.0
  %1447 = vmatprep.subr.mxu0 0.0
  %1448 = vmatpush2.msra.mxu0 0.0
  %1449 = vmatprep.subr.mxu0 0.0
  %1450 = vmatpush2.msra.mxu0 0.0
  %1451 = vmatprep.subr.mxu0 0.0
  %1452 = vmatpush2.msra.mxu0 0.0
  %1453 = vmatprep.subr.mxu0 0.0
  %1454 = vmatpush2.msra.mxu0 0.0
  %1455 = vmatprep.subr.mxu0 0.0
  %1456 = vmatpush2.msra.mxu0 0.0
  %1457 = vmatprep.mubr.f32.mxu0 0.0
  %1458 = vmatmul.mubr.f32.gmra.mxu0 %v1247
  %v1459 = vpop.f32.mrf.mxu0
  %v1460 = vadd.f32 %v78, %v1459
  %v1461 = vpop.f32.mrf.mxu0
  %1462 = vmatprep.mubr.f32.mxu0 0.0
  %1463 = vmatmul.mubr.f32.gmra.mxu0 %v1250
  %v1464 = vpop.f32.mrf.mxu0
  %v1465 = vadd.f32 %v78, %v1464
  %v1466 = vpop.f32.mrf.mxu0
  %1467 = vmatprep.mubr.f32.mxu0 0.0
  %1468 = vmatmul.mubr.f32.gmra.mxu0 %v1253
  %v1469 = vpop.f32.mrf.mxu0
  %v1470 = vadd.f32 %v78, %v1469
  %v1471 = vpop.f32.mrf.mxu0
  %1472 = vmatprep.mubr.f32.mxu0 0.0
  %1473 = vmatmul.mubr.f32.gmra.mxu0 %v1256
  %v1474 = vpop.f32.mrf.mxu0
  %v1475 = vadd.f32 %v78, %v1474
  %v1476 = vpop.f32.mrf.mxu0
  %1477 = vmatprep.mubr.f32.mxu0 0.0
  %1478 = vmatmul.mubr.f32.gmra.mxu0 %v1259
  %v1479 = vpop.f32.mrf.mxu0
  %v1480 = vadd.f32 %v78, %v1479
  %v1481 = vpop.f32.mrf.mxu0
  %1482 = vmatprep.mubr.f32.mxu0 0.0
  %1483 = vmatmul.mubr.f32.gmra.mxu0 %v1262
  %v1484 = vpop.f32.mrf.mxu0
  %v1485 = vadd.f32 %v78, %v1484
  %v1486 = vpop.f32.mrf.mxu0
  %1487 = vmatprep.mubr.f32.mxu0 0.0
  %1488 = vmatmul.mubr.f32.gmra.mxu0 %v1265
  %v1489 = vpop.f32.mrf.mxu0
  %v1490 = vadd.f32 %v78, %v1489
  %v1491 = vpop.f32.mrf.mxu0
  %1492 = vmatprep.mubr.f32.mxu0 0.0
  %1493 = vmatmul.mubr.f32.gmra.mxu0 %v1268
  %v1494 = vpop.f32.mrf.mxu0
  %v1495 = vadd.f32 %v78, %v1494
  %v1496 = vpop.f32.mrf.mxu0
  %1497 = vmatprep.mubr.f32.mxu0 0.0
  %1498 = vmatmul.mubr.f32.gmra.mxu0 %v1271
  %v1499 = vpop.f32.mrf.mxu0
  %v1500 = vadd.f32 %v78, %v1499
  %v1501 = vpop.f32.mrf.mxu0
  %1502 = vmatprep.mubr.f32.mxu0 0.0
  %1503 = vmatmul.mubr.f32.gmra.mxu0 %v1274
  %v1504 = vpop.f32.mrf.mxu0
  %v1505 = vadd.f32 %v78, %v1504
  %v1506 = vpop.f32.mrf.mxu0
  %1507 = vmatprep.mubr.f32.mxu0 0.0
  %1508 = vmatmul.mubr.f32.gmra.mxu0 %v1277
  %v1509 = vpop.f32.mrf.mxu0
  %v1510 = vadd.f32 %v78, %v1509
  %v1511 = vpop.f32.mrf.mxu0
  %1512 = vmatprep.mubr.f32.mxu0 0.0
  %1513 = vmatmul.mubr.f32.gmra.mxu0 %v1280
  %v1514 = vpop.f32.mrf.mxu0
  %v1515 = vadd.f32 %v78, %v1514
  %v1516 = vpop.f32.mrf.mxu0
  %1517 = vmatprep.mubr.f32.mxu0 0.0
  %1518 = vmatmul.mubr.f32.gmra.mxu0 %v1283
  %v1519 = vpop.f32.mrf.mxu0
  %v1520 = vadd.f32 %v78, %v1519
  %v1521 = vpop.f32.mrf.mxu0
  %1522 = vmatprep.mubr.f32.mxu0 0.0
  %1523 = vmatmul.mubr.f32.gmra.mxu0 %v1286
  %v1524 = vpop.f32.mrf.mxu0
  %v1525 = vadd.f32 %v78, %v1524
  %v1526 = vpop.f32.mrf.mxu0
  %1527 = vmatprep.mubr.f32.mxu0 0.0
  %1528 = vmatmul.mubr.f32.gmra.mxu0 %v1289
  %v1529 = vpop.f32.mrf.mxu0
  %v1530 = vadd.f32 %v78, %v1529
  %v1531 = vpop.f32.mrf.mxu0
  %1532 = vmatprep.mubr.f32.mxu0 0.0
  %1533 = vmatmul.mubr.f32.gmra.mxu0 %v1292
  %v1534 = vpop.f32.mrf.mxu0
  %v1535 = vadd.f32 %v78, %v1534
  %v1536 = vpop.f32.mrf.mxu0
  %1537 = vmatprep.mubr.f32.mxu0 0.0
  %1538 = vmatmul.mubr.f32.gmra.mxu0 %v1295
  %v1539 = vpop.f32.mrf.mxu0
  %v1540 = vadd.f32 %v78, %v1539
  %v1541 = vpop.f32.mrf.mxu0
  %1542 = vmatprep.mubr.f32.mxu0 0.0
  %1543 = vmatmul.mubr.f32.gmra.mxu0 %v1298
  %v1544 = vpop.f32.mrf.mxu0
  %v1545 = vadd.f32 %v78, %v1544
  %v1546 = vpop.f32.mrf.mxu0
  %1547 = vmatprep.mubr.f32.mxu0 0.0
  %1548 = vmatmul.mubr.f32.gmra.mxu0 %v1301
  %v1549 = vpop.f32.mrf.mxu0
  %v1550 = vadd.f32 %v78, %v1549
  %v1551 = vpop.f32.mrf.mxu0
  %1552 = vmatprep.mubr.f32.mxu0 0.0
  %1553 = vmatmul.mubr.f32.gmra.mxu0 %v1304
  %v1554 = vpop.f32.mrf.mxu0
  %v1555 = vadd.f32 %v78, %v1554
  %v1556 = vpop.f32.mrf.mxu0
  %1557 = vmatprep.mubr.f32.mxu0 0.0
  %1558 = vmatmul.mubr.f32.gmra.mxu0 %v1307
  %v1559 = vpop.f32.mrf.mxu0
  %v1560 = vadd.f32 %v78, %v1559
  %v1561 = vpop.f32.mrf.mxu0
  %1562 = vmatprep.mubr.f32.mxu0 0.0
  %1563 = vmatmul.mubr.f32.gmra.mxu0 %v1310
  %v1564 = vpop.f32.mrf.mxu0
  %v1565 = vadd.f32 %v78, %v1564
  %v1566 = vpop.f32.mrf.mxu0
  %1567 = vmatprep.mubr.f32.mxu0 0.0
  %1568 = vmatmul.mubr.f32.gmra.mxu0 %v1313
  %v1569 = vpop.f32.mrf.mxu0
  %v1570 = vadd.f32 %v78, %v1569
  %v1571 = vpop.f32.mrf.mxu0
  %1572 = vmatprep.mubr.f32.mxu0 0.0
  %1573 = vmatmul.mubr.f32.gmra.mxu0 %v1316
  %v1574 = vpop.f32.mrf.mxu0
  %v1575 = vadd.f32 %v78, %v1574
  %v1576 = vpop.f32.mrf.mxu0
  %1577 = vmatprep.mubr.f32.mxu0 0.0
  %1578 = vmatmul.mubr.f32.gmra.mxu0 %v1319
  %v1579 = vpop.f32.mrf.mxu0
  %v1580 = vadd.f32 %v78, %v1579
  %v1581 = vpop.f32.mrf.mxu0
  %1582 = vmatprep.mubr.f32.mxu0 0.0
  %1583 = vmatmul.mubr.f32.gmra.mxu0 %v1322
  %v1584 = vpop.f32.mrf.mxu0
  %v1585 = vadd.f32 %v78, %v1584
  %v1586 = vpop.f32.mrf.mxu0
  %1587 = vmatprep.mubr.f32.mxu0 0.0
  %1588 = vmatmul.mubr.f32.gmra.mxu0 %v1325
  %v1589 = vpop.f32.mrf.mxu0
  %v1590 = vadd.f32 %v78, %v1589
  %v1591 = vpop.f32.mrf.mxu0
  %1592 = vmatprep.mubr.f32.mxu0 0.0
  %1593 = vmatmul.mubr.f32.gmra.mxu0 %v1328
  %v1594 = vpop.f32.mrf.mxu0
  %v1595 = vadd.f32 %v78, %v1594
  %v1596 = vpop.f32.mrf.mxu0
  %1597 = vmatprep.mubr.f32.mxu0 0.0
  %1598 = vmatmul.mubr.f32.gmra.mxu0 %v1331
  %v1599 = vpop.f32.mrf.mxu0
  %v1600 = vadd.f32 %v78, %v1599
  %v1601 = vpop.f32.mrf.mxu0
  %1602 = vmatprep.mubr.f32.mxu0 0.0
  %1603 = vmatmul.mubr.f32.gmra.mxu0 %v1334
  %v1604 = vpop.f32.mrf.mxu0
  %v1605 = vadd.f32 %v78, %v1604
  %v1606 = vpop.f32.mrf.mxu0
  %1607 = vmatprep.mubr.f32.mxu0 0.0
  %1608 = vmatmul.mubr.f32.gmra.mxu0 %v1337
  %v1609 = vpop.f32.mrf.mxu0
  %v1610 = vadd.f32 %v78, %v1609
  %v1611 = vpop.f32.mrf.mxu0
  %1612 = vmatprep.mubr.f32.mxu0 0.0
  %1613 = vmatmul.mubr.f32.gmra.mxu0 %v1340
  %v1614 = vpop.f32.mrf.mxu0
  %v1615 = vadd.f32 %v78, %v1614
  %v1616 = vpop.f32.mrf.mxu0
  %1617 = vmatprep.mubr.f32.mxu0 0.0
  %1618 = vmatmul.mubr.f32.gmra.mxu0 %v1343
  %v1619 = vpop.f32.mrf.mxu0
  %v1620 = vadd.f32 %v78, %v1619
  %v1621 = vpop.f32.mrf.mxu0
  %1622 = vmatprep.mubr.f32.mxu0 0.0
  %1623 = vmatmul.mubr.f32.gmra.mxu0 %v1346
  %v1624 = vpop.f32.mrf.mxu0
  %v1625 = vadd.f32 %v78, %v1624
  %v1626 = vpop.f32.mrf.mxu0
  %1627 = vmatprep.mubr.f32.mxu0 0.0
  %1628 = vmatmul.mubr.f32.gmra.mxu0 %v1349
  %v1629 = vpop.f32.mrf.mxu0
  %v1630 = vadd.f32 %v78, %v1629
  %v1631 = vpop.f32.mrf.mxu0
  %1632 = vmatprep.mubr.f32.mxu0 0.0
  %1633 = vmatmul.mubr.f32.gmra.mxu0 %v1352
  %v1634 = vpop.f32.mrf.mxu0
  %v1635 = vadd.f32 %v78, %v1634
  %v1636 = vpop.f32.mrf.mxu0
  %1637 = vmatprep.mubr.f32.mxu0 0.0
  %1638 = vmatmul.mubr.f32.gmra.mxu0 %v1355
  %v1639 = vpop.f32.mrf.mxu0
  %v1640 = vadd.f32 %v78, %v1639
  %v1641 = vpop.f32.mrf.mxu0
  %1642 = vmatprep.mubr.f32.mxu0 0.0
  %1643 = vmatmul.mubr.f32.gmra.mxu0 %v1358
  %v1644 = vpop.f32.mrf.mxu0
  %v1645 = vadd.f32 %v78, %v1644
  %v1646 = vpop.f32.mrf.mxu0
  %1647 = vmatprep.mubr.f32.mxu0 0.0
  %1648 = vmatmul.mubr.f32.gmra.mxu0 %v1361
  %v1649 = vpop.f32.mrf.mxu0
  %v1650 = vadd.f32 %v78, %v1649
  %v1651 = vpop.f32.mrf.mxu0
  %1652 = vmatprep.mubr.f32.mxu0 0.0
  %1653 = vmatmul.mubr.f32.gmra.mxu0 %v1364
  %v1654 = vpop.f32.mrf.mxu0
  %v1655 = vadd.f32 %v78, %v1654
  %v1656 = vpop.f32.mrf.mxu0
  %1657 = vmatprep.mubr.f32.mxu0 0.0
  %1658 = vmatmul.mubr.f32.gmra.mxu0 %v1367
  %v1659 = vpop.f32.mrf.mxu0
  %v1660 = vadd.f32 %v78, %v1659
  %v1661 = vpop.f32.mrf.mxu0
  %1662 = vmatprep.mubr.f32.mxu0 0.0
  %1663 = vmatmul.mubr.f32.gmra.mxu0 %v1370
  %v1664 = vpop.f32.mrf.mxu0
  %v1665 = vadd.f32 %v78, %v1664
  %v1666 = vpop.f32.mrf.mxu0
  %1667 = vmatprep.mubr.f32.mxu0 0.0
  %1668 = vmatmul.mubr.f32.gmra.mxu0 %v1373
  %v1669 = vpop.f32.mrf.mxu0
  %v1670 = vadd.f32 %v78, %v1669
  %v1671 = vpop.f32.mrf.mxu0
  %1672 = vmatprep.mubr.f32.mxu0 0.0
  %1673 = vmatmul.mubr.f32.gmra.mxu0 %v1376
  %v1674 = vpop.f32.mrf.mxu0
  %v1675 = vadd.f32 %v78, %v1674
  %v1676 = vpop.f32.mrf.mxu0
  %1677 = vmatprep.mubr.f32.mxu0 0.0
  %1678 = vmatmul.mubr.f32.gmra.mxu0 %v1379
  %v1679 = vpop.f32.mrf.mxu0
  %v1680 = vadd.f32 %v78, %v1679
  %v1681 = vpop.f32.mrf.mxu0
  %1682 = vmatprep.mubr.f32.mxu0 0.0
  %1683 = vmatmul.mubr.f32.gmra.mxu0 %v1382
  %v1684 = vpop.f32.mrf.mxu0
  %v1685 = vadd.f32 %v78, %v1684
  %v1686 = vpop.f32.mrf.mxu0
  %1687 = vmatprep.mubr.f32.mxu0 0.0
  %1688 = vmatmul.mubr.f32.gmra.mxu0 %v1385
  %v1689 = vpop.f32.mrf.mxu0
  %v1690 = vadd.f32 %v78, %v1689
  %v1691 = vpop.f32.mrf.mxu0
  %1692 = vmatprep.mubr.f32.mxu0 0.0
  %1693 = vmatmul.mubr.f32.gmra.mxu0 %v1388
  %v1694 = vpop.f32.mrf.mxu0
  %v1695 = vadd.f32 %v78, %v1694
  %v1696 = vpop.f32.mrf.mxu0
  %1697 = vmatprep.mubr.f32.mxu0 0.0
  %1698 = vmatmul.mubr.f32.gmra.mxu0 %v1391
  %v1699 = vpop.f32.mrf.mxu0
  %v1700 = vadd.f32 %v78, %v1699
  %v1701 = vpop.f32.mrf.mxu0
  %1702 = vdwg.mxu0
  %v1703 = vmax.f32 %v1460, 0.0
  %v1704 = vmax.f32 %v1465, 0.0
  %v1705 = vmax.f32 %v1470, 0.0
  %v1706 = vmax.f32 %v1475, 0.0
  %v1707 = vmax.f32 %v1480, 0.0
  %v1708 = vmax.f32 %v1485, 0.0
  %v1709 = vmax.f32 %v1490, 0.0
  %v1710 = vmax.f32 %v1495, 0.0
  %v1711 = vmax.f32 %v1500, 0.0
  %v1712 = vmax.f32 %v1505, 0.0
  %v1713 = vmax.f32 %v1510, 0.0
  %v1714 = vmax.f32 %v1515, 0.0
  %v1715 = vmax.f32 %v1520, 0.0
  %v1716 = vmax.f32 %v1525, 0.0
  %v1717 = vmax.f32 %v1530, 0.0
  %v1718 = vmax.f32 %v1535, 0.0
  %v1719 = vmax.f32 %v1540, 0.0
  %v1720 = vmax.f32 %v1545, 0.0
  %v1721 = vmax.f32 %v1550, 0.0
  %v1722 = vmax.f32 %v1555, 0.0
  %v1723 = vmax.f32 %v1560, 0.0
  %v1724 = vmax.f32 %v1565, 0.0
  %v1725 = vmax.f32 %v1570, 0.0
  %v1726 = vmax.f32 %v1575, 0.0
  %v1727 = vmax.f32 %v1580, 0.0
  %v1728 = vmax.f32 %v1585, 0.0
  %v1729 = vmax.f32 %v1590, 0.0
  %v1730 = vmax.f32 %v1595, 0.0
  %v1731 = vmax.f32 %v1600, 0.0
  %v1732 = vmax.f32 %v1605, 0.0
  %v1733 = vmax.f32 %v1610, 0.0
  %v1734 = vmax.f32 %v1615, 0.0
  %v1735 = vmax.f32 %v1620, 0.0
  %v1736 = vmax.f32 %v1625, 0.0
  %v1737 = vmax.f32 %v1630, 0.0
  %v1738 = vmax.f32 %v1635, 0.0
  %v1739 = vmax.f32 %v1640, 0.0
  %v1740 = vmax.f32 %v1645, 0.0
  %v1741 = vmax.f32 %v1650, 0.0
  %v1742 = vmax.f32 %v1655, 0.0
  %v1743 = vmax.f32 %v1660, 0.0
  %v1744 = vmax.f32 %v1665, 0.0
  %v1745 = vmax.f32 %v1670, 0.0
  %v1746 = vmax.f32 %v1675, 0.0
  %v1747 = vmax.f32 %v1680, 0.0
  %v1748 = vmax.f32 %v1685, 0.0
  %v1749 = vmax.f32 %v1690, 0.0
  %v1750 = vmax.f32 %v1695, 0.0
  %v1751 = vmax.f32 %v1700, 0.0
  %s1752 = scalar_lea.vmem %s0, 1176
  %v1753 = vld [vmem:[%s1752] sm:$0xff]
  %v1754 = vld [vmem:[%s1752 + $0x8] sm:$0xff]
  %v1755 = vld [vmem:[%s1752 + $0x10] sm:$0xff]
  %v1756 = vld [vmem:[%s1752 + $0x18] sm:$0xff]
  %v1757 = vld [vmem:[%s1752 + $0x20] sm:$0xff]
  %v1758 = vld [vmem:[%s1752 + $0x28] sm:$0xff]
  %v1759 = vld [vmem:[%s1752 + $0x30] sm:$0xff]
  %v1760 = vld [vmem:[%s1752 + $0x38] sm:$0xff]
  %v1761 = vld [vmem:[%s1752 + $0x40] sm:$0xff]
  %v1762 = vld [vmem:[%s1752 + $0x48] sm:$0xff]
  %v1763 = vld [vmem:[%s1752 + $0x50] sm:$0xff]
  %v1764 = vld [vmem:[%s1752 + $0x58] sm:$0xff]
  %v1765 = vld [vmem:[%s1752 + $0x60] sm:$0xff]
  %v1766 = vld [vmem:[%s1752 + $0x68] sm:$0xff]
  %v1767 = vld [vmem:[%s1752 + $0x70] sm:$0xff]
  %v1768 = vld [vmem:[%s1752 + $0x78] sm:$0xff]
  %v1769 = vld [vmem:[%s1752 + $0x80] sm:$0xff]
  %v1770 = vld [vmem:[%s1752 + $0x88] sm:$0xff]
  %v1771 = vld [vmem:[%s1752 + $0x90] sm:$0xff]
  %v1772 = vld [vmem:[%s1752 + $0x98] sm:$0xff]
  %v1773 = vld [vmem:[%s1752 + $0xa0] sm:$0xff]
  %v1774 = vld [vmem:[%s1752 + $0xa8] sm:$0xff]
  %v1775 = vld [vmem:[%s1752 + $0xb0] sm:$0xff]
  %v1776 = vld [vmem:[%s1752 + $0xb8] sm:$0xff]
  %v1777 = vld [vmem:[%s1752 + $0xc0] sm:$0xff]
  %v1778 = vld [vmem:[%s1752 + $0xc8] sm:$0xff]
  %v1779 = vld [vmem:[%s1752 + $0xd0] sm:$0xff]
  %v1780 = vld [vmem:[%s1752 + $0xd8] sm:$0xff]
  %v1781 = vld [vmem:[%s1752 + $0xe0] sm:$0xff]
  %v1782 = vld [vmem:[%s1752 + $0xe8] sm:$0xff]
  %v1783 = vld [vmem:[%s1752 + $0xf0] sm:$0xff]
  %v1784 = vld [vmem:[%s1752 + $0xf8] sm:$0xff]
  %v1785 = vld [vmem:[%s1752 + $0x100] sm:$0xff]
  %v1786 = vld [vmem:[%s1752 + $0x108] sm:$0xff]
  %v1787 = vld [vmem:[%s1752 + $0x110] sm:$0xff]
  %v1788 = vld [vmem:[%s1752 + $0x118] sm:$0xff]
  %v1789 = vld [vmem:[%s1752 + $0x120] sm:$0xff]
  %v1790 = vld [vmem:[%s1752 + $0x128] sm:$0xff]
  %v1791 = vld [vmem:[%s1752 + $0x130] sm:$0xff]
  %v1792 = vld [vmem:[%s1752 + $0x138] sm:$0xff]
  %v1793 = vld [vmem:[%s1752 + $0x140] sm:$0xff]
  %v1794 = vld [vmem:[%s1752 + $0x148] sm:$0xff]
  %v1795 = vld [vmem:[%s1752 + $0x150] sm:$0xff]
  %v1796 = vld [vmem:[%s1752 + $0x158] sm:$0xff]
  %v1797 = vld [vmem:[%s1752 + $0x160] sm:$0xff]
  %v1798 = vld [vmem:[%s1752 + $0x168] sm:$0xff]
  %v1799 = vld [vmem:[%s1752 + $0x170] sm:$0xff]
  %v1800 = vld [vmem:[%s1752 + $0x178] sm:$0xff]
  %v1801 = vld [vmem:[%s1752 + $0x180] sm:$0xff]
  %v1803 = vsel %vm80, %v1753, 0
  %v1806 = vsel %vm80, %v1754, 0
  %v1809 = vsel %vm80, %v1755, 0
  %v1812 = vsel %vm80, %v1756, 0
  %v1815 = vsel %vm80, %v1757, 0
  %v1818 = vsel %vm80, %v1758, 0
  %v1821 = vsel %vm80, %v1759, 0
  %v1824 = vsel %vm80, %v1760, 0
  %v1827 = vsel %vm80, %v1761, 0
  %v1830 = vsel %vm80, %v1762, 0
  %v1833 = vsel %vm80, %v1763, 0
  %v1836 = vsel %vm80, %v1764, 0
  %v1839 = vsel %vm80, %v1765, 0
  %v1842 = vsel %vm80, %v1766, 0
  %v1845 = vsel %vm80, %v1767, 0
  %v1848 = vsel %vm80, %v1768, 0
  %v1851 = vsel %vm80, %v1769, 0
  %v1854 = vsel %vm80, %v1770, 0
  %v1857 = vsel %vm80, %v1771, 0
  %v1860 = vsel %vm80, %v1772, 0
  %v1863 = vsel %vm80, %v1773, 0
  %v1866 = vsel %vm80, %v1774, 0
  %v1869 = vsel %vm80, %v1775, 0
  %v1872 = vsel %vm80, %v1776, 0
  %v1875 = vsel %vm80, %v1777, 0
  %v1878 = vsel %vm80, %v1778, 0
  %v1881 = vsel %vm80, %v1779, 0
  %v1884 = vsel %vm80, %v1780, 0
  %v1887 = vsel %vm80, %v1781, 0
  %v1890 = vsel %vm80, %v1782, 0
  %v1893 = vsel %vm80, %v1783, 0
  %v1896 = vsel %vm80, %v1784, 0
  %v1899 = vsel %vm80, %v1785, 0
  %v1902 = vsel %vm80, %v1786, 0
  %v1905 = vsel %vm80, %v1787, 0
  %v1908 = vsel %vm80, %v1788, 0
  %v1911 = vsel %vm80, %v1789, 0
  %v1914 = vsel %vm80, %v1790, 0
  %v1917 = vsel %vm80, %v1791, 0
  %v1920 = vsel %vm80, %v1792, 0
  %v1923 = vsel %vm80, %v1793, 0
  %v1926 = vsel %vm80, %v1794, 0
  %v1929 = vsel %vm80, %v1795, 0
  %v1932 = vsel %vm80, %v1796, 0
  %v1935 = vsel %vm80, %v1797, 0
  %v1938 = vsel %vm80, %v1798, 0
  %v1941 = vsel %vm80, %v1799, 0
  %v1944 = vsel %vm80, %v1800, 0
  %v1947 = vsel %vm80, %v1801, 0
  %1949 = vmatprep.subr.mxu0 0.0
  %1950 = vmatpush1.msra.mxu0 0.0
  %1951 = vmatprep.subr.mxu0 0.0
  %1952 = vmatpush1.msra.mxu0 0.0
  %1953 = vmatprep.subr.mxu0 0.0
  %1954 = vmatpush1.msra.mxu0 0.0
  %1955 = vmatprep.subr.mxu0 0.0
  %1956 = vmatpush1.msra.mxu0 0.0
  %1957 = vmatprep.subr.mxu0 0.0
  %1958 = vmatpush1.msra.mxu0 0.0
  %1959 = vmatprep.subr.mxu0 0.0
  %1960 = vmatpush1.msra.mxu0 0.0
  %1961 = vmatprep.subr.mxu0 0.0
  %1962 = vmatpush1.msra.mxu0 %v230
  %1963 = vmatprep.subr.mxu0 0.0
  %1964 = vmatpush1.msra.mxu0 %v22
  %1965 = vmatprep.subr.mxu0 0.0
  %1966 = vmatpush1.msra.mxu0 %v21
  %1967 = vmatprep.subr.mxu0 0.0
  %1968 = vmatpush1.msra.mxu0 %v20
  %1969 = vmatprep.subr.mxu0 0.0
  %1970 = vmatpush1.msra.mxu0 %v19
  %1971 = vmatprep.subr.mxu0 0.0
  %1972 = vmatpush1.msra.mxu0 %v18
  %1973 = vmatprep.subr.mxu0 0.0
  %1974 = vmatpush1.msra.mxu0 %v17
  %1975 = vmatprep.subr.mxu0 0.0
  %1976 = vmatpush1.msra.mxu0 %v16
  %1977 = vmatprep.subr.mxu0 0.0
  %1978 = vmatpush1.msra.mxu0 %v15
  %1979 = vmatprep.subr.mxu0 0.0
  %1980 = vmatpush1.msra.mxu0 %v14
  %1981 = vmatprep.subr.mxu0 0.0
  %1982 = vmatpush2.msra.mxu0 0.0
  %1983 = vmatprep.subr.mxu0 0.0
  %1984 = vmatpush2.msra.mxu0 0.0
  %1985 = vmatprep.subr.mxu0 0.0
  %1986 = vmatpush2.msra.mxu0 0.0
  %1987 = vmatprep.subr.mxu0 0.0
  %1988 = vmatpush2.msra.mxu0 0.0
  %1989 = vmatprep.subr.mxu0 0.0
  %1990 = vmatpush2.msra.mxu0 0.0
  %1991 = vmatprep.subr.mxu0 0.0
  %1992 = vmatpush2.msra.mxu0 0.0
  %1993 = vmatprep.subr.mxu0 0.0
  %1994 = vmatpush2.msra.mxu0 0.0
  %1995 = vmatprep.subr.mxu0 0.0
  %1996 = vmatpush2.msra.mxu0 0.0
  %1997 = vmatprep.subr.mxu0 0.0
  %1998 = vmatpush2.msra.mxu0 0.0
  %1999 = vmatprep.subr.mxu0 0.0
  %2000 = vmatpush2.msra.mxu0 0.0
  %2001 = vmatprep.subr.mxu0 0.0
  %2002 = vmatpush2.msra.mxu0 0.0
  %2003 = vmatprep.subr.mxu0 0.0
  %2004 = vmatpush2.msra.mxu0 0.0
  %2005 = vmatprep.subr.mxu0 0.0
  %2006 = vmatpush2.msra.mxu0 0.0
  %2007 = vmatprep.subr.mxu0 0.0
  %2008 = vmatpush2.msra.mxu0 0.0
  %2009 = vmatprep.subr.mxu0 0.0
  %2010 = vmatpush2.msra.mxu0 0.0
  %2011 = vmatprep.subr.mxu0 0.0
  %2012 = vmatpush2.msra.mxu0 0.0
  %2013 = vmatprep.mubr.f32.mxu0 0.0
  %2014 = vmatmul.mubr.f32.gmra.mxu0 %v1803
  %v2015 = vpop.f32.mrf.mxu0
  %v2016 = vadd.f32 %v78, %v2015
  %v2017 = vpop.f32.mrf.mxu0
  %2018 = vmatprep.mubr.f32.mxu0 0.0
  %2019 = vmatmul.mubr.f32.gmra.mxu0 %v1806
  %v2020 = vpop.f32.mrf.mxu0
  %v2021 = vadd.f32 %v78, %v2020
  %v2022 = vpop.f32.mrf.mxu0
  %2023 = vmatprep.mubr.f32.mxu0 0.0
  %2024 = vmatmul.mubr.f32.gmra.mxu0 %v1809
  %v2025 = vpop.f32.mrf.mxu0
  %v2026 = vadd.f32 %v78, %v2025
  %v2027 = vpop.f32.mrf.mxu0
  %2028 = vmatprep.mubr.f32.mxu0 0.0
  %2029 = vmatmul.mubr.f32.gmra.mxu0 %v1812
  %v2030 = vpop.f32.mrf.mxu0
  %v2031 = vadd.f32 %v78, %v2030
  %v2032 = vpop.f32.mrf.mxu0
  %2033 = vmatprep.mubr.f32.mxu0 0.0
  %2034 = vmatmul.mubr.f32.gmra.mxu0 %v1815
  %v2035 = vpop.f32.mrf.mxu0
  %v2036 = vadd.f32 %v78, %v2035
  %v2037 = vpop.f32.mrf.mxu0
  %2038 = vmatprep.mubr.f32.mxu0 0.0
  %2039 = vmatmul.mubr.f32.gmra.mxu0 %v1818
  %v2040 = vpop.f32.mrf.mxu0
  %v2041 = vadd.f32 %v78, %v2040
  %v2042 = vpop.f32.mrf.mxu0
  %2043 = vmatprep.mubr.f32.mxu0 0.0
  %2044 = vmatmul.mubr.f32.gmra.mxu0 %v1821
  %v2045 = vpop.f32.mrf.mxu0
  %v2046 = vadd.f32 %v78, %v2045
  %v2047 = vpop.f32.mrf.mxu0
  %2048 = vmatprep.mubr.f32.mxu0 0.0
  %2049 = vmatmul.mubr.f32.gmra.mxu0 %v1824
  %v2050 = vpop.f32.mrf.mxu0
  %v2051 = vadd.f32 %v78, %v2050
  %v2052 = vpop.f32.mrf.mxu0
  %2053 = vmatprep.mubr.f32.mxu0 0.0
  %2054 = vmatmul.mubr.f32.gmra.mxu0 %v1827
  %v2055 = vpop.f32.mrf.mxu0
  %v2056 = vadd.f32 %v78, %v2055
  %v2057 = vpop.f32.mrf.mxu0
  %2058 = vmatprep.mubr.f32.mxu0 0.0
  %2059 = vmatmul.mubr.f32.gmra.mxu0 %v1830
  %v2060 = vpop.f32.mrf.mxu0
  %v2061 = vadd.f32 %v78, %v2060
  %v2062 = vpop.f32.mrf.mxu0
  %2063 = vmatprep.mubr.f32.mxu0 0.0
  %2064 = vmatmul.mubr.f32.gmra.mxu0 %v1833
  %v2065 = vpop.f32.mrf.mxu0
  %v2066 = vadd.f32 %v78, %v2065
  %v2067 = vpop.f32.mrf.mxu0
  %2068 = vmatprep.mubr.f32.mxu0 0.0
  %2069 = vmatmul.mubr.f32.gmra.mxu0 %v1836
  %v2070 = vpop.f32.mrf.mxu0
  %v2071 = vadd.f32 %v78, %v2070
  %v2072 = vpop.f32.mrf.mxu0
  %2073 = vmatprep.mubr.f32.mxu0 0.0
  %2074 = vmatmul.mubr.f32.gmra.mxu0 %v1839
  %v2075 = vpop.f32.mrf.mxu0
  %v2076 = vadd.f32 %v78, %v2075
  %v2077 = vpop.f32.mrf.mxu0
  %2078 = vmatprep.mubr.f32.mxu0 0.0
  %2079 = vmatmul.mubr.f32.gmra.mxu0 %v1842
  %v2080 = vpop.f32.mrf.mxu0
  %v2081 = vadd.f32 %v78, %v2080
  %v2082 = vpop.f32.mrf.mxu0
  %2083 = vmatprep.mubr.f32.mxu0 0.0
  %2084 = vmatmul.mubr.f32.gmra.mxu0 %v1845
  %v2085 = vpop.f32.mrf.mxu0
  %v2086 = vadd.f32 %v78, %v2085
  %v2087 = vpop.f32.mrf.mxu0
  %2088 = vmatprep.mubr.f32.mxu0 0.0
  %2089 = vmatmul.mubr.f32.gmra.mxu0 %v1848
  %v2090 = vpop.f32.mrf.mxu0
  %v2091 = vadd.f32 %v78, %v2090
  %v2092 = vpop.f32.mrf.mxu0
  %2093 = vmatprep.mubr.f32.mxu0 0.0
  %2094 = vmatmul.mubr.f32.gmra.mxu0 %v1851
  %v2095 = vpop.f32.mrf.mxu0
  %v2096 = vadd.f32 %v78, %v2095
  %v2097 = vpop.f32.mrf.mxu0
  %2098 = vmatprep.mubr.f32.mxu0 0.0
  %2099 = vmatmul.mubr.f32.gmra.mxu0 %v1854
  %v2100 = vpop.f32.mrf.mxu0
  %v2101 = vadd.f32 %v78, %v2100
  %v2102 = vpop.f32.mrf.mxu0
  %2103 = vmatprep.mubr.f32.mxu0 0.0
  %2104 = vmatmul.mubr.f32.gmra.mxu0 %v1857
  %v2105 = vpop.f32.mrf.mxu0
  %v2106 = vadd.f32 %v78, %v2105
  %v2107 = vpop.f32.mrf.mxu0
  %2108 = vmatprep.mubr.f32.mxu0 0.0
  %2109 = vmatmul.mubr.f32.gmra.mxu0 %v1860
  %v2110 = vpop.f32.mrf.mxu0
  %v2111 = vadd.f32 %v78, %v2110
  %v2112 = vpop.f32.mrf.mxu0
  %2113 = vmatprep.mubr.f32.mxu0 0.0
  %2114 = vmatmul.mubr.f32.gmra.mxu0 %v1863
  %v2115 = vpop.f32.mrf.mxu0
  %v2116 = vadd.f32 %v78, %v2115
  %v2117 = vpop.f32.mrf.mxu0
  %2118 = vmatprep.mubr.f32.mxu0 0.0
  %2119 = vmatmul.mubr.f32.gmra.mxu0 %v1866
  %v2120 = vpop.f32.mrf.mxu0
  %v2121 = vadd.f32 %v78, %v2120
  %v2122 = vpop.f32.mrf.mxu0
  %2123 = vmatprep.mubr.f32.mxu0 0.0
  %2124 = vmatmul.mubr.f32.gmra.mxu0 %v1869
  %v2125 = vpop.f32.mrf.mxu0
  %v2126 = vadd.f32 %v78, %v2125
  %v2127 = vpop.f32.mrf.mxu0
  %2128 = vmatprep.mubr.f32.mxu0 0.0
  %2129 = vmatmul.mubr.f32.gmra.mxu0 %v1872
  %v2130 = vpop.f32.mrf.mxu0
  %v2131 = vadd.f32 %v78, %v2130
  %v2132 = vpop.f32.mrf.mxu0
  %2133 = vmatprep.mubr.f32.mxu0 0.0
  %2134 = vmatmul.mubr.f32.gmra.mxu0 %v1875
  %v2135 = vpop.f32.mrf.mxu0
  %v2136 = vadd.f32 %v78, %v2135
  %v2137 = vpop.f32.mrf.mxu0
  %2138 = vmatprep.mubr.f32.mxu0 0.0
  %2139 = vmatmul.mubr.f32.gmra.mxu0 %v1878
  %v2140 = vpop.f32.mrf.mxu0
  %v2141 = vadd.f32 %v78, %v2140
  %v2142 = vpop.f32.mrf.mxu0
  %2143 = vmatprep.mubr.f32.mxu0 0.0
  %2144 = vmatmul.mubr.f32.gmra.mxu0 %v1881
  %v2145 = vpop.f32.mrf.mxu0
  %v2146 = vadd.f32 %v78, %v2145
  %v2147 = vpop.f32.mrf.mxu0
  %2148 = vmatprep.mubr.f32.mxu0 0.0
  %2149 = vmatmul.mubr.f32.gmra.mxu0 %v1884
  %v2150 = vpop.f32.mrf.mxu0
  %v2151 = vadd.f32 %v78, %v2150
  %v2152 = vpop.f32.mrf.mxu0
  %2153 = vmatprep.mubr.f32.mxu0 0.0
  %2154 = vmatmul.mubr.f32.gmra.mxu0 %v1887
  %v2155 = vpop.f32.mrf.mxu0
  %v2156 = vadd.f32 %v78, %v2155
  %v2157 = vpop.f32.mrf.mxu0
  %2158 = vmatprep.mubr.f32.mxu0 0.0
  %2159 = vmatmul.mubr.f32.gmra.mxu0 %v1890
  %v2160 = vpop.f32.mrf.mxu0
  %v2161 = vadd.f32 %v78, %v2160
  %v2162 = vpop.f32.mrf.mxu0
  %2163 = vmatprep.mubr.f32.mxu0 0.0
  %2164 = vmatmul.mubr.f32.gmra.mxu0 %v1893
  %v2165 = vpop.f32.mrf.mxu0
  %v2166 = vadd.f32 %v78, %v2165
  %v2167 = vpop.f32.mrf.mxu0
  %2168 = vmatprep.mubr.f32.mxu0 0.0
  %2169 = vmatmul.mubr.f32.gmra.mxu0 %v1896
  %v2170 = vpop.f32.mrf.mxu0
  %v2171 = vadd.f32 %v78, %v2170
  %v2172 = vpop.f32.mrf.mxu0
  %2173 = vmatprep.mubr.f32.mxu0 0.0
  %2174 = vmatmul.mubr.f32.gmra.mxu0 %v1899
  %v2175 = vpop.f32.mrf.mxu0
  %v2176 = vadd.f32 %v78, %v2175
  %v2177 = vpop.f32.mrf.mxu0
  %2178 = vmatprep.mubr.f32.mxu0 0.0
  %2179 = vmatmul.mubr.f32.gmra.mxu0 %v1902
  %v2180 = vpop.f32.mrf.mxu0
  %v2181 = vadd.f32 %v78, %v2180
  %v2182 = vpop.f32.mrf.mxu0
  %2183 = vmatprep.mubr.f32.mxu0 0.0
  %2184 = vmatmul.mubr.f32.gmra.mxu0 %v1905
  %v2185 = vpop.f32.mrf.mxu0
  %v2186 = vadd.f32 %v78, %v2185
  %v2187 = vpop.f32.mrf.mxu0
  %2188 = vmatprep.mubr.f32.mxu0 0.0
  %2189 = vmatmul.mubr.f32.gmra.mxu0 %v1908
  %v2190 = vpop.f32.mrf.mxu0
  %v2191 = vadd.f32 %v78, %v2190
  %v2192 = vpop.f32.mrf.mxu0
  %2193 = vmatprep.mubr.f32.mxu0 0.0
  %2194 = vmatmul.mubr.f32.gmra.mxu0 %v1911
  %v2195 = vpop.f32.mrf.mxu0
  %v2196 = vadd.f32 %v78, %v2195
  %v2197 = vpop.f32.mrf.mxu0
  %2198 = vmatprep.mubr.f32.mxu0 0.0
  %2199 = vmatmul.mubr.f32.gmra.mxu0 %v1914
  %v2200 = vpop.f32.mrf.mxu0
  %v2201 = vadd.f32 %v78, %v2200
  %v2202 = vpop.f32.mrf.mxu0
  %2203 = vmatprep.mubr.f32.mxu0 0.0
  %2204 = vmatmul.mubr.f32.gmra.mxu0 %v1917
  %v2205 = vpop.f32.mrf.mxu0
  %v2206 = vadd.f32 %v78, %v2205
  %v2207 = vpop.f32.mrf.mxu0
  %2208 = vmatprep.mubr.f32.mxu0 0.0
  %2209 = vmatmul.mubr.f32.gmra.mxu0 %v1920
  %v2210 = vpop.f32.mrf.mxu0
  %v2211 = vadd.f32 %v78, %v2210
  %v2212 = vpop.f32.mrf.mxu0
  %2213 = vmatprep.mubr.f32.mxu0 0.0
  %2214 = vmatmul.mubr.f32.gmra.mxu0 %v1923
  %v2215 = vpop.f32.mrf.mxu0
  %v2216 = vadd.f32 %v78, %v2215
  %v2217 = vpop.f32.mrf.mxu0
  %2218 = vmatprep.mubr.f32.mxu0 0.0
  %2219 = vmatmul.mubr.f32.gmra.mxu0 %v1926
  %v2220 = vpop.f32.mrf.mxu0
  %v2221 = vadd.f32 %v78, %v2220
  %v2222 = vpop.f32.mrf.mxu0
  %2223 = vmatprep.mubr.f32.mxu0 0.0
  %2224 = vmatmul.mubr.f32.gmra.mxu0 %v1929
  %v2225 = vpop.f32.mrf.mxu0
  %v2226 = vadd.f32 %v78, %v2225
  %v2227 = vpop.f32.mrf.mxu0
  %2228 = vmatprep.mubr.f32.mxu0 0.0
  %2229 = vmatmul.mubr.f32.gmra.mxu0 %v1932
  %v2230 = vpop.f32.mrf.mxu0
  %v2231 = vadd.f32 %v78, %v2230
  %v2232 = vpop.f32.mrf.mxu0
  %2233 = vmatprep.mubr.f32.mxu0 0.0
  %2234 = vmatmul.mubr.f32.gmra.mxu0 %v1935
  %v2235 = vpop.f32.mrf.mxu0
  %v2236 = vadd.f32 %v78, %v2235
  %v2237 = vpop.f32.mrf.mxu0
  %2238 = vmatprep.mubr.f32.mxu0 0.0
  %2239 = vmatmul.mubr.f32.gmra.mxu0 %v1938
  %v2240 = vpop.f32.mrf.mxu0
  %v2241 = vadd.f32 %v78, %v2240
  %v2242 = vpop.f32.mrf.mxu0
  %2243 = vmatprep.mubr.f32.mxu0 0.0
  %2244 = vmatmul.mubr.f32.gmra.mxu0 %v1941
  %v2245 = vpop.f32.mrf.mxu0
  %v2246 = vadd.f32 %v78, %v2245
  %v2247 = vpop.f32.mrf.mxu0
  %2248 = vmatprep.mubr.f32.mxu0 0.0
  %2249 = vmatmul.mubr.f32.gmra.mxu0 %v1944
  %v2250 = vpop.f32.mrf.mxu0
  %v2251 = vadd.f32 %v78, %v2250
  %v2252 = vpop.f32.mrf.mxu0
  %2253 = vmatprep.mubr.f32.mxu0 0.0
  %2254 = vmatmul.mubr.f32.gmra.mxu0 %v1947
  %v2255 = vpop.f32.mrf.mxu0
  %v2256 = vadd.f32 %v78, %v2255
  %v2257 = vpop.f32.mrf.mxu0
  %2258 = vdwg.mxu0
  %v2259 = vmax.f32 %v2016, 0.0
  %v2260 = vmax.f32 %v2021, 0.0
  %v2261 = vmax.f32 %v2026, 0.0
  %v2262 = vmax.f32 %v2031, 0.0
  %v2263 = vmax.f32 %v2036, 0.0
  %v2264 = vmax.f32 %v2041, 0.0
  %v2265 = vmax.f32 %v2046, 0.0
  %v2266 = vmax.f32 %v2051, 0.0
  %v2267 = vmax.f32 %v2056, 0.0
  %v2268 = vmax.f32 %v2061, 0.0
  %v2269 = vmax.f32 %v2066, 0.0
  %v2270 = vmax.f32 %v2071, 0.0
  %v2271 = vmax.f32 %v2076, 0.0
  %v2272 = vmax.f32 %v2081, 0.0
  %v2273 = vmax.f32 %v2086, 0.0
  %v2274 = vmax.f32 %v2091, 0.0
  %v2275 = vmax.f32 %v2096, 0.0
  %v2276 = vmax.f32 %v2101, 0.0
  %v2277 = vmax.f32 %v2106, 0.0
  %v2278 = vmax.f32 %v2111, 0.0
  %v2279 = vmax.f32 %v2116, 0.0
  %v2280 = vmax.f32 %v2121, 0.0
  %v2281 = vmax.f32 %v2126, 0.0
  %v2282 = vmax.f32 %v2131, 0.0
  %v2283 = vmax.f32 %v2136, 0.0
  %v2284 = vmax.f32 %v2141, 0.0
  %v2285 = vmax.f32 %v2146, 0.0
  %v2286 = vmax.f32 %v2151, 0.0
  %v2287 = vmax.f32 %v2156, 0.0
  %v2288 = vmax.f32 %v2161, 0.0
  %v2289 = vmax.f32 %v2166, 0.0
  %v2290 = vmax.f32 %v2171, 0.0
  %v2291 = vmax.f32 %v2176, 0.0
  %v2292 = vmax.f32 %v2181, 0.0
  %v2293 = vmax.f32 %v2186, 0.0
  %v2294 = vmax.f32 %v2191, 0.0
  %v2295 = vmax.f32 %v2196, 0.0
  %v2296 = vmax.f32 %v2201, 0.0
  %v2297 = vmax.f32 %v2206, 0.0
  %v2298 = vmax.f32 %v2211, 0.0
  %v2299 = vmax.f32 %v2216, 0.0
  %v2300 = vmax.f32 %v2221, 0.0
  %v2301 = vmax.f32 %v2226, 0.0
  %v2302 = vmax.f32 %v2231, 0.0
  %v2303 = vmax.f32 %v2236, 0.0
  %v2304 = vmax.f32 %v2241, 0.0
  %v2305 = vmax.f32 %v2246, 0.0
  %v2306 = vmax.f32 %v2251, 0.0
  %v2307 = vmax.f32 %v2256, 0.0
  %v2308 = vmax.f32 %v1703, %v2259
  %v2309 = vmax.f32 %v1704, %v2260
  %v2310 = vmax.f32 %v1705, %v2261
  %v2311 = vmax.f32 %v1706, %v2262
  %v2312 = vmax.f32 %v1707, %v2263
  %v2313 = vmax.f32 %v1708, %v2264
  %v2314 = vmax.f32 %v1709, %v2265
  %v2315 = vmax.f32 %v1710, %v2266
  %v2316 = vmax.f32 %v1711, %v2267
  %v2317 = vmax.f32 %v1712, %v2268
  %v2318 = vmax.f32 %v1713, %v2269
  %v2319 = vmax.f32 %v1714, %v2270
  %v2320 = vmax.f32 %v1715, %v2271
  %v2321 = vmax.f32 %v1716, %v2272
  %v2322 = vmax.f32 %v1717, %v2273
  %v2323 = vmax.f32 %v1718, %v2274
  %v2324 = vmax.f32 %v1719, %v2275
  %v2325 = vmax.f32 %v1720, %v2276
  %v2326 = vmax.f32 %v1721, %v2277
  %v2327 = vmax.f32 %v1722, %v2278
  %v2328 = vmax.f32 %v1723, %v2279
  %v2329 = vmax.f32 %v1724, %v2280
  %v2330 = vmax.f32 %v1725, %v2281
  %v2331 = vmax.f32 %v1726, %v2282
  %v2332 = vmax.f32 %v1727, %v2283
  %v2333 = vmax.f32 %v1728, %v2284
  %v2334 = vmax.f32 %v1729, %v2285
  %v2335 = vmax.f32 %v1730, %v2286
  %v2336 = vmax.f32 %v1731, %v2287
  %v2337 = vmax.f32 %v1732, %v2288
  %v2338 = vmax.f32 %v1733, %v2289
  %v2339 = vmax.f32 %v1734, %v2290
  %v2340 = vmax.f32 %v1735, %v2291
  %v2341 = vmax.f32 %v1736, %v2292
  %v2342 = vmax.f32 %v1737, %v2293
  %v2343 = vmax.f32 %v1738, %v2294
  %v2344 = vmax.f32 %v1739, %v2295
  %v2345 = vmax.f32 %v1740, %v2296
  %v2346 = vmax.f32 %v1741, %v2297
  %v2347 = vmax.f32 %v1742, %v2298
  %v2348 = vmax.f32 %v1743, %v2299
  %v2349 = vmax.f32 %v1744, %v2300
  %v2350 = vmax.f32 %v1745, %v2301
  %v2351 = vmax.f32 %v1746, %v2302
  %v2352 = vmax.f32 %v1747, %v2303
  %v2353 = vmax.f32 %v1748, %v2304
  %v2354 = vmax.f32 %v1749, %v2305
  %v2355 = vmax.f32 %v1750, %v2306
  %v2356 = vmax.f32 %v1751, %v2307
  %v2357 = vmax.f32 %v1147, %v2308
  %v2358 = vmax.f32 %v1148, %v2309
  %v2359 = vmax.f32 %v1149, %v2310
  %v2360 = vmax.f32 %v1150, %v2311
  %v2361 = vmax.f32 %v1151, %v2312
  %v2362 = vmax.f32 %v1152, %v2313
  %v2363 = vmax.f32 %v1153, %v2314
  %v2364 = vmax.f32 %v1154, %v2315
  %v2365 = vmax.f32 %v1155, %v2316
  %v2366 = vmax.f32 %v1156, %v2317
  %v2367 = vmax.f32 %v1157, %v2318
  %v2368 = vmax.f32 %v1158, %v2319
  %v2369 = vmax.f32 %v1159, %v2320
  %v2370 = vmax.f32 %v1160, %v2321
  %v2371 = vmax.f32 %v1161, %v2322
  %v2372 = vmax.f32 %v1162, %v2323
  %v2373 = vmax.f32 %v1163, %v2324
  %v2374 = vmax.f32 %v1164, %v2325
  %v2375 = vmax.f32 %v1165, %v2326
  %v2376 = vmax.f32 %v1166, %v2327
  %v2377 = vmax.f32 %v1167, %v2328
  %v2378 = vmax.f32 %v1168, %v2329
  %v2379 = vmax.f32 %v1169, %v2330
  %v2380 = vmax.f32 %v1170, %v2331
  %v2381 = vmax.f32 %v1171, %v2332
  %v2382 = vmax.f32 %v1172, %v2333
  %v2383 = vmax.f32 %v1173, %v2334
  %v2384 = vmax.f32 %v1174, %v2335
  %v2385 = vmax.f32 %v1175, %v2336
  %v2386 = vmax.f32 %v1176, %v2337
  %v2387 = vmax.f32 %v1177, %v2338
  %v2388 = vmax.f32 %v1178, %v2339
  %v2389 = vmax.f32 %v1179, %v2340
  %v2390 = vmax.f32 %v1180, %v2341
  %v2391 = vmax.f32 %v1181, %v2342
  %v2392 = vmax.f32 %v1182, %v2343
  %v2393 = vmax.f32 %v1183, %v2344
  %v2394 = vmax.f32 %v1184, %v2345
  %v2395 = vmax.f32 %v1185, %v2346
  %v2396 = vmax.f32 %v1186, %v2347
  %v2397 = vmax.f32 %v1187, %v2348
  %v2398 = vmax.f32 %v1188, %v2349
  %v2399 = vmax.f32 %v1189, %v2350
  %v2400 = vmax.f32 %v1190, %v2351
  %v2401 = vmax.f32 %v1191, %v2352
  %v2402 = vmax.f32 %v1192, %v2353
  %v2403 = vmax.f32 %v1193, %v2354
  %v2404 = vmax.f32 %v1194, %v2355
  %v2405 = vmax.f32 %v1195, %v2356
  %vm2406 = vcmask 48128
  %2407 = vst.msk [vmem:[%s3] sm:$0xff] %vm2406, %v2357
  %2408 = vst.msk [vmem:[%s3 + $0x8] sm:$0xff] %vm2406, %v2358
  %2409 = vst.msk [vmem:[%s3 + $0x10] sm:$0xff] %vm2406, %v2359
  %2410 = vst.msk [vmem:[%s3 + $0x18] sm:$0xff] %vm2406, %v2360
  %2411 = vst.msk [vmem:[%s3 + $0x20] sm:$0xff] %vm2406, %v2361
  %2412 = vst.msk [vmem:[%s3 + $0x28] sm:$0xff] %vm2406, %v2362
  %2413 = vst.msk [vmem:[%s3 + $0x30] sm:$0xff] %vm2406, %v2363
  %2414 = vst.msk [vmem:[%s3 + $0x38] sm:$0xff] %vm2406, %v2364
  %2415 = vst.msk [vmem:[%s3 + $0x40] sm:$0xff] %vm2406, %v2365
  %2416 = vst.msk [vmem:[%s3 + $0x48] sm:$0xff] %vm2406, %v2366
  %2417 = vst.msk [vmem:[%s3 + $0x50] sm:$0xff] %vm2406, %v2367
  %2418 = vst.msk [vmem:[%s3 + $0x58] sm:$0xff] %vm2406, %v2368
  %2419 = vst.msk [vmem:[%s3 + $0x60] sm:$0xff] %vm2406, %v2369
  %2420 = vst.msk [vmem:[%s3 + $0x68] sm:$0xff] %vm2406, %v2370
  %2421 = vst.msk [vmem:[%s3 + $0x70] sm:$0xff] %vm2406, %v2371
  %2422 = vst.msk [vmem:[%s3 + $0x78] sm:$0xff] %vm2406, %v2372
  %2423 = vst.msk [vmem:[%s3 + $0x80] sm:$0xff] %vm2406, %v2373
  %2424 = vst.msk [vmem:[%s3 + $0x88] sm:$0xff] %vm2406, %v2374
  %2425 = vst.msk [vmem:[%s3 + $0x90] sm:$0xff] %vm2406, %v2375
  %2426 = vst.msk [vmem:[%s3 + $0x98] sm:$0xff] %vm2406, %v2376
  %2427 = vst.msk [vmem:[%s3 + $0xa0] sm:$0xff] %vm2406, %v2377
  %2428 = vst.msk [vmem:[%s3 + $0xa8] sm:$0xff] %vm2406, %v2378
  %2429 = vst.msk [vmem:[%s3 + $0xb0] sm:$0xff] %vm2406, %v2379
  %2430 = vst.msk [vmem:[%s3 + $0xb8] sm:$0xff] %vm2406, %v2380
  %2431 = vst.msk [vmem:[%s3 + $0xc0] sm:$0xff] %vm2406, %v2381
  %2432 = vst.msk [vmem:[%s3 + $0xc8] sm:$0xff] %vm2406, %v2382
  %2433 = vst.msk [vmem:[%s3 + $0xd0] sm:$0xff] %vm2406, %v2383
  %2434 = vst.msk [vmem:[%s3 + $0xd8] sm:$0xff] %vm2406, %v2384
  %2435 = vst.msk [vmem:[%s3 + $0xe0] sm:$0xff] %vm2406, %v2385
  %2436 = vst.msk [vmem:[%s3 + $0xe8] sm:$0xff] %vm2406, %v2386
  %2437 = vst.msk [vmem:[%s3 + $0xf0] sm:$0xff] %vm2406, %v2387
  %2438 = vst.msk [vmem:[%s3 + $0xf8] sm:$0xff] %vm2406, %v2388
  %2439 = vst.msk [vmem:[%s3 + $0x100] sm:$0xff] %vm2406, %v2389
  %2440 = vst.msk [vmem:[%s3 + $0x108] sm:$0xff] %vm2406, %v2390
  %2441 = vst.msk [vmem:[%s3 + $0x110] sm:$0xff] %vm2406, %v2391
  %2442 = vst.msk [vmem:[%s3 + $0x118] sm:$0xff] %vm2406, %v2392
  %2443 = vst.msk [vmem:[%s3 + $0x120] sm:$0xff] %vm2406, %v2393
  %2444 = vst.msk [vmem:[%s3 + $0x128] sm:$0xff] %vm2406, %v2394
  %2445 = vst.msk [vmem:[%s3 + $0x130] sm:$0xff] %vm2406, %v2395
  %2446 = vst.msk [vmem:[%s3 + $0x138] sm:$0xff] %vm2406, %v2396
  %2447 = vst.msk [vmem:[%s3 + $0x140] sm:$0xff] %vm2406, %v2397
  %2448 = vst.msk [vmem:[%s3 + $0x148] sm:$0xff] %vm2406, %v2398
  %2449 = vst.msk [vmem:[%s3 + $0x150] sm:$0xff] %vm2406, %v2399
  %2450 = vst.msk [vmem:[%s3 + $0x158] sm:$0xff] %vm2406, %v2400
  %2451 = vst.msk [vmem:[%s3 + $0x160] sm:$0xff] %vm2406, %v2401
  %2452 = vst.msk [vmem:[%s3 + $0x168] sm:$0xff] %vm2406, %v2402
  %2453 = vst.msk [vmem:[%s3 + $0x170] sm:$0xff] %vm2406, %v2403
  %2454 = vst.msk [vmem:[%s3 + $0x178] sm:$0xff] %vm2406, %v2404
  %2455 = vst.msk [vmem:[%s3 + $0x180] sm:$0xff] %vm2406, %v2405
  // Predicated region
  $region14: #{net_forward.3} parent=0 // pred_check
    _
  $region15: #{net_forward.3} parent=0 // pred_check_branch
    %2457 = sbr.rel (0) target = $region17
  $region16: #{net_forward.3} parent=0 // pred_region
    _
  $region17: #{net_forward.3} parent=0 // pred_fallthru
    _
  // Predicated region
  $region18: #{net_forward.3} parent=0 // pred_check
    _
  $region19: #{net_forward.3} parent=0 // pred_check_branch
    %2459 = sbr.rel (0) target = $region21
  $region20: #{net_forward.3} parent=0 // pred_region
    _
  $region21: #{net_forward.3} parent=0 // pred_fallthru
    _

// kernel: net_forward.4
$region0: #{net_forward.4}
  #allocation0 [shape = 'u32[]', space=smem, size = 0x4, offset = 0x4, fixed_abs, tag = 'smem constant byte address 0x4 - core index']
  #allocation1 [shape = 'u32[144,128]{1,0:T(1,128)}', space=vmem, size = 0x12000, scoped, tag = 'internal scratch']
  %s0 = inlined_call_operand.vmem [shape: f32[4,50,150], index: 0, kind: input, shape index: {}]
  %s1 = inlined_call_operand.vmem [shape: f32[150,16], index: 1, kind: input, shape index: {}]
  %s2 = inlined_call_operand.vmem [shape: f32[1,16], index: 2, kind: input, shape index: {}]
  %s3 = inlined_call_operand.vmem [shape: f32[50,16], index: 3, kind: output, shape index: {}]
  %s4 = sld [smem:[#allocation0]]
  $region22: #{net_forward.4} parent=0
    _
  %s6 = ssub.s32 1, %s4
  %s7 = scalar_select 0, %s6, %s4
  // Predicated region
  $region2: #{net_forward.4} parent=0 // pred_check
    _
  $region3: #{net_forward.4} parent=0 // pred_check_branch
    %9 = sbr.rel (0) target = $region5
  $region4: #{net_forward.4} parent=0 // pred_region
    _
  $region5: #{net_forward.4} parent=0 // pred_fallthru
    _
  // Predicated region
  $region6: #{net_forward.4} parent=0 // pred_check
    _
  $region7: #{net_forward.4} parent=0 // pred_check_branch
    %11 = sbr.rel (0) target = $region9
  $region8: #{net_forward.4} parent=0 // pred_region
    _
  $region9: #{net_forward.4} parent=0 // pred_fallthru
    _
  // Predicated region
  $region10: #{net_forward.4} parent=0 // pred_check
    _
  $region11: #{net_forward.4} parent=0 // pred_check_branch
    %13 = sbr.rel (0) target = $region13
  $region12: #{net_forward.4} parent=0 // pred_region
    _
  $region13: #{net_forward.4} parent=0 // pred_fallthru
    _
  %v14 = vld [vmem:[%s1] sm:$0xff]
  %v15 = vld [vmem:[%s1 + $0x8] sm:$0xff]
  %v16 = vld [vmem:[%s1 + $0x10] sm:$0xff]
  %v17 = vld [vmem:[%s1 + $0x18] sm:$0xff]
  %v18 = vld [vmem:[%s1 + $0x20] sm:$0xff]
  %v19 = vld [vmem:[%s1 + $0x28] sm:$0xff]
  %v20 = vld [vmem:[%s1 + $0x30] sm:$0xff]
  %v21 = vld [vmem:[%s1 + $0x38] sm:$0xff]
  %v22 = vld [vmem:[%s1 + $0x40] sm:$0xff]
  %v23 = vld [vmem:[%s1 + $0x48] sm:$0xff]
  %v24 = vld [vmem:[%s1 + $0x50] sm:$0xff]
  %v25 = vld [vmem:[%s1 + $0x58] sm:$0xff]
  %v26 = vld [vmem:[%s1 + $0x60] sm:$0xff]
  %v27 = vld [vmem:[%s1 + $0x68] sm:$0xff]
  %v28 = vld [vmem:[%s1 + $0x70] sm:$0xff]
  %v29 = vld [vmem:[%s1 + $0x78] sm:$0xff]
  %v30 = vld [vmem:[%s1 + $0x80] sm:$0xff]
  %v31 = vld [vmem:[%s1 + $0x88] sm:$0xff]
  %v32 = vld [vmem:[%s1 + $0x90] sm:$0x3f]
  %v33 = vld [vmem:[%s2] sm:$0x1]
  %v34 = vld [vmem:[%s0] sm:$0xff]
  %v35 = vld [vmem:[%s0 + $0x8] sm:$0xff]
  %v36 = vld [vmem:[%s0 + $0x10] sm:$0xff]
  %v37 = vld [vmem:[%s0 + $0x18] sm:$0xff]
  %v38 = vld [vmem:[%s0 + $0x20] sm:$0xff]
  %v39 = vld [vmem:[%s0 + $0x28] sm:$0xff]
  %v40 = vld [vmem:[%s0 + $0x30] sm:$0xff]
  %v41 = vld [vmem:[%s0 + $0x38] sm:$0xff]
  %v42 = vld [vmem:[%s0 + $0x40] sm:$0xff]
  %v43 = vld [vmem:[%s0 + $0x48] sm:$0xff]
  %v44 = vld [vmem:[%s0 + $0x50] sm:$0xff]
  %v45 = vld [vmem:[%s0 + $0x58] sm:$0xff]
  %v46 = vld [vmem:[%s0 + $0x60] sm:$0x3]
  %v47 = vld [vmem:[%s0 + $0x68] sm:$0x3]
  %v49 = vlaneseq
  %v50 = vshrl.u32 %v49, 7
  %v51 = vsub.s32 0, %v50
  %v52 = vrot.slane %v33, %v51
  %vm54 = vcmask 179200
  %v56 = vsel %vm54, %v35, 0
  %v59 = vsel %vm54, %v37, 0
  %v62 = vsel %vm54, %v39, 0
  %v65 = vsel %vm54, %v41, 0
  %v68 = vsel %vm54, %v43, 0
  %v71 = vsel %vm54, %v45, 0
  %v74 = vsel %vm54, %v47, 0
  %vm76 = vcmask 1045504
  %v78 = vsel %vm76, %v32, 0
  %80 = vmatprep.subr.mxu0 0.0
  %81 = vmatpush1.msra.mxu0 %v29
  %82 = vmatprep.subr.mxu0 0.0
  %83 = vmatpush1.msra.mxu0 %v28
  %84 = vmatprep.subr.mxu0 0.0
  %85 = vmatpush1.msra.mxu0 %v27
  %86 = vmatprep.subr.mxu0 0.0
  %87 = vmatpush1.msra.mxu0 %v26
  %88 = vmatprep.subr.mxu0 0.0
  %89 = vmatpush1.msra.mxu0 %v25
  %90 = vmatprep.subr.mxu0 0.0
  %91 = vmatpush1.msra.mxu0 %v24
  %92 = vmatprep.subr.mxu0 0.0
  %93 = vmatpush1.msra.mxu0 %v23
  %94 = vmatprep.subr.mxu0 0.0
  %95 = vmatpush1.msra.mxu0 %v22
  %96 = vmatprep.subr.mxu0 0.0
  %97 = vmatpush1.msra.mxu0 %v21
  %98 = vmatprep.subr.mxu0 0.0
  %99 = vmatpush1.msra.mxu0 %v20
  %100 = vmatprep.subr.mxu0 0.0
  %101 = vmatpush1.msra.mxu0 %v19
  %102 = vmatprep.subr.mxu0 0.0
  %103 = vmatpush1.msra.mxu0 %v18
  %104 = vmatprep.subr.mxu0 0.0
  %105 = vmatpush1.msra.mxu0 %v17
  %106 = vmatprep.subr.mxu0 0.0
  %107 = vmatpush1.msra.mxu0 %v16
  %108 = vmatprep.subr.mxu0 0.0
  %109 = vmatpush1.msra.mxu0 %v15
  %110 = vmatprep.subr.mxu0 0.0
  %111 = vmatpush1.msra.mxu0 %v14
  %112 = vmatprep.subr.mxu0 0.0
  %113 = vmatpush2.msra.mxu0 0.0
  %114 = vmatprep.subr.mxu0 0.0
  %115 = vmatpush2.msra.mxu0 0.0
  %116 = vmatprep.subr.mxu0 0.0
  %117 = vmatpush2.msra.mxu0 0.0
  %118 = vmatprep.subr.mxu0 0.0
  %119 = vmatpush2.msra.mxu0 0.0
  %120 = vmatprep.subr.mxu0 0.0
  %121 = vmatpush2.msra.mxu0 0.0
  %122 = vmatprep.subr.mxu0 0.0
  %123 = vmatpush2.msra.mxu0 0.0
  %124 = vmatprep.subr.mxu0 0.0
  %125 = vmatpush2.msra.mxu0 0.0
  %126 = vmatprep.subr.mxu0 0.0
  %127 = vmatpush2.msra.mxu0 0.0
  %128 = vmatprep.subr.mxu0 0.0
  %129 = vmatpush2.msra.mxu0 0.0
  %130 = vmatprep.subr.mxu0 0.0
  %131 = vmatpush2.msra.mxu0 0.0
  %132 = vmatprep.subr.mxu0 0.0
  %133 = vmatpush2.msra.mxu0 0.0
  %134 = vmatprep.subr.mxu0 0.0
  %135 = vmatpush2.msra.mxu0 0.0
  %136 = vmatprep.subr.mxu0 0.0
  %137 = vmatpush2.msra.mxu0 0.0
  %138 = vmatprep.subr.mxu0 0.0
  %139 = vmatpush2.msra.mxu0 %v78
  %140 = vmatprep.subr.mxu0 0.0
  %141 = vmatpush2.msra.mxu0 %v31
  %142 = vmatprep.subr.mxu0 0.0
  %143 = vmatpush2.msra.mxu0 %v30
  %144 = vmatprep.mubr.f32.mxu0 %v56
  %145 = vmatmul.mubr.f32.gmra.mxu0 %v34
  %v146 = vpop.f32.mrf.mxu0
  %v147 = vadd.f32 %v52, %v146
  %v148 = vpop.f32.mrf.mxu0
  %149 = vmatprep.mubr.f32.mxu0 %v59
  %150 = vmatmul.mubr.f32.gmra.mxu0 %v36
  %v151 = vpop.f32.mrf.mxu0
  %v152 = vadd.f32 %v52, %v151
  %v153 = vpop.f32.mrf.mxu0
  %154 = vmatprep.mubr.f32.mxu0 %v62
  %155 = vmatmul.mubr.f32.gmra.mxu0 %v38
  %v156 = vpop.f32.mrf.mxu0
  %v157 = vadd.f32 %v52, %v156
  %v158 = vpop.f32.mrf.mxu0
  %159 = vmatprep.mubr.f32.mxu0 %v65
  %160 = vmatmul.mubr.f32.gmra.mxu0 %v40
  %v161 = vpop.f32.mrf.mxu0
  %v162 = vadd.f32 %v52, %v161
  %v163 = vpop.f32.mrf.mxu0
  %164 = vmatprep.mubr.f32.mxu0 %v68
  %165 = vmatmul.mubr.f32.gmra.mxu0 %v42
  %v166 = vpop.f32.mrf.mxu0
  %v167 = vadd.f32 %v52, %v166
  %v168 = vpop.f32.mrf.mxu0
  %169 = vmatprep.mubr.f32.mxu0 %v71
  %170 = vmatmul.mubr.f32.gmra.mxu0 %v44
  %v171 = vpop.f32.mrf.mxu0
  %v172 = vadd.f32 %v52, %v171
  %v173 = vpop.f32.mrf.mxu0
  %174 = vmatprep.mubr.f32.mxu0 %v74
  %175 = vmatmul.mubr.f32.gmra.mxu0 %v46
  %v176 = vpop.f32.mrf.mxu0
  %v177 = vadd.f32 %v52, %v176
  %v178 = vpop.f32.mrf.mxu0
  %179 = vdwg.mxu0
  %v180 = vmax.f32 %v147, 0.0
  %v181 = vmax.f32 %v152, 0.0
  %v182 = vmax.f32 %v157, 0.0
  %v183 = vmax.f32 %v162, 0.0
  %v184 = vmax.f32 %v167, 0.0
  %v185 = vmax.f32 %v172, 0.0
  %v186 = vmax.f32 %v177, 0.0
  %s187 = scalar_lea.vmem %s0, 112
  %v188 = vld [vmem:[%s187] sm:$0xff]
  %v189 = vld [vmem:[%s187 + $0x8] sm:$0xff]
  %v190 = vld [vmem:[%s187 + $0x10] sm:$0xff]
  %v191 = vld [vmem:[%s187 + $0x18] sm:$0xff]
  %v192 = vld [vmem:[%s187 + $0x20] sm:$0xff]
  %v193 = vld [vmem:[%s187 + $0x28] sm:$0xff]
  %v194 = vld [vmem:[%s187 + $0x30] sm:$0xff]
  %v195 = vld [vmem:[%s187 + $0x38] sm:$0xff]
  %v196 = vld [vmem:[%s187 + $0x40] sm:$0xff]
  %v197 = vld [vmem:[%s187 + $0x48] sm:$0xff]
  %v198 = vld [vmem:[%s187 + $0x50] sm:$0xff]
  %v199 = vld [vmem:[%s187 + $0x58] sm:$0xff]
  %v200 = vld [vmem:[%s187 + $0x60] sm:$0x3]
  %v201 = vld [vmem:[%s187 + $0x68] sm:$0x3]
  %v203 = vsel %vm54, %v189, 0
  %v206 = vsel %vm54, %v191, 0
  %v209 = vsel %vm54, %v193, 0
  %v212 = vsel %vm54, %v195, 0
  %v215 = vsel %vm54, %v197, 0
  %v218 = vsel %vm54, %v199, 0
  %v221 = vsel %vm54, %v201, 0
  %223 = vmatprep.subr.mxu0 0.0
  %224 = vmatpush1.msra.mxu0 %v29
  %225 = vmatprep.subr.mxu0 0.0
  %226 = vmatpush1.msra.mxu0 %v28
  %227 = vmatprep.subr.mxu0 0.0
  %228 = vmatpush1.msra.mxu0 %v27
  %229 = vmatprep.subr.mxu0 0.0
  %230 = vmatpush1.msra.mxu0 %v26
  %231 = vmatprep.subr.mxu0 0.0
  %232 = vmatpush1.msra.mxu0 %v25
  %233 = vmatprep.subr.mxu0 0.0
  %234 = vmatpush1.msra.mxu0 %v24
  %235 = vmatprep.subr.mxu0 0.0
  %236 = vmatpush1.msra.mxu0 %v23
  %237 = vmatprep.subr.mxu0 0.0
  %238 = vmatpush1.msra.mxu0 %v22
  %239 = vmatprep.subr.mxu0 0.0
  %240 = vmatpush1.msra.mxu0 %v21
  %241 = vmatprep.subr.mxu0 0.0
  %242 = vmatpush1.msra.mxu0 %v20
  %243 = vmatprep.subr.mxu0 0.0
  %244 = vmatpush1.msra.mxu0 %v19
  %245 = vmatprep.subr.mxu0 0.0
  %246 = vmatpush1.msra.mxu0 %v18
  %247 = vmatprep.subr.mxu0 0.0
  %248 = vmatpush1.msra.mxu0 %v17
  %249 = vmatprep.subr.mxu0 0.0
  %250 = vmatpush1.msra.mxu0 %v16
  %251 = vmatprep.subr.mxu0 0.0
  %252 = vmatpush1.msra.mxu0 %v15
  %253 = vmatprep.subr.mxu0 0.0
  %254 = vmatpush1.msra.mxu0 %v14
  %255 = vmatprep.subr.mxu0 0.0
  %256 = vmatpush2.msra.mxu0 0.0
  %257 = vmatprep.subr.mxu0 0.0
  %258 = vmatpush2.msra.mxu0 0.0
  %259 = vmatprep.subr.mxu0 0.0
  %260 = vmatpush2.msra.mxu0 0.0
  %261 = vmatprep.subr.mxu0 0.0
  %262 = vmatpush2.msra.mxu0 0.0
  %263 = vmatprep.subr.mxu0 0.0
  %264 = vmatpush2.msra.mxu0 0.0
  %265 = vmatprep.subr.mxu0 0.0
  %266 = vmatpush2.msra.mxu0 0.0
  %267 = vmatprep.subr.mxu0 0.0
  %268 = vmatpush2.msra.mxu0 0.0
  %269 = vmatprep.subr.mxu0 0.0
  %270 = vmatpush2.msra.mxu0 0.0
  %271 = vmatprep.subr.mxu0 0.0
  %272 = vmatpush2.msra.mxu0 0.0
  %273 = vmatprep.subr.mxu0 0.0
  %274 = vmatpush2.msra.mxu0 0.0
  %275 = vmatprep.subr.mxu0 0.0
  %276 = vmatpush2.msra.mxu0 0.0
  %277 = vmatprep.subr.mxu0 0.0
  %278 = vmatpush2.msra.mxu0 0.0
  %279 = vmatprep.subr.mxu0 0.0
  %280 = vmatpush2.msra.mxu0 0.0
  %281 = vmatprep.subr.mxu0 0.0
  %282 = vmatpush2.msra.mxu0 %v78
  %283 = vmatprep.subr.mxu0 0.0
  %284 = vmatpush2.msra.mxu0 %v31
  %285 = vmatprep.subr.mxu0 0.0
  %286 = vmatpush2.msra.mxu0 %v30
  %287 = vmatprep.mubr.f32.mxu0 %v203
  %288 = vmatmul.mubr.f32.gmra.mxu0 %v188
  %v289 = vpop.f32.mrf.mxu0
  %v290 = vadd.f32 %v52, %v289
  %v291 = vpop.f32.mrf.mxu0
  %292 = vmatprep.mubr.f32.mxu0 %v206
  %293 = vmatmul.mubr.f32.gmra.mxu0 %v190
  %v294 = vpop.f32.mrf.mxu0
  %v295 = vadd.f32 %v52, %v294
  %v296 = vpop.f32.mrf.mxu0
  %297 = vmatprep.mubr.f32.mxu0 %v209
  %298 = vmatmul.mubr.f32.gmra.mxu0 %v192
  %v299 = vpop.f32.mrf.mxu0
  %v300 = vadd.f32 %v52, %v299
  %v301 = vpop.f32.mrf.mxu0
  %302 = vmatprep.mubr.f32.mxu0 %v212
  %303 = vmatmul.mubr.f32.gmra.mxu0 %v194
  %v304 = vpop.f32.mrf.mxu0
  %v305 = vadd.f32 %v52, %v304
  %v306 = vpop.f32.mrf.mxu0
  %307 = vmatprep.mubr.f32.mxu0 %v215
  %308 = vmatmul.mubr.f32.gmra.mxu0 %v196
  %v309 = vpop.f32.mrf.mxu0
  %v310 = vadd.f32 %v52, %v309
  %v311 = vpop.f32.mrf.mxu0
  %312 = vmatprep.mubr.f32.mxu0 %v218
  %313 = vmatmul.mubr.f32.gmra.mxu0 %v198
  %v314 = vpop.f32.mrf.mxu0
  %v315 = vadd.f32 %v52, %v314
  %v316 = vpop.f32.mrf.mxu0
  %317 = vmatprep.mubr.f32.mxu0 %v221
  %318 = vmatmul.mubr.f32.gmra.mxu0 %v200
  %v319 = vpop.f32.mrf.mxu0
  %v320 = vadd.f32 %v52, %v319
  %v321 = vpop.f32.mrf.mxu0
  %322 = vdwg.mxu0
  %v323 = vmax.f32 %v290, 0.0
  %v324 = vmax.f32 %v295, 0.0
  %v325 = vmax.f32 %v300, 0.0
  %v326 = vmax.f32 %v305, 0.0
  %v327 = vmax.f32 %v310, 0.0
  %v328 = vmax.f32 %v315, 0.0
  %v329 = vmax.f32 %v320, 0.0
  %v330 = vmax.f32 %v180, %v323
  %v331 = vmax.f32 %v181, %v324
  %v332 = vmax.f32 %v182, %v325
  %v333 = vmax.f32 %v183, %v326
  %v334 = vmax.f32 %v184, %v327
  %v335 = vmax.f32 %v185, %v328
  %v336 = vmax.f32 %v186, %v329
  %s337 = scalar_lea.vmem %s0, 224
  %v338 = vld [vmem:[%s337] sm:$0xff]
  %v339 = vld [vmem:[%s337 + $0x8] sm:$0xff]
  %v340 = vld [vmem:[%s337 + $0x10] sm:$0xff]
  %v341 = vld [vmem:[%s337 + $0x18] sm:$0xff]
  %v342 = vld [vmem:[%s337 + $0x20] sm:$0xff]
  %v343 = vld [vmem:[%s337 + $0x28] sm:$0xff]
  %v344 = vld [vmem:[%s337 + $0x30] sm:$0xff]
  %v345 = vld [vmem:[%s337 + $0x38] sm:$0xff]
  %v346 = vld [vmem:[%s337 + $0x40] sm:$0xff]
  %v347 = vld [vmem:[%s337 + $0x48] sm:$0xff]
  %v348 = vld [vmem:[%s337 + $0x50] sm:$0xff]
  %v349 = vld [vmem:[%s337 + $0x58] sm:$0xff]
  %v350 = vld [vmem:[%s337 + $0x60] sm:$0x3]
  %v351 = vld [vmem:[%s337 + $0x68] sm:$0x3]
  %v353 = vsel %vm54, %v339, 0
  %v356 = vsel %vm54, %v341, 0
  %v359 = vsel %vm54, %v343, 0
  %v362 = vsel %vm54, %v345, 0
  %v365 = vsel %vm54, %v347, 0
  %v368 = vsel %vm54, %v349, 0
  %v371 = vsel %vm54, %v351, 0
  %373 = vmatprep.subr.mxu0 0.0
  %374 = vmatpush1.msra.mxu0 %v29
  %375 = vmatprep.subr.mxu0 0.0
  %376 = vmatpush1.msra.mxu0 %v28
  %377 = vmatprep.subr.mxu0 0.0
  %378 = vmatpush1.msra.mxu0 %v27
  %379 = vmatprep.subr.mxu0 0.0
  %380 = vmatpush1.msra.mxu0 %v26
  %381 = vmatprep.subr.mxu0 0.0
  %382 = vmatpush1.msra.mxu0 %v25
  %383 = vmatprep.subr.mxu0 0.0
  %384 = vmatpush1.msra.mxu0 %v24
  %385 = vmatprep.subr.mxu0 0.0
  %386 = vmatpush1.msra.mxu0 %v23
  %387 = vmatprep.subr.mxu0 0.0
  %388 = vmatpush1.msra.mxu0 %v22
  %389 = vmatprep.subr.mxu0 0.0
  %390 = vmatpush1.msra.mxu0 %v21
  %391 = vmatprep.subr.mxu0 0.0
  %392 = vmatpush1.msra.mxu0 %v20
  %393 = vmatprep.subr.mxu0 0.0
  %394 = vmatpush1.msra.mxu0 %v19
  %395 = vmatprep.subr.mxu0 0.0
  %396 = vmatpush1.msra.mxu0 %v18
  %397 = vmatprep.subr.mxu0 0.0
  %398 = vmatpush1.msra.mxu0 %v17
  %399 = vmatprep.subr.mxu0 0.0
  %400 = vmatpush1.msra.mxu0 %v16
  %401 = vmatprep.subr.mxu0 0.0
  %402 = vmatpush1.msra.mxu0 %v15
  %403 = vmatprep.subr.mxu0 0.0
  %404 = vmatpush1.msra.mxu0 %v14
  %405 = vmatprep.subr.mxu0 0.0
  %406 = vmatpush2.msra.mxu0 0.0
  %407 = vmatprep.subr.mxu0 0.0
  %408 = vmatpush2.msra.mxu0 0.0
  %409 = vmatprep.subr.mxu0 0.0
  %410 = vmatpush2.msra.mxu0 0.0
  %411 = vmatprep.subr.mxu0 0.0
  %412 = vmatpush2.msra.mxu0 0.0
  %413 = vmatprep.subr.mxu0 0.0
  %414 = vmatpush2.msra.mxu0 0.0
  %415 = vmatprep.subr.mxu0 0.0
  %416 = vmatpush2.msra.mxu0 0.0
  %417 = vmatprep.subr.mxu0 0.0
  %418 = vmatpush2.msra.mxu0 0.0
  %419 = vmatprep.subr.mxu0 0.0
  %420 = vmatpush2.msra.mxu0 0.0
  %421 = vmatprep.subr.mxu0 0.0
  %422 = vmatpush2.msra.mxu0 0.0
  %423 = vmatprep.subr.mxu0 0.0
  %424 = vmatpush2.msra.mxu0 0.0
  %425 = vmatprep.subr.mxu0 0.0
  %426 = vmatpush2.msra.mxu0 0.0
  %427 = vmatprep.subr.mxu0 0.0
  %428 = vmatpush2.msra.mxu0 0.0
  %429 = vmatprep.subr.mxu0 0.0
  %430 = vmatpush2.msra.mxu0 0.0
  %431 = vmatprep.subr.mxu0 0.0
  %432 = vmatpush2.msra.mxu0 %v78
  %433 = vmatprep.subr.mxu0 0.0
  %434 = vmatpush2.msra.mxu0 %v31
  %435 = vmatprep.subr.mxu0 0.0
  %436 = vmatpush2.msra.mxu0 %v30
  %437 = vmatprep.mubr.f32.mxu0 %v353
  %438 = vmatmul.mubr.f32.gmra.mxu0 %v338
  %v439 = vpop.f32.mrf.mxu0
  %v440 = vadd.f32 %v52, %v439
  %v441 = vpop.f32.mrf.mxu0
  %442 = vmatprep.mubr.f32.mxu0 %v356
  %443 = vmatmul.mubr.f32.gmra.mxu0 %v340
  %v444 = vpop.f32.mrf.mxu0
  %v445 = vadd.f32 %v52, %v444
  %v446 = vpop.f32.mrf.mxu0
  %447 = vmatprep.mubr.f32.mxu0 %v359
  %448 = vmatmul.mubr.f32.gmra.mxu0 %v342
  %v449 = vpop.f32.mrf.mxu0
  %v450 = vadd.f32 %v52, %v449
  %v451 = vpop.f32.mrf.mxu0
  %452 = vmatprep.mubr.f32.mxu0 %v362
  %453 = vmatmul.mubr.f32.gmra.mxu0 %v344
  %v454 = vpop.f32.mrf.mxu0
  %v455 = vadd.f32 %v52, %v454
  %v456 = vpop.f32.mrf.mxu0
  %457 = vmatprep.mubr.f32.mxu0 %v365
  %458 = vmatmul.mubr.f32.gmra.mxu0 %v346
  %v459 = vpop.f32.mrf.mxu0
  %v460 = vadd.f32 %v52, %v459
  %v461 = vpop.f32.mrf.mxu0
  %462 = vmatprep.mubr.f32.mxu0 %v368
  %463 = vmatmul.mubr.f32.gmra.mxu0 %v348
  %v464 = vpop.f32.mrf.mxu0
  %v465 = vadd.f32 %v52, %v464
  %v466 = vpop.f32.mrf.mxu0
  %467 = vmatprep.mubr.f32.mxu0 %v371
  %468 = vmatmul.mubr.f32.gmra.mxu0 %v350
  %v469 = vpop.f32.mrf.mxu0
  %v470 = vadd.f32 %v52, %v469
  %v471 = vpop.f32.mrf.mxu0
  %472 = vdwg.mxu0
  %v473 = vmax.f32 %v440, 0.0
  %v474 = vmax.f32 %v445, 0.0
  %v475 = vmax.f32 %v450, 0.0
  %v476 = vmax.f32 %v455, 0.0
  %v477 = vmax.f32 %v460, 0.0
  %v478 = vmax.f32 %v465, 0.0
  %v479 = vmax.f32 %v470, 0.0
  %s480 = scalar_lea.vmem %s0, 336
  %v481 = vld [vmem:[%s480] sm:$0xff]
  %v482 = vld [vmem:[%s480 + $0x8] sm:$0xff]
  %v483 = vld [vmem:[%s480 + $0x10] sm:$0xff]
  %v484 = vld [vmem:[%s480 + $0x18] sm:$0xff]
  %v485 = vld [vmem:[%s480 + $0x20] sm:$0xff]
  %v486 = vld [vmem:[%s480 + $0x28] sm:$0xff]
  %v487 = vld [vmem:[%s480 + $0x30] sm:$0xff]
  %v488 = vld [vmem:[%s480 + $0x38] sm:$0xff]
  %v489 = vld [vmem:[%s480 + $0x40] sm:$0xff]
  %v490 = vld [vmem:[%s480 + $0x48] sm:$0xff]
  %v491 = vld [vmem:[%s480 + $0x50] sm:$0xff]
  %v492 = vld [vmem:[%s480 + $0x58] sm:$0xff]
  %v493 = vld [vmem:[%s480 + $0x60] sm:$0x3]
  %v494 = vld [vmem:[%s480 + $0x68] sm:$0x3]
  %v496 = vsel %vm54, %v482, 0
  %v499 = vsel %vm54, %v484, 0
  %v502 = vsel %vm54, %v486, 0
  %v505 = vsel %vm54, %v488, 0
  %v508 = vsel %vm54, %v490, 0
  %v511 = vsel %vm54, %v492, 0
  %v514 = vsel %vm54, %v494, 0
  %516 = vmatprep.subr.mxu0 0.0
  %517 = vmatpush1.msra.mxu0 %v29
  %518 = vmatprep.subr.mxu0 0.0
  %519 = vmatpush1.msra.mxu0 %v28
  %520 = vmatprep.subr.mxu0 0.0
  %521 = vmatpush1.msra.mxu0 %v27
  %522 = vmatprep.subr.mxu0 0.0
  %523 = vmatpush1.msra.mxu0 %v26
  %524 = vmatprep.subr.mxu0 0.0
  %525 = vmatpush1.msra.mxu0 %v25
  %526 = vmatprep.subr.mxu0 0.0
  %527 = vmatpush1.msra.mxu0 %v24
  %528 = vmatprep.subr.mxu0 0.0
  %529 = vmatpush1.msra.mxu0 %v23
  %530 = vmatprep.subr.mxu0 0.0
  %531 = vmatpush1.msra.mxu0 %v22
  %532 = vmatprep.subr.mxu0 0.0
  %533 = vmatpush1.msra.mxu0 %v21
  %534 = vmatprep.subr.mxu0 0.0
  %535 = vmatpush1.msra.mxu0 %v20
  %536 = vmatprep.subr.mxu0 0.0
  %537 = vmatpush1.msra.mxu0 %v19
  %538 = vmatprep.subr.mxu0 0.0
  %539 = vmatpush1.msra.mxu0 %v18
  %540 = vmatprep.subr.mxu0 0.0
  %541 = vmatpush1.msra.mxu0 %v17
  %542 = vmatprep.subr.mxu0 0.0
  %543 = vmatpush1.msra.mxu0 %v16
  %544 = vmatprep.subr.mxu0 0.0
  %545 = vmatpush1.msra.mxu0 %v15
  %546 = vmatprep.subr.mxu0 0.0
  %547 = vmatpush1.msra.mxu0 %v14
  %548 = vmatprep.subr.mxu0 0.0
  %549 = vmatpush2.msra.mxu0 0.0
  %550 = vmatprep.subr.mxu0 0.0
  %551 = vmatpush2.msra.mxu0 0.0
  %552 = vmatprep.subr.mxu0 0.0
  %553 = vmatpush2.msra.mxu0 0.0
  %554 = vmatprep.subr.mxu0 0.0
  %555 = vmatpush2.msra.mxu0 0.0
  %556 = vmatprep.subr.mxu0 0.0
  %557 = vmatpush2.msra.mxu0 0.0
  %558 = vmatprep.subr.mxu0 0.0
  %559 = vmatpush2.msra.mxu0 0.0
  %560 = vmatprep.subr.mxu0 0.0
  %561 = vmatpush2.msra.mxu0 0.0
  %562 = vmatprep.subr.mxu0 0.0
  %563 = vmatpush2.msra.mxu0 0.0
  %564 = vmatprep.subr.mxu0 0.0
  %565 = vmatpush2.msra.mxu0 0.0
  %566 = vmatprep.subr.mxu0 0.0
  %567 = vmatpush2.msra.mxu0 0.0
  %568 = vmatprep.subr.mxu0 0.0
  %569 = vmatpush2.msra.mxu0 0.0
  %570 = vmatprep.subr.mxu0 0.0
  %571 = vmatpush2.msra.mxu0 0.0
  %572 = vmatprep.subr.mxu0 0.0
  %573 = vmatpush2.msra.mxu0 0.0
  %574 = vmatprep.subr.mxu0 0.0
  %575 = vmatpush2.msra.mxu0 %v78
  %576 = vmatprep.subr.mxu0 0.0
  %577 = vmatpush2.msra.mxu0 %v31
  %578 = vmatprep.subr.mxu0 0.0
  %579 = vmatpush2.msra.mxu0 %v30
  %580 = vmatprep.mubr.f32.mxu0 %v496
  %581 = vmatmul.mubr.f32.gmra.mxu0 %v481
  %v582 = vpop.f32.mrf.mxu0
  %v583 = vadd.f32 %v52, %v582
  %v584 = vpop.f32.mrf.mxu0
  %585 = vmatprep.mubr.f32.mxu0 %v499
  %586 = vmatmul.mubr.f32.gmra.mxu0 %v483
  %v587 = vpop.f32.mrf.mxu0
  %v588 = vadd.f32 %v52, %v587
  %v589 = vpop.f32.mrf.mxu0
  %590 = vmatprep.mubr.f32.mxu0 %v502
  %591 = vmatmul.mubr.f32.gmra.mxu0 %v485
  %v592 = vpop.f32.mrf.mxu0
  %v593 = vadd.f32 %v52, %v592
  %v594 = vpop.f32.mrf.mxu0
  %595 = vmatprep.mubr.f32.mxu0 %v505
  %596 = vmatmul.mubr.f32.gmra.mxu0 %v487
  %v597 = vpop.f32.mrf.mxu0
  %v598 = vadd.f32 %v52, %v597
  %v599 = vpop.f32.mrf.mxu0
  %600 = vmatprep.mubr.f32.mxu0 %v508
  %601 = vmatmul.mubr.f32.gmra.mxu0 %v489
  %v602 = vpop.f32.mrf.mxu0
  %v603 = vadd.f32 %v52, %v602
  %v604 = vpop.f32.mrf.mxu0
  %605 = vmatprep.mubr.f32.mxu0 %v511
  %606 = vmatmul.mubr.f32.gmra.mxu0 %v491
  %v607 = vpop.f32.mrf.mxu0
  %v608 = vadd.f32 %v52, %v607
  %v609 = vpop.f32.mrf.mxu0
  %610 = vmatprep.mubr.f32.mxu0 %v514
  %611 = vmatmul.mubr.f32.gmra.mxu0 %v493
  %v612 = vpop.f32.mrf.mxu0
  %v613 = vadd.f32 %v52, %v612
  %v614 = vpop.f32.mrf.mxu0
  %615 = vdwg.mxu0
  %v616 = vmax.f32 %v583, 0.0
  %v617 = vmax.f32 %v588, 0.0
  %v618 = vmax.f32 %v593, 0.0
  %v619 = vmax.f32 %v598, 0.0
  %v620 = vmax.f32 %v603, 0.0
  %v621 = vmax.f32 %v608, 0.0
  %v622 = vmax.f32 %v613, 0.0
  %v623 = vmax.f32 %v473, %v616
  %v624 = vmax.f32 %v474, %v617
  %v625 = vmax.f32 %v475, %v618
  %v626 = vmax.f32 %v476, %v619
  %v627 = vmax.f32 %v477, %v620
  %v628 = vmax.f32 %v478, %v621
  %v629 = vmax.f32 %v479, %v622
  %v630 = vmax.f32 %v330, %v623
  %v631 = vmax.f32 %v331, %v624
  %v632 = vmax.f32 %v332, %v625
  %v633 = vmax.f32 %v333, %v626
  %v634 = vmax.f32 %v334, %v627
  %v635 = vmax.f32 %v335, %v628
  %v636 = vmax.f32 %v336, %v629
  %vm637 = vcmask 130048
  %638 = vst.msk [vmem:[%s3] sm:$0xff] %vm637, %v630
  %639 = vst.msk [vmem:[%s3 + $0x8] sm:$0xff] %vm637, %v631
  %640 = vst.msk [vmem:[%s3 + $0x10] sm:$0xff] %vm637, %v632
  %641 = vst.msk [vmem:[%s3 + $0x18] sm:$0xff] %vm637, %v633
  %642 = vst.msk [vmem:[%s3 + $0x20] sm:$0xff] %vm637, %v634
  %643 = vst.msk [vmem:[%s3 + $0x28] sm:$0xff] %vm637, %v635
  %vm644 = vcmask 123904
  %645 = vst.msk [vmem:[%s3 + $0x30] sm:$0x3] %vm644, %v636
  // Predicated region
  $region14: #{net_forward.4} parent=0 // pred_check
    _
  $region15: #{net_forward.4} parent=0 // pred_check_branch
    %647 = sbr.rel (0) target = $region17
  $region16: #{net_forward.4} parent=0 // pred_region
    _
  $region17: #{net_forward.4} parent=0 // pred_fallthru
    _
  // Predicated region
  $region18: #{net_forward.4} parent=0 // pred_check
    _
  $region19: #{net_forward.4} parent=0 // pred_check_branch
    %649 = sbr.rel (0) target = $region21
  $region20: #{net_forward.4} parent=0 // pred_region
    _
  $region21: #{net_forward.4} parent=0 // pred_fallthru
    _

// kernel: net_forward.5
$region0: #{net_forward.5}
  #allocation0 [shape = 'u32[]', space=smem, size = 0x4, offset = 0x4, fixed_abs, tag = 'smem constant byte address 0x4 - core index']
  #allocation1 [shape = 'u32[144,128]{1,0:T(1,128)}', space=vmem, size = 0x12000, scoped, tag = 'internal scratch']
  %s0 = inlined_call_operand.vmem [shape: f32[2,400], index: 0, kind: input, shape index: {}]
  %s1 = inlined_call_operand.vmem [shape: f32[400,120], index: 1, kind: input, shape index: {}]
  %s2 = inlined_call_operand.vmem [shape: f32[1,120], index: 2, kind: input, shape index: {}]
  %s3 = inlined_call_operand.vmem [shape: f32[120,84], index: 3, kind: input, shape index: {}]
  %s4 = inlined_call_operand.vmem [shape: f32[1,84], index: 4, kind: input, shape index: {}]
  %s5 = inlined_call_operand.vmem [shape: f32[84,10], index: 5, kind: input, shape index: {}]
  %s6 = inlined_call_operand.vmem [shape: f32[1,10], index: 6, kind: input, shape index: {}]
  %s7 = inlined_call_operand.hbm [shape: f32[2,10], index: 7, kind: output, shape index: {}]
  %s8 = sld [smem:[#allocation0]]
  $region38: #{net_forward.5} parent=0
    _
  %s10 = ssub.s32 1, %s8
  %s11 = scalar_select 0, %s10, %s8
  $region1: #{net_forward.5} parent=0
    #allocation2 [shape = 'u8[1024]{0}', space=vmem, size = 0x400, scoped, tag = 'output window, operand 0, single buffered']
    #allocation3 [shape = 's32[1]{0}', space=sflag, size = 0x4, scoped, tag = 'scoped memory for net_forward.5']
    %12 = vsyncpa [#allocation3], 0
    // Predicated region
    $region2: #{net_forward.5} parent=1 // pred_check
      _
    $region3: #{net_forward.5} parent=1 // pred_check_branch
      %14 = sbr.rel (0) target = $region5
    $region4: #{net_forward.5} parent=1 // pred_region
      _
    $region5: #{net_forward.5} parent=1 // pred_fallthru
      _
    // Predicated region
    $region6: #{net_forward.5} parent=1 // pred_check
      _
    $region7: #{net_forward.5} parent=1 // pred_check_branch
      %16 = sbr.rel (0) target = $region9
    $region8: #{net_forward.5} parent=1 // pred_region
      _
    $region9: #{net_forward.5} parent=1 // pred_fallthru
      _
    // Predicated region
    $region10: #{net_forward.5} parent=1 // pred_check
      _
    $region11: #{net_forward.5} parent=1 // pred_check_branch
      %18 = sbr.rel (0) target = $region13
    $region12: #{net_forward.5} parent=1 // pred_region
      _
    $region13: #{net_forward.5} parent=1 // pred_fallthru
      _
    // Predicated region
    $region14: #{net_forward.5} parent=1 // pred_check
      _
    $region15: #{net_forward.5} parent=1 // pred_check_branch
      %20 = sbr.rel (0) target = $region17
    $region16: #{net_forward.5} parent=1 // pred_region
      _
    $region17: #{net_forward.5} parent=1 // pred_fallthru
      _
    // Predicated region
    $region18: #{net_forward.5} parent=1 // pred_check
      _
    $region19: #{net_forward.5} parent=1 // pred_check_branch
      %22 = sbr.rel (0) target = $region21
    $region20: #{net_forward.5} parent=1 // pred_region
      _
    $region21: #{net_forward.5} parent=1 // pred_fallthru
      _
    // Predicated region
    $region22: #{net_forward.5} parent=1 // pred_check
      _
    $region23: #{net_forward.5} parent=1 // pred_check_branch
      %24 = sbr.rel (0) target = $region25
    $region24: #{net_forward.5} parent=1 // pred_region
      _
    $region25: #{net_forward.5} parent=1 // pred_fallthru
      _
    // Predicated region
    $region26: #{net_forward.5} parent=1 // pred_check
      _
    $region27: #{net_forward.5} parent=1 // pred_check_branch
      %26 = sbr.rel (0) target = $region29
    $region28: #{net_forward.5} parent=1 // pred_region
      _
    $region29: #{net_forward.5} parent=1 // pred_fallthru
      _
    %v27 = vld [vmem:[%s0] sm:$0xff]
    %v28 = vld [vmem:[%s1] sm:$0xff]
    %v29 = vld [vmem:[%s1 + $0x8] sm:$0xff]
    %v30 = vld [vmem:[%s1 + $0x10] sm:$0xff]
    %v31 = vld [vmem:[%s1 + $0x18] sm:$0xff]
    %v32 = vld [vmem:[%s1 + $0x20] sm:$0xff]
    %v33 = vld [vmem:[%s1 + $0x28] sm:$0xff]
    %v34 = vld [vmem:[%s1 + $0x30] sm:$0xff]
    %v35 = vld [vmem:[%s1 + $0x38] sm:$0xff]
    %v36 = vld [vmem:[%s1 + $0x40] sm:$0xff]
    %v37 = vld [vmem:[%s1 + $0x48] sm:$0xff]
    %v38 = vld [vmem:[%s1 + $0x50] sm:$0xff]
    %v39 = vld [vmem:[%s1 + $0x58] sm:$0xff]
    %v40 = vld [vmem:[%s1 + $0x60] sm:$0xff]
    %v41 = vld [vmem:[%s1 + $0x68] sm:$0xff]
    %v42 = vld [vmem:[%s1 + $0x70] sm:$0xff]
    %v43 = vld [vmem:[%s1 + $0x78] sm:$0xff]
    %v44 = vld [vmem:[%s1 + $0x80] sm:$0xff]
    %v45 = vld [vmem:[%s1 + $0x88] sm:$0xff]
    %v46 = vld [vmem:[%s1 + $0x90] sm:$0xff]
    %v47 = vld [vmem:[%s1 + $0x98] sm:$0xff]
    %v48 = vld [vmem:[%s1 + $0xa0] sm:$0xff]
    %v49 = vld [vmem:[%s1 + $0xa8] sm:$0xff]
    %v50 = vld [vmem:[%s1 + $0xb0] sm:$0xff]
    %v51 = vld [vmem:[%s1 + $0xb8] sm:$0xff]
    %v52 = vld [vmem:[%s1 + $0xc0] sm:$0xff]
    %v53 = vld [vmem:[%s1 + $0xc8] sm:$0xff]
    %v54 = vld [vmem:[%s1 + $0xd0] sm:$0xff]
    %v55 = vld [vmem:[%s1 + $0xd8] sm:$0xff]
    %v56 = vld [vmem:[%s1 + $0xe0] sm:$0xff]
    %v57 = vld [vmem:[%s1 + $0xe8] sm:$0xff]
    %v58 = vld [vmem:[%s1 + $0xf0] sm:$0xff]
    %v59 = vld [vmem:[%s1 + $0xf8] sm:$0xff]
    %v60 = vld [vmem:[%s1 + $0x100] sm:$0xff]
    %v61 = vld [vmem:[%s1 + $0x108] sm:$0xff]
    %v62 = vld [vmem:[%s1 + $0x110] sm:$0xff]
    %v63 = vld [vmem:[%s1 + $0x118] sm:$0xff]
    %v64 = vld [vmem:[%s1 + $0x120] sm:$0xff]
    %v65 = vld [vmem:[%s1 + $0x128] sm:$0xff]
    %v66 = vld [vmem:[%s1 + $0x130] sm:$0xff]
    %v67 = vld [vmem:[%s1 + $0x138] sm:$0xff]
    %v68 = vld [vmem:[%s1 + $0x140] sm:$0xff]
    %v69 = vld [vmem:[%s1 + $0x148] sm:$0xff]
    %v70 = vld [vmem:[%s1 + $0x150] sm:$0xff]
    %v71 = vld [vmem:[%s1 + $0x158] sm:$0xff]
    %v72 = vld [vmem:[%s1 + $0x160] sm:$0xff]
    %v73 = vld [vmem:[%s1 + $0x168] sm:$0xff]
    %v74 = vld [vmem:[%s1 + $0x170] sm:$0xff]
    %v75 = vld [vmem:[%s1 + $0x178] sm:$0xff]
    %v76 = vld [vmem:[%s1 + $0x180] sm:$0xff]
    %v77 = vld [vmem:[%s1 + $0x188] sm:$0xff]
    %v78 = vld [vmem:[%s2] sm:$0x1]
    %v80 = vlaneseq
    %v81 = vshrl.u32 %v80, 7
    %v82 = vsub.s32 0, %v81
    %v83 = vrot.slane %v78, %v82
    %v86 = vcombine.high %v27, %v27
    %v88 = vunpack.c.l.s4 1983009808
    %v89 = vunpack.c.0.s8 %v88
    %v90 = vlaneseq
    %v91 = vshrl.u32 %v90, 7
    %v92 = vsub.s32 %v89, %v91
    %v93 = vrot.slane %v27, %v92
    %v95 = vunpack.c.l.s4 1983009808
    %v96 = vunpack.c.0.s8 %v95
    %v97 = vlaneseq
    %v98 = vshrl.u32 %v97, 7
    %v99 = vsub.s32 %v96, %v98
    %v100 = vrot.slane %v86, %v99
    %v101 = vcombine.high %v93, %v93
    %v102 = vcombine.high %v100, %v100
    %vm106 = vcmask 130048
    %v107 = vsel %vm106, %v102, 0
    %109 = vmatprep.subr.mxu0 0.0
    %110 = vmatpush1.msra.mxu0 %v43
    %111 = vmatprep.subr.mxu0 0.0
    %112 = vmatpush1.msra.mxu0 %v42
    %113 = vmatprep.subr.mxu0 0.0
    %114 = vmatpush1.msra.mxu0 %v41
    %115 = vmatprep.subr.mxu0 0.0
    %116 = vmatpush1.msra.mxu0 %v40
    %117 = vmatprep.subr.mxu0 0.0
    %118 = vmatpush1.msra.mxu0 %v39
    %119 = vmatprep.subr.mxu0 0.0
    %120 = vmatpush1.msra.mxu0 %v38
    %121 = vmatprep.subr.mxu0 0.0
    %122 = vmatpush1.msra.mxu0 %v37
    %123 = vmatprep.subr.mxu0 0.0
    %124 = vmatpush1.msra.mxu0 %v36
    %125 = vmatprep.subr.mxu0 0.0
    %126 = vmatpush1.msra.mxu0 %v35
    %127 = vmatprep.subr.mxu0 0.0
    %128 = vmatpush1.msra.mxu0 %v34
    %129 = vmatprep.subr.mxu0 0.0
    %130 = vmatpush1.msra.mxu0 %v33
    %131 = vmatprep.subr.mxu0 0.0
    %132 = vmatpush1.msra.mxu0 %v32
    %133 = vmatprep.subr.mxu0 0.0
    %134 = vmatpush1.msra.mxu0 %v31
    %135 = vmatprep.subr.mxu0 0.0
    %136 = vmatpush1.msra.mxu0 %v30
    %137 = vmatprep.subr.mxu0 0.0
    %138 = vmatpush1.msra.mxu0 %v29
    %139 = vmatprep.subr.mxu0 0.0
    %140 = vmatpush1.msra.mxu0 %v28
    %141 = vmatprep.subr.mxu0 0.0
    %142 = vmatpush2.msra.mxu0 %v59
    %143 = vmatprep.subr.mxu0 0.0
    %144 = vmatpush2.msra.mxu0 %v58
    %145 = vmatprep.subr.mxu0 0.0
    %146 = vmatpush2.msra.mxu0 %v57
    %147 = vmatprep.subr.mxu0 0.0
    %148 = vmatpush2.msra.mxu0 %v56
    %149 = vmatprep.subr.mxu0 0.0
    %150 = vmatpush2.msra.mxu0 %v55
    %151 = vmatprep.subr.mxu0 0.0
    %152 = vmatpush2.msra.mxu0 %v54
    %153 = vmatprep.subr.mxu0 0.0
    %154 = vmatpush2.msra.mxu0 %v53
    %155 = vmatprep.subr.mxu0 0.0
    %156 = vmatpush2.msra.mxu0 %v52
    %157 = vmatprep.subr.mxu0 0.0
    %158 = vmatpush2.msra.mxu0 %v51
    %159 = vmatprep.subr.mxu0 0.0
    %160 = vmatpush2.msra.mxu0 %v50
    %161 = vmatprep.subr.mxu0 0.0
    %162 = vmatpush2.msra.mxu0 %v49
    %163 = vmatprep.subr.mxu0 0.0
    %164 = vmatpush2.msra.mxu0 %v48
    %165 = vmatprep.subr.mxu0 0.0
    %166 = vmatpush2.msra.mxu0 %v47
    %167 = vmatprep.subr.mxu0 0.0
    %168 = vmatpush2.msra.mxu0 %v46
    %169 = vmatprep.subr.mxu0 0.0
    %170 = vmatpush2.msra.mxu0 %v45
    %171 = vmatprep.subr.mxu0 0.0
    %172 = vmatpush2.msra.mxu0 %v44
    %173 = vmatprep.mubr.f32.mxu0 %v101
    %174 = vmatmul.mubr.f32.gmra.mxu0 %v93
    %v175 = vpop.f32.mrf.mxu0
    %v176 = vadd.f32 %v83, %v175
    %v177 = vpop.f32.mrf.mxu0
    %178 = vdwg.mxu0
    %179 = vmatprep.subr.mxu0 0.0
    %180 = vmatpush1.msra.mxu0 %v75
    %181 = vmatprep.subr.mxu0 0.0
    %182 = vmatpush1.msra.mxu0 %v74
    %183 = vmatprep.subr.mxu0 0.0
    %184 = vmatpush1.msra.mxu0 %v73
    %185 = vmatprep.subr.mxu0 0.0
    %186 = vmatpush1.msra.mxu0 %v72
    %187 = vmatprep.subr.mxu0 0.0
    %188 = vmatpush1.msra.mxu0 %v71
    %189 = vmatprep.subr.mxu0 0.0
    %190 = vmatpush1.msra.mxu0 %v70
    %191 = vmatprep.subr.mxu0 0.0
    %192 = vmatpush1.msra.mxu0 %v69
    %193 = vmatprep.subr.mxu0 0.0
    %194 = vmatpush1.msra.mxu0 %v68
    %195 = vmatprep.subr.mxu0 0.0
    %196 = vmatpush1.msra.mxu0 %v67
    %197 = vmatprep.subr.mxu0 0.0
    %198 = vmatpush1.msra.mxu0 %v66
    %199 = vmatprep.subr.mxu0 0.0
    %200 = vmatpush1.msra.mxu0 %v65
    %201 = vmatprep.subr.mxu0 0.0
    %202 = vmatpush1.msra.mxu0 %v64
    %203 = vmatprep.subr.mxu0 0.0
    %204 = vmatpush1.msra.mxu0 %v63
    %205 = vmatprep.subr.mxu0 0.0
    %206 = vmatpush1.msra.mxu0 %v62
    %207 = vmatprep.subr.mxu0 0.0
    %208 = vmatpush1.msra.mxu0 %v61
    %209 = vmatprep.subr.mxu0 0.0
    %210 = vmatpush1.msra.mxu0 %v60
    %211 = vmatprep.subr.mxu0 0.0
    %212 = vmatpush2.msra.mxu0 0.0
    %213 = vmatprep.subr.mxu0 0.0
    %214 = vmatpush2.msra.mxu0 0.0
    %215 = vmatprep.subr.mxu0 0.0
    %216 = vmatpush2.msra.mxu0 0.0
    %217 = vmatprep.subr.mxu0 0.0
    %218 = vmatpush2.msra.mxu0 0.0
    %219 = vmatprep.subr.mxu0 0.0
    %220 = vmatpush2.msra.mxu0 0.0
    %221 = vmatprep.subr.mxu0 0.0
    %222 = vmatpush2.msra.mxu0 0.0
    %223 = vmatprep.subr.mxu0 0.0
    %224 = vmatpush2.msra.mxu0 0.0
    %225 = vmatprep.subr.mxu0 0.0
    %226 = vmatpush2.msra.mxu0 0.0
    %227 = vmatprep.subr.mxu0 0.0
    %228 = vmatpush2.msra.mxu0 0.0
    %229 = vmatprep.subr.mxu0 0.0
    %230 = vmatpush2.msra.mxu0 0.0
    %231 = vmatprep.subr.mxu0 0.0
    %232 = vmatpush2.msra.mxu0 0.0
    %233 = vmatprep.subr.mxu0 0.0
    %234 = vmatpush2.msra.mxu0 0.0
    %235 = vmatprep.subr.mxu0 0.0
    %236 = vmatpush2.msra.mxu0 0.0
    %237 = vmatprep.subr.mxu0 0.0
    %238 = vmatpush2.msra.mxu0 0.0
    %239 = vmatprep.subr.mxu0 0.0
    %240 = vmatpush2.msra.mxu0 %v77
    %241 = vmatprep.subr.mxu0 0.0
    %242 = vmatpush2.msra.mxu0 %v76
    %243 = vmatprep.mubr.f32.mxu0 %v107
    %244 = vmatmul.mubr.f32.gmra.mxu0 %v100
    %v245 = vpop.f32.mrf.mxu0
    %v246 = vadd.f32 %v176, %v245
    %v247 = vpop.f32.mrf.mxu0
    %248 = vdwg.mxu0
    %v249 = vmax.f32 %v246, 0.0
    %v250 = vld [vmem:[%s3] sm:$0xff]
    %v251 = vld [vmem:[%s3 + $0x8] sm:$0xff]
    %v252 = vld [vmem:[%s3 + $0x10] sm:$0xff]
    %v253 = vld [vmem:[%s3 + $0x18] sm:$0xff]
    %v254 = vld [vmem:[%s3 + $0x20] sm:$0xff]
    %v255 = vld [vmem:[%s3 + $0x28] sm:$0xff]
    %v256 = vld [vmem:[%s3 + $0x30] sm:$0xff]
    %v257 = vld [vmem:[%s3 + $0x38] sm:$0xff]
    %v258 = vld [vmem:[%s3 + $0x40] sm:$0xff]
    %v259 = vld [vmem:[%s3 + $0x48] sm:$0xff]
    %v260 = vld [vmem:[%s3 + $0x50] sm:$0xff]
    %v261 = vld [vmem:[%s3 + $0x58] sm:$0xff]
    %v262 = vld [vmem:[%s3 + $0x60] sm:$0xff]
    %v263 = vld [vmem:[%s3 + $0x68] sm:$0xff]
    %v264 = vld [vmem:[%s3 + $0x70] sm:$0xff]
    %v265 = vld [vmem:[%s4] sm:$0x1]
    %v267 = vlaneseq
    %v268 = vshrl.u32 %v267, 7
    %v269 = vsub.s32 0, %v268
    %v270 = vrot.slane %v265, %v269
    %vm272 = vcmask 982016
    %v274 = vsel %vm272, %v249, 0
    %276 = vmatprep.subr.mxu0 0.0
    %277 = vmatpush1.msra.mxu0 0.0
    %278 = vmatprep.subr.mxu0 0.0
    %279 = vmatpush1.msra.mxu0 %v264
    %280 = vmatprep.subr.mxu0 0.0
    %281 = vmatpush1.msra.mxu0 %v263
    %282 = vmatprep.subr.mxu0 0.0
    %283 = vmatpush1.msra.mxu0 %v262
    %284 = vmatprep.subr.mxu0 0.0
    %285 = vmatpush1.msra.mxu0 %v261
    %286 = vmatprep.subr.mxu0 0.0
    %287 = vmatpush1.msra.mxu0 %v260
    %288 = vmatprep.subr.mxu0 0.0
    %289 = vmatpush1.msra.mxu0 %v259
    %290 = vmatprep.subr.mxu0 0.0
    %291 = vmatpush1.msra.mxu0 %v258
    %292 = vmatprep.subr.mxu0 0.0
    %293 = vmatpush1.msra.mxu0 %v257
    %294 = vmatprep.subr.mxu0 0.0
    %295 = vmatpush1.msra.mxu0 %v256
    %296 = vmatprep.subr.mxu0 0.0
    %297 = vmatpush1.msra.mxu0 %v255
    %298 = vmatprep.subr.mxu0 0.0
    %299 = vmatpush1.msra.mxu0 %v254
    %300 = vmatprep.subr.mxu0 0.0
    %301 = vmatpush1.msra.mxu0 %v253
    %302 = vmatprep.subr.mxu0 0.0
    %303 = vmatpush1.msra.mxu0 %v252
    %304 = vmatprep.subr.mxu0 0.0
    %305 = vmatpush1.msra.mxu0 %v251
    %306 = vmatprep.subr.mxu0 0.0
    %307 = vmatpush1.msra.mxu0 %v250
    %308 = vmatprep.subr.mxu0 0.0
    %309 = vmatpush2.msra.mxu0 0.0
    %310 = vmatprep.subr.mxu0 0.0
    %311 = vmatpush2.msra.mxu0 0.0
    %312 = vmatprep.subr.mxu0 0.0
    %313 = vmatpush2.msra.mxu0 0.0
    %314 = vmatprep.subr.mxu0 0.0
    %315 = vmatpush2.msra.mxu0 0.0
    %316 = vmatprep.subr.mxu0 0.0
    %317 = vmatpush2.msra.mxu0 0.0
    %318 = vmatprep.subr.mxu0 0.0
    %319 = vmatpush2.msra.mxu0 0.0
    %320 = vmatprep.subr.mxu0 0.0
    %321 = vmatpush2.msra.mxu0 0.0
    %322 = vmatprep.subr.mxu0 0.0
    %323 = vmatpush2.msra.mxu0 0.0
    %324 = vmatprep.subr.mxu0 0.0
    %325 = vmatpush2.msra.mxu0 0.0
    %326 = vmatprep.subr.mxu0 0.0
    %327 = vmatpush2.msra.mxu0 0.0
    %328 = vmatprep.subr.mxu0 0.0
    %329 = vmatpush2.msra.mxu0 0.0
    %330 = vmatprep.subr.mxu0 0.0
    %331 = vmatpush2.msra.mxu0 0.0
    %332 = vmatprep.subr.mxu0 0.0
    %333 = vmatpush2.msra.mxu0 0.0
    %334 = vmatprep.subr.mxu0 0.0
    %335 = vmatpush2.msra.mxu0 0.0
    %336 = vmatprep.subr.mxu0 0.0
    %337 = vmatpush2.msra.mxu0 0.0
    %338 = vmatprep.subr.mxu0 0.0
    %339 = vmatpush2.msra.mxu0 0.0
    %340 = vmatprep.mubr.f32.mxu0 0.0
    %341 = vmatmul.mubr.f32.gmra.mxu0 %v274
    %v342 = vpop.f32.mrf.mxu0
    %v343 = vadd.f32 %v270, %v342
    %v344 = vpop.f32.mrf.mxu0
    %345 = vdwg.mxu0
    %v346 = vmax.f32 %v343, 0.0
    %v347 = vld [vmem:[%s5] sm:$0xff]
    %v348 = vld [vmem:[%s5 + $0x8] sm:$0xff]
    %v349 = vld [vmem:[%s5 + $0x10] sm:$0xff]
    %v350 = vld [vmem:[%s5 + $0x18] sm:$0xff]
    %v351 = vld [vmem:[%s5 + $0x20] sm:$0xff]
    %v352 = vld [vmem:[%s5 + $0x28] sm:$0xff]
    %v353 = vld [vmem:[%s5 + $0x30] sm:$0xff]
    %v354 = vld [vmem:[%s5 + $0x38] sm:$0xff]
    %v355 = vld [vmem:[%s5 + $0x40] sm:$0xff]
    %v356 = vld [vmem:[%s5 + $0x48] sm:$0xff]
    %v357 = vld [vmem:[%s5 + $0x50] sm:$0xf]
    %v358 = vld [vmem:[%s6] sm:$0x1]
    %v360 = vlaneseq
    %v361 = vshrl.u32 %v360, 7
    %v362 = vsub.s32 0, %v361
    %v363 = vrot.slane %v358, %v362
    %vm365 = vcmask 687104
    %v367 = vsel %vm365, %v346, 0
    %vm369 = vcmask 1043456
    %v371 = vsel %vm369, %v357, 0
    %373 = vmatprep.subr.mxu0 0.0
    %374 = vmatpush1.msra.mxu0 0.0
    %375 = vmatprep.subr.mxu0 0.0
    %376 = vmatpush1.msra.mxu0 0.0
    %377 = vmatprep.subr.mxu0 0.0
    %378 = vmatpush1.msra.mxu0 0.0
    %379 = vmatprep.subr.mxu0 0.0
    %380 = vmatpush1.msra.mxu0 0.0
    %381 = vmatprep.subr.mxu0 0.0
    %382 = vmatpush1.msra.mxu0 0.0
    %383 = vmatprep.subr.mxu0 0.0
    %384 = vmatpush1.msra.mxu0 %v371
    %385 = vmatprep.subr.mxu0 0.0
    %386 = vmatpush1.msra.mxu0 %v356
    %387 = vmatprep.subr.mxu0 0.0
    %388 = vmatpush1.msra.mxu0 %v355
    %389 = vmatprep.subr.mxu0 0.0
    %390 = vmatpush1.msra.mxu0 %v354
    %391 = vmatprep.subr.mxu0 0.0
    %392 = vmatpush1.msra.mxu0 %v353
    %393 = vmatprep.subr.mxu0 0.0
    %394 = vmatpush1.msra.mxu0 %v352
    %395 = vmatprep.subr.mxu0 0.0
    %396 = vmatpush1.msra.mxu0 %v351
    %397 = vmatprep.subr.mxu0 0.0
    %398 = vmatpush1.msra.mxu0 %v350
    %399 = vmatprep.subr.mxu0 0.0
    %400 = vmatpush1.msra.mxu0 %v349
    %401 = vmatprep.subr.mxu0 0.0
    %402 = vmatpush1.msra.mxu0 %v348
    %403 = vmatprep.subr.mxu0 0.0
    %404 = vmatpush1.msra.mxu0 %v347
    %405 = vmatprep.subr.mxu0 0.0
    %406 = vmatpush2.msra.mxu0 0.0
    %407 = vmatprep.subr.mxu0 0.0
    %408 = vmatpush2.msra.mxu0 0.0
    %409 = vmatprep.subr.mxu0 0.0
    %410 = vmatpush2.msra.mxu0 0.0
    %411 = vmatprep.subr.mxu0 0.0
    %412 = vmatpush2.msra.mxu0 0.0
    %413 = vmatprep.subr.mxu0 0.0
    %414 = vmatpush2.msra.mxu0 0.0
    %415 = vmatprep.subr.mxu0 0.0
    %416 = vmatpush2.msra.mxu0 0.0
    %417 = vmatprep.subr.mxu0 0.0
    %418 = vmatpush2.msra.mxu0 0.0
    %419 = vmatprep.subr.mxu0 0.0
    %420 = vmatpush2.msra.mxu0 0.0
    %421 = vmatprep.subr.mxu0 0.0
    %422 = vmatpush2.msra.mxu0 0.0
    %423 = vmatprep.subr.mxu0 0.0
    %424 = vmatpush2.msra.mxu0 0.0
    %425 = vmatprep.subr.mxu0 0.0
    %426 = vmatpush2.msra.mxu0 0.0
    %427 = vmatprep.subr.mxu0 0.0
    %428 = vmatpush2.msra.mxu0 0.0
    %429 = vmatprep.subr.mxu0 0.0
    %430 = vmatpush2.msra.mxu0 0.0
    %431 = vmatprep.subr.mxu0 0.0
    %432 = vmatpush2.msra.mxu0 0.0
    %433 = vmatprep.subr.mxu0 0.0
    %434 = vmatpush2.msra.mxu0 0.0
    %435 = vmatprep.subr.mxu0 0.0
    %436 = vmatpush2.msra.mxu0 0.0
    %437 = vmatprep.mubr.f32.mxu0 0.0
    %438 = vmatmul.mubr.f32.gmra.mxu0 %v367
    %v439 = vpop.f32.mrf.mxu0
    %v440 = vadd.f32 %v363, %v439
    %v441 = vpop.f32.mrf.mxu0
    %442 = vdwg.mxu0
    %vm443 = vcmask 74752
    %444 = vst.msk [vmem:[#allocation2] sm:$0x3] %vm443, %v440
    // Predicated region
    $region30: #{net_forward.5} parent=1 // pred_check
      _
    $region31: #{net_forward.5} parent=1 // pred_check_branch
      %446 = sbr.rel (0) target = $region33
    $region32: #{net_forward.5} parent=1 // pred_region
      %s448 = ssub.s32 32, 32
      %449 = vsyncadd [#allocation3], %s448
      %s451 = sshll.u32 [#allocation2], 4
      %s452 = int_to_ptr.vmem [resolvable:$true] %s451
      %454 = dma.vmem_to_hbm [thread:$0]  %s452, 32, %s7, [#allocation3]
    $region33: #{net_forward.5} parent=1 // pred_fallthru
      _
    // Predicated region
    $region34: #{net_forward.5} parent=1 // pred_check
      _
    $region35: #{net_forward.5} parent=1 // pred_check_branch
      %456 = sbr.rel (0) target = $region37
    $region36: #{net_forward.5} parent=1 // pred_region
      %457 = dma.done [#allocation3], 32
    $region37: #{net_forward.5} parent=1 // pred_fallthru
      _
    %458 = vsyncpa [#allocation3], 1

</llo_original>
